<compile_context>
chip_gen: v6e
topology: v6e:2x2x1
jax: 0.10.0
libtpu: 0.0.40
codegen_flags: <defaults>
</compile_context>

<pallas_src>
import math
import functools

import numpy as np
import jax
import jax.numpy as jnp
from jax.experimental import pallas as pl
from jax.experimental.pallas import tpu as pltpu

PAD_IDX = 0
_MIB = 1024 * 1024


# ----------------------------- tiling helpers -----------------------------


def _tile_and_pad(dim, pref, align):
    """Pick a tile size (multiple of `align`, or the full dim) and the padded dim.

    Never falls back to a huge full dimension: if no aligned divisor <= pref exists,
    the dimension is zero-padded to a multiple of the (aligned) preferred tile.
    """
    if dim <= pref:
        return dim, dim                       # single full-extent block
    t = max(align, (pref // align) * align)
    for cand in range(t, 0, -align):          # largest aligned divisor <= pref
        if dim % cand == 0:
            return cand, dim
    padded = ((dim + t - 1) // t) * t         # pad to a multiple of the aligned tile
    return t, padded


def _vmem_limit(nbytes):
    """Honest per-call VMEM limit from the tile footprint (v7x-safe <=32 MiB)."""
    return int(min(max(2 * nbytes + 2 * _MIB, 8 * _MIB), 32 * _MIB))


# ----------------------------- Pallas kernels -----------------------------


def _linear_kernel(*refs, relu, has_bias):
    if has_bias:
        x_ref, w_ref, b_ref, o_ref, acc_ref = refs
    else:
        x_ref, w_ref, o_ref, acc_ref = refs
        b_ref = None

    @pl.when(pl.program_id(2) == 0)
    def _init():
        acc_ref[...] = jnp.zeros_like(acc_ref)

    acc_ref[...] += jnp.dot(x_ref[...], w_ref[...],
                            preferred_element_type=jnp.float32)

    @pl.when(pl.program_id(2) == pl.num_programs(2) - 1)
    def _finalize():
        y = acc_ref[...]
        if has_bias:
            y = y + b_ref[...]
        if relu:
            y = jnp.maximum(y, 0.0)
        o_ref[...] = y.astype(o_ref.dtype)


def pallas_linear(x, w, b=None, relu=False, out_dtype=jnp.bfloat16):
    """y = x @ w (+ b) (+ relu).  x:(M,K)  w:(K,N)  b:(N,) or None.  bf16 MXU operands."""
    M, K = x.shape
    N = w.shape[1]
    tm, Mp = _tile_and_pad(M, 256, 8)
    tn, Np = _tile_and_pad(N, 256, 128)
    tk, Kp = _tile_and_pad(K, 512, 128)

    x = x.astype(jnp.bfloat16)
    w = w.astype(jnp.bfloat16)
    if Mp != M or Kp != K:
        x = jnp.pad(x, ((0, Mp - M), (0, Kp - K)))
    if Kp != K or Np != N:
        w = jnp.pad(w, ((0, Kp - K), (0, Np - N)))

    has_bias = b is not None
    args = [x, w]
    in_specs = [pl.BlockSpec((tm, tk), lambda i, j, k: (i, k)),
                pl.BlockSpec((tk, tn), lambda i, j, k: (k, j))]
    if has_bias:
        b2 = b.reshape(1, N).astype(jnp.float32)
        if Np != N:
            b2 = jnp.pad(b2, ((0, 0), (0, Np - N)))
        args.append(b2)
        in_specs.append(pl.BlockSpec((1, tn), lambda i, j, k: (0, j)))

    out_isz = jnp.dtype(out_dtype).itemsize
    tile_bytes = (2 * (tm * tk * 2 + tk * tn * 2)          # double-buffered bf16 inputs
                  + tm * tn * 4                            # f32 accumulator
                  + 2 * tm * tn * out_isz                  # double-buffered output
                  + (2 * tn * 4 if has_bias else 0))
    flops = 2 * M * N * K
    bytes_accessed = int(M * K * 2 + K * N * 2 + M * N * out_isz + (N * 4 if has_bias else 0))

    out = pl.pallas_call(
        functools.partial(_linear_kernel, relu=relu, has_bias=has_bias),
        out_shape=jax.ShapeDtypeStruct((Mp, Np), out_dtype),
        grid=(Mp // tm, Np // tn, Kp // tk),
        in_specs=in_specs,
        out_specs=pl.BlockSpec((tm, tn), lambda i, j, k: (i, j)),
        scratch_shapes=[pltpu.VMEM((tm, tn), jnp.float32)],
        compiler_params=pltpu.CompilerParams(
            dimension_semantics=("parallel", "parallel", "arbitrary"),
            vmem_limit_bytes=_vmem_limit(tile_bytes)),
        cost_estimate=pl.CostEstimate(flops=flops, transcendentals=0,
                                      bytes_accessed=bytes_accessed),
    )(*args)
    if Mp != M or Np != N:
        out = out[:M, :N]
    return out


def _linear_ln_kernel(x_ref, w_ref, b_ref, r_ref, g_ref, be_ref, np_ref,
                      o_ref, acc_ref, *, eps):
    """Matmul with fused epilogue: (+bias, +residual, LayerNorm, *non_pad)."""
    @pl.when(pl.program_id(1) == 0)
    def _init():
        acc_ref[...] = jnp.zeros_like(acc_ref)

    acc_ref[...] += jnp.dot(x_ref[...], w_ref[...],
                            preferred_element_type=jnp.float32)

    @pl.when(pl.program_id(1) == pl.num_programs(1) - 1)
    def _finalize():
        y = acc_ref[...] + b_ref[...] + r_ref[...].astype(jnp.float32)
        mu = jnp.mean(y, axis=-1, keepdims=True)
        var = jnp.mean(jnp.square(y - mu), axis=-1, keepdims=True)
        y = (y - mu) * jax.lax.rsqrt(var + eps) * g_ref[...] + be_ref[...]
        o_ref[...] = (y * np_ref[...]).astype(o_ref.dtype)


def pallas_linear_ln(x, w, b, residual, gamma, beta, non_pad,
                     eps=1e-5, out_dtype=jnp.bfloat16):
    """LayerNorm(x @ w + b + residual) * non_pad, fused into the matmul epilogue.

    x:(M,K)  w:(K,D)  residual:(M,D)  non_pad:(M,1).  Full D (=d_model) per tile so the
    LN reduction sees the whole row; output is bf16 for the downstream DMA path.
    """
    M, K = x.shape
    N = w.shape[1]
    tm, Mp = _tile_and_pad(M, 256, 8)
    tk, Kp = _tile_and_pad(K, 512, 128)

    x = x.astype(jnp.bfloat16)
    w = w.astype(jnp.bfloat16)
    residual = residual.astype(jnp.bfloat16)
    non_pad = non_pad.astype(jnp.float32)
    if Mp != M or Kp != K:
        x = jnp.pad(x, ((0, Mp - M), (0, Kp - K)))
    if Kp != K:
        w = jnp.pad(w, ((0, Kp - K), (0, 0)))
    if Mp != M:
        residual = jnp.pad(residual, ((0, Mp - M), (0, 0)))
        non_pad = jnp.pad(non_pad, ((0, Mp - M), (0, 0)))

    tile_bytes = (2 * (tm * tk * 2 + tk * N * 2 + tm * N * 2)   # x, w, residual (bf16)
                  + tm * N * 4                                  # f32 accumulator
                  + 2 * tm * N * 2                              # bf16 output
                  + 3 * N * 4 + tm * 4)                         # bias/gamma/beta/non_pad
    flops = 2 * M * N * K + 8 * M * N
    bytes_accessed = int(M * K * 2 + K * N * 2 + 2 * M * N * 2 + M * 4 + 3 * N * 4)

    out = pl.pallas_call(
        functools.partial(_linear_ln_kernel, eps=eps),
        out_shape=jax.ShapeDtypeStruct((Mp, N), out_dtype),
        grid=(Mp // tm, Kp // tk),
        in_specs=[pl.BlockSpec((tm, tk), lambda i, k: (i, k)),
                  pl.BlockSpec((tk, N), lambda i, k: (k, 0)),
                  pl.BlockSpec((1, N), lambda i, k: (0, 0)),
                  pl.BlockSpec((tm, N), lambda i, k: (i, 0)),
                  pl.BlockSpec((1, N), lambda i, k: (0, 0)),
                  pl.BlockSpec((1, N), lambda i, k: (0, 0)),
                  pl.BlockSpec((tm, 1), lambda i, k: (i, 0))],
        out_specs=pl.BlockSpec((tm, N), lambda i, k: (i, 0)),
        scratch_shapes=[pltpu.VMEM((tm, N), jnp.float32)],
        compiler_params=pltpu.CompilerParams(
            dimension_semantics=("parallel", "arbitrary"),
            vmem_limit_bytes=_vmem_limit(tile_bytes)),
        cost_estimate=pl.CostEstimate(flops=flops, transcendentals=0,
                                      bytes_accessed=bytes_accessed),
    )(x, w, b.reshape(1, N).astype(jnp.float32), residual,
      gamma.reshape(1, N).astype(jnp.float32),
      beta.reshape(1, N).astype(jnp.float32), non_pad)
    if Mp != M:
        out = out[:M]
    return out


def _attn_kernel(q_ref, k_ref, v_ref, bias_ref, o_ref, *, scale, causal):
    """One (batch, head, q-tile) attention block.
    q_ref:(1,1,tq,dk) bf16  k_ref:(1,1,Lk,dk)  v_ref:(1,1,Lk,dv)  bias_ref:(1,1,Lk) f32."""
    q = q_ref[0, 0] * scale                      # fold 1/sqrt(d_k) into q (tq*dk muls)
    k = k_ref[0, 0]
    v = v_ref[0, 0]
    s = jax.lax.dot_general(q, k, (((1,), (1,)), ((), ())),
                            preferred_element_type=jnp.float32)
    s = s + bias_ref[0]                          # key-pad additive bias, broadcast rows
    if causal:
        tq = q_ref.shape[2]
        row = (jax.lax.broadcasted_iota(jnp.int32, s.shape, 0)
               + pl.program_id(2) * tq)
        col = jax.lax.broadcasted_iota(jnp.int32, s.shape, 1)
        s = jnp.where(col > row, -1e9, s)
    s = s - jnp.max(s, axis=-1, keepdims=True)
    p = jnp.exp(s)
    inv_l = pl.reciprocal(jnp.sum(p, axis=-1, keepdims=True), approx=True)
    p = (p * inv_l).astype(v.dtype)
    o_ref[0, 0] = jnp.dot(p, v, preferred_element_type=jnp.float32).astype(o_ref.dtype)


def pallas_attention(q, k, v, key_bias, *, scale, causal):
    """q:(B,H,Lq,dk)  k:(B,H,Lk,dk)  v:(B,H,Lk,dv)  key_bias:(B,1,Lk) f32 -> (B,H,Lq,dv) bf16."""
    B, H, Lq, dk = q.shape
    Lk = k.shape[2]
    dv = v.shape[3]
    tq, Lqp = _tile_and_pad(Lq, 256, 8)
    if Lqp != Lq:
        q = jnp.pad(q, ((0, 0), (0, 0), (0, Lqp - Lq), (0, 0)))

    tile_bytes = (2 * (tq * dk * 2 + Lk * dk * 2 + Lk * dv * 2 + Lk * 4)
                  + 2 * tq * dv * 2
                  + 2 * tq * Lk * 4)             # f32 score / prob intermediates
    flops = 2 * B * H * Lq * Lk * (dk + dv)
    bytes_acc = int(q.size * 2 + k.size * 2 + v.size * 2 + key_bias.size * 4
                    + B * H * Lq * dv * 2)

    out = pl.pallas_call(
        functools.partial(_attn_kernel, scale=scale, causal=causal),
        out_shape=jax.ShapeDtypeStruct((B, H, Lqp, dv), jnp.bfloat16),
        grid=(B, H, Lqp // tq),
        in_specs=[pl.BlockSpec((1, 1, tq, dk), lambda b, h, i: (b, h, i, 0)),
                  pl.BlockSpec((1, 1, Lk, dk), lambda b, h, i: (b, h, 0, 0)),
                  pl.BlockSpec((1, 1, Lk, dv), lambda b, h, i: (b, h, 0, 0)),
                  pl.BlockSpec((1, 1, Lk), lambda b, h, i: (b, 0, 0))],
        out_specs=pl.BlockSpec((1, 1, tq, dv), lambda b, h, i: (b, h, i, 0)),
        compiler_params=pltpu.CompilerParams(
            dimension_semantics=("parallel", "parallel", "parallel"),
            vmem_limit_bytes=_vmem_limit(tile_bytes)),
        cost_estimate=pl.CostEstimate(flops=flops, transcendentals=B * H * Lq * Lk,
                                      bytes_accessed=bytes_acc),
    )(q.astype(jnp.bfloat16), k.astype(jnp.bfloat16), v.astype(jnp.bfloat16),
      key_bias.astype(jnp.float32))
    if Lqp != Lq:
        out = out[:, :, :Lq]
    return out


# ----------------------------- model glue (plain JAX) -----------------------------


def _split_heads(x, B, L, H, d):
    return x.reshape(B, L, H, d).transpose(0, 2, 1, 3)      # (B,H,L,d)


def mha_block(p, q_in, kv_in, key_bias, non_pad, n_head, d_k, d_v, causal):
    B, Lq, D = q_in.shape
    Lk = kv_in.shape[1]
    residual = q_in                                          # bf16 residual stream
    scale = 1.0 / math.sqrt(d_k)
    hk = n_head * d_k

    if "w_qkv" in p:      # self-attention: fused QKV projection (x read once)
        qkv = pallas_linear(q_in.reshape(B * Lq, D), p["w_qkv"], p["b_qkv"])
        qkv = qkv.reshape(B, Lq, -1)
        q = _split_heads(qkv[..., :hk], B, Lq, n_head, d_k)
        k = _split_heads(qkv[..., hk:2 * hk], B, Lk, n_head, d_k)
        v = _split_heads(qkv[..., 2 * hk:], B, Lk, n_head, d_v)
    else:                 # cross-attention: Q projection + fused KV projection
        q = pallas_linear(q_in.reshape(B * Lq, D), p["w_q"], p["b_q"])
        q = _split_heads(q.reshape(B, Lq, -1), B, Lq, n_head, d_k)
        kv = pallas_linear(kv_in.reshape(B * Lk, D), p["w_kv"], p["b_kv"]).reshape(B, Lk, -1)
        k = _split_heads(kv[..., :hk], B, Lk, n_head, d_k)
        v = _split_heads(kv[..., hk:], B, Lk, n_head, d_v)

    attn = pallas_attention(q, k, v, key_bias, scale=scale, causal=causal)  # (B,H,Lq,dv)
    attn = attn.transpose(0, 2, 1, 3).reshape(B * Lq, n_head * d_v)

    out = pallas_linear_ln(attn, p["w_fc"], p["b_fc"],
                           residual.reshape(B * Lq, D),
                           p["ln_g"], p["ln_b"], non_pad.reshape(B * Lq, 1))
    return out.reshape(B, Lq, D)


def position_wise_ffn(p, x, non_pad):
    B, L, D = x.shape
    residual = x
    h = pallas_linear(x.reshape(B * L, D), p["w1"], p["b1"], relu=True)
    out = pallas_linear_ln(h, p["w2"], p["b2"], residual.reshape(B * L, D),
                           p["ln_g"], p["ln_b"], non_pad.reshape(B * L, 1))
    return out.reshape(B, L, D)


def get_non_pad_mask(seq):
    return (seq != PAD_IDX).astype(jnp.float32)[..., None]          # (B,L,1)


def key_pad_bias(seq_k):
    """Additive attention bias: -1e9 on pad keys, shape (B,1,Lk) f32."""
    return jnp.where(seq_k == PAD_IDX, -1e9, 0.0).astype(jnp.float32)[:, None, :]


def encoder_forward(params, src_seq, src_pos, cfg):
    non_pad = get_non_pad_mask(src_seq)
    kbias = key_pad_bias(src_seq)
    x = (params["src_emb"][src_seq] + params["pos_table"][src_pos]).astype(jnp.bfloat16)
    for lp in params["enc_layers"]:
        x = mha_block(lp["slf"], x, x, kbias, non_pad,
                      cfg["n_head"], cfg["d_k"], cfg["d_v"], causal=False)
        x = position_wise_ffn(lp["ffn"], x, non_pad)
    return x


def decoder_forward(params, tgt_seq, tgt_pos, src_seq, enc_out, cfg):
    non_pad = get_non_pad_mask(tgt_seq)
    tgt_kbias = key_pad_bias(tgt_seq)
    src_kbias = key_pad_bias(src_seq)
    x = (params["tgt_emb"][tgt_seq] + params["pos_table"][tgt_pos]).astype(jnp.bfloat16)
    for lp in params["dec_layers"]:
        x = mha_block(lp["slf"], x, x, tgt_kbias, non_pad,
                      cfg["n_head"], cfg["d_k"], cfg["d_v"], causal=True)
        x = mha_block(lp["enc"], x, enc_out, src_kbias, non_pad,
                      cfg["n_head"], cfg["d_k"], cfg["d_v"], causal=False)
        x = position_wise_ffn(lp["ffn"], x, non_pad)
    return x


def transformer_forward(params, src_seq, src_pos, tgt_seq, tgt_pos, cfg):
    # matches the PyTorch forward: drop BOS on src, drop last token on tgt
    src_seq = src_seq[:, 1:]
    src_pos = src_pos[:, 1:]
    tgt_seq = tgt_seq[:, :-1]
    tgt_pos = tgt_pos[:, :-1]
    enc_out = encoder_forward(params, src_seq, src_pos, cfg)
    dec_out = decoder_forward(params, tgt_seq, tgt_pos, src_seq, enc_out, cfg)
    B, L, D = dec_out.shape
    logits = pallas_linear(dec_out.reshape(B * L, D), params["proj_w"],
                           out_dtype=jnp.float32)                     # bias=False
    return logits.reshape(B, L, -1)                                   # (B, max_len-1, V_tgt)


# ----------------------------- parameter init -----------------------------


def sinusoid_table(n_position, d_model, padding_idx=None):
    pos = np.arange(n_position)[:, None].astype(np.float64)
    i = np.arange(d_model)[None, :]
    angle = pos / np.power(10000.0, 2 * (i // 2) / d_model)
    table = np.zeros((n_position, d_model), dtype=np.float64)
    table[:, 0::2] = np.sin(angle[:, 0::2])
    table[:, 1::2] = np.cos(angle[:, 1::2])
    if padding_idx is not None:
        table[padding_idx] = 0.0
    return jnp.asarray(table, dtype=jnp.float32)


def init_params(key, n_src_vocab, n_tgt_vocab, max_len, cfg):
    d_model, d_inner = cfg["d_model"], cfg["d_inner"]
    n_head, d_k, d_v = cfg["n_head"], cfg["d_k"], cfg["d_v"]
    kbox = [key]
    bf16 = jnp.bfloat16

    def nrm(shape, scale):
        kbox[0], sub = jax.random.split(kbox[0])
        return scale * jax.random.normal(sub, shape, dtype=jnp.float32)

    sq_k = math.sqrt(2.0 / (d_model + d_k))
    sq_v = math.sqrt(2.0 / (d_model + d_v))
    sq_fc = math.sqrt(2.0 / (n_head * d_v + d_model))

    def mha_common():
        return dict(
            w_fc=nrm((n_head * d_v, d_model), sq_fc).astype(bf16),
            b_fc=jnp.zeros((d_model,), jnp.float32),
            ln_g=jnp.ones((d_model,), jnp.float32),
            ln_b=jnp.zeros((d_model,), jnp.float32),
        )

    def mha_self():
        w_q = nrm((d_model, n_head * d_k), sq_k)
        w_k = nrm((d_model, n_head * d_k), sq_k)
        w_v = nrm((d_model, n_head * d_v), sq_v)
        d = dict(
            w_qkv=jnp.concatenate([w_q, w_k, w_v], axis=1).astype(bf16),
            b_qkv=jnp.zeros((n_head * (2 * d_k + d_v),), jnp.float32),
        )
        d.update(mha_common())
        return d

    def mha_cross():
        w_k = nrm((d_model, n_head * d_k), sq_k)
        w_v = nrm((d_model, n_head * d_v), sq_v)
        d = dict(
            w_q=nrm((d_model, n_head * d_k), sq_k).astype(bf16),
            b_q=jnp.zeros((n_head * d_k,), jnp.float32),
            w_kv=jnp.concatenate([w_k, w_v], axis=1).astype(bf16),
            b_kv=jnp.zeros((n_head * (d_k + d_v),), jnp.float32),
        )
        d.update(mha_common())
        return d

    def ffn():
        return dict(
            w1=nrm((d_model, d_inner), math.sqrt(2.0 / (d_model + d_inner))).astype(bf16),
            b1=jnp.zeros((d_inner,), jnp.float32),
            w2=nrm((d_inner, d_model), math.sqrt(2.0 / (d_model + d_inner))).astype(bf16),
            b2=jnp.zeros((d_model,), jnp.float32),
            ln_g=jnp.ones((d_model,), jnp.float32),
            ln_b=jnp.zeros((d_model,), jnp.float32),
        )

    src_emb = nrm((n_src_vocab, d_model), 1.0).at[PAD_IDX].set(0.0)   # padding_idx row = 0
    tgt_emb = nrm((n_tgt_vocab, d_model), 1.0).at[PAD_IDX].set(0.0)
    return dict(
        src_emb=src_emb,
        tgt_emb=tgt_emb,
        pos_table=sinusoid_table(max_len + 1, d_model, padding_idx=0),
        enc_layers=[dict(slf=mha_self(), ffn=ffn()) for _ in range(cfg["n_layer"])],
        dec_layers=[dict(slf=mha_self(), enc=mha_cross(), ffn=ffn())
                    for _ in range(cfg["n_layer"])],
        proj_w=nrm((d_model, n_tgt_vocab),
                   math.sqrt(2.0 / (d_model + n_tgt_vocab))).astype(bf16),
    )


# ----------------------------- main -----------------------------

if __name__ == "__main__":
    B = 2
    MAX_LEN = 8
    cfg = dict(n_layer=2, n_head=4, d_k=8, d_v=8, d_model=32, d_inner=64)
    vocab = (11, 13)   # (english vocab, japanese vocab)

    key = jax.random.PRNGKey(0)
    kp, ks, kt = jax.random.split(key, 3)
    params = init_params(kp, vocab[0], vocab[1], MAX_LEN, cfg)

    src_seq = jax.random.randint(ks, (B, MAX_LEN), 1, vocab[0], dtype=jnp.int32)
    tgt_seq = jax.random.randint(kt, (B, MAX_LEN), 1, vocab[1], dtype=jnp.int32)
    # introduce some trailing padding
    src_seq = src_seq.at[0, 6:].set(PAD_IDX)
    tgt_seq = tgt_seq.at[1, 6:].set(PAD_IDX)
    pos = jnp.arange(1, MAX_LEN + 1, dtype=jnp.int32)[None, :]
    src_pos = jnp.where(src_seq != PAD_IDX, pos, 0)
    tgt_pos = jnp.where(tgt_seq != PAD_IDX, pos, 0)

    fwd = jax.jit(functools.partial(transformer_forward, cfg=cfg))
    out = fwd(params, src_seq, src_pos, tgt_seq, tgt_pos)
    out = jax.block_until_ready(out)

    assert out.shape == (B, MAX_LEN - 1, vocab[1]), out.shape
    assert bool(jnp.all(jnp.isfinite(out)))
    print("KERNEL_OK")
</pallas_src>

<mosaic_0001>
module attributes {stable_mosaic.version = 11 : i64} {
  func.func @_linear_kernel(%arg0: i32, %arg1: i32, %arg2: i32, %arg3: memref<14x32xbf16, #tpu.memory_space<vmem>>, %arg4: memref<32x96xbf16, #tpu.memory_space<vmem>>, %arg5: memref<1x96xf32, #tpu.memory_space<vmem>>, %arg6: memref<14x96xbf16, #tpu.memory_space<vmem>>, %arg7: memref<14x96xf32, #tpu.memory_space<vmem>>) attributes {dimension_semantics = [#tpu.dimension_semantics<parallel>, #tpu.dimension_semantics<parallel>, #tpu.dimension_semantics<arbitrary>], iteration_bounds = array<i64: 1, 1, 1>, scalar_prefetch = 0 : i64, scratch_operands = 1 : i64, tpu.core_type = #tpu.core_type<tc>, window_params = [{transform_indices = @transform_0, window_bounds = array<i64: 14, 32>}, {transform_indices = @transform_1, window_bounds = array<i64: 32, 96>}, {transform_indices = @transform_2, window_bounds = array<i64: 1, 96>}, {transform_indices = @transform_3, window_bounds = array<i64: 14, 96>}]} {
    %c0_i32 = arith.constant 0 : i32
    %0 = arith.cmpi eq, %arg2, %c0_i32 : i32
    %1 = arith.extui %0 : i1 to i32
    %c0_i32_0 = arith.constant 0 : i32
    %2 = arith.cmpi ne, %1, %c0_i32_0 : i32
    scf.if %2 {
      %cst_10 = arith.constant 0.000000e+00 : f32
      %12 = vector.broadcast %cst_10 : f32 to vector<14x96xf32>
      %c0_11 = arith.constant 0 : index
      %c0_12 = arith.constant 0 : index
      %13 = vector.load %arg7[%c0_11, %c0_12] : memref<14x96xf32, #tpu.memory_space<vmem>>, vector<14x96xf32>
      tpu.vector_store %arg7[%c0_11, %c0_12], %12 {strides = array<i32>} : memref<14x96xf32, #tpu.memory_space<vmem>>, vector<14x96xf32>,
    } else {
    }
    %c0 = arith.constant 0 : index
    %c0_1 = arith.constant 0 : index
    %3 = vector.load %arg7[%c0, %c0_1] : memref<14x96xf32, #tpu.memory_space<vmem>>, vector<14x96xf32>
    %c0_2 = arith.constant 0 : index
    %c0_3 = arith.constant 0 : index
    %4 = vector.load %arg3[%c0_2, %c0_3] : memref<14x32xbf16, #tpu.memory_space<vmem>>, vector<14x32xbf16>
    %c0_4 = arith.constant 0 : index
    %c0_5 = arith.constant 0 : index
    %5 = vector.load %arg4[%c0_4, %c0_5] : memref<32x96xbf16, #tpu.memory_space<vmem>>, vector<32x96xbf16>
    %cst = arith.constant dense<0.000000e+00> : vector<14x96xf32>
    %6 = tpu.matmul %4, %5, %cst {dimension_numbers = #tpu.dot_dimension_numbers<[1], [0], [0], [1], [0, 0, 1, 1], [], []>} : vector<14x32xbf16>, vector<32x96xbf16>, vector<14x96xf32> -> vector<14x96xf32>
    %7 = arith.addf %3, %6 : vector<14x96xf32>
    %c0_6 = arith.constant 0 : index
    %c0_7 = arith.constant 0 : index
    %8 = vector.load %arg7[%c0_6, %c0_7] : memref<14x96xf32, #tpu.memory_space<vmem>>, vector<14x96xf32>
    tpu.vector_store %arg7[%c0_6, %c0_7], %7 {strides = array<i32>} : memref<14x96xf32, #tpu.memory_space<vmem>>, vector<14x96xf32>,
    %c0_i32_8 = arith.constant 0 : i32
    %9 = arith.cmpi eq, %arg2, %c0_i32_8 : i32
    %10 = arith.extui %9 : i1 to i32
    %c0_i32_9 = arith.constant 0 : i32
    %11 = arith.cmpi ne, %10, %c0_i32_9 : i32
    scf.if %11 {
      %c0_10 = arith.constant 0 : index
      %c0_11 = arith.constant 0 : index
      %12 = vector.load %arg7[%c0_10, %c0_11] : memref<14x96xf32, #tpu.memory_space<vmem>>, vector<14x96xf32>
      %c0_12 = arith.constant 0 : index
      %c0_13 = arith.constant 0 : index
      %13 = vector.load %arg5[%c0_12, %c0_13] : memref<1x96xf32, #tpu.memory_space<vmem>>, vector<1x96xf32>
      %14 = vector.broadcast %13 : vector<1x96xf32> to vector<14x96xf32>
      %15 = arith.addf %12, %14 : vector<14x96xf32>
      %16 = arith.truncf %15 : vector<14x96xf32> to vector<14x96xbf16>
      %c0_14 = arith.constant 0 : index
      %c0_15 = arith.constant 0 : index
      %17 = vector.load %arg6[%c0_14, %c0_15] : memref<14x96xbf16, #tpu.memory_space<vmem>>, vector<14x96xbf16>
      tpu.vector_store %arg6[%c0_14, %c0_15], %16 {strides = array<i32>} : memref<14x96xbf16, #tpu.memory_space<vmem>>, vector<14x96xbf16>,
    } else {
    }
    return
  }
  func.func @transform_0(%arg0: i32, %arg1: i32, %arg2: i32) -> (i32, i32) {
    %c0_i32 = arith.constant 0 : i32
    return %arg0, %arg2 : i32, i32
  }
  func.func @transform_1(%arg0: i32, %arg1: i32, %arg2: i32) -> (i32, i32) {
    %c0_i32 = arith.constant 0 : i32
    return %arg2, %arg1 : i32, i32
  }
  func.func @transform_2(%arg0: i32, %arg1: i32, %arg2: i32) -> (i32, i32) {
    %c0_i32 = arith.constant 0 : i32
    %c0_i32_0 = arith.constant 0 : i32
    return %c0_i32, %arg1 : i32, i32
  }
  func.func @transform_3(%arg0: i32, %arg1: i32, %arg2: i32) -> (i32, i32) {
    %c0_i32 = arith.constant 0 : i32
    return %arg0, %arg1 : i32, i32
  }
}

module attributes {stable_mosaic.version = 11 : i64} {
  func.func @_attn_kernel(%arg0: i32, %arg1: i32, %arg2: i32, %arg3: memref<1x1x7x8xbf16, #tpu.memory_space<vmem>>, %arg4: memref<1x1x7x8xbf16, #tpu.memory_space<vmem>>, %arg5: memref<1x1x7x8xbf16, #tpu.memory_space<vmem>>, %arg6: memref<1x1x7xf32, #tpu.memory_space<vmem>>, %arg7: memref<1x1x7x8xbf16, #tpu.memory_space<vmem>>) attributes {dimension_semantics = [#tpu.dimension_semantics<parallel>, #tpu.dimension_semantics<parallel>, #tpu.dimension_semantics<parallel>], iteration_bounds = array<i64: 2, 4, 1>, scalar_prefetch = 0 : i64, scratch_operands = 0 : i64, tpu.core_type = #tpu.core_type<tc>, window_params = [{transform_indices = @transform_0, window_bounds = array<i64: 1, 1, 7, 8>}, {transform_indices = @transform_1, window_bounds = array<i64: 1, 1, 7, 8>}, {transform_indices = @transform_2, window_bounds = array<i64: 1, 1, 7, 8>}, {transform_indices = @transform_3, window_bounds = array<i64: 1, 1, 7>}, {transform_indices = @transform_4, window_bounds = array<i64: 1, 1, 7, 8>}]} {
    %c0 = arith.constant 0 : index
    %c0_0 = arith.constant 0 : index
    %c0_1 = arith.constant 0 : index
    %c0_2 = arith.constant 0 : index
    %0 = vector.load %arg3[%c0, %c0_0, %c0_1, %c0_2] : memref<1x1x7x8xbf16, #tpu.memory_space<vmem>>, vector<1x1x7x8xbf16>
    %1 = vector.shape_cast %0 : vector<1x1x7x8xbf16> to vector<7x8xbf16>
    %cst = arith.constant 3.535160e-01 : bf16
    %2 = vector.broadcast %cst : bf16 to vector<7x8xbf16>
    %3 = arith.mulf %1, %2 : vector<7x8xbf16>
    %c0_3 = arith.constant 0 : index
    %c0_4 = arith.constant 0 : index
    %c0_5 = arith.constant 0 : index
    %c0_6 = arith.constant 0 : index
    %4 = vector.load %arg4[%c0_3, %c0_4, %c0_5, %c0_6] : memref<1x1x7x8xbf16, #tpu.memory_space<vmem>>, vector<1x1x7x8xbf16>
    %5 = vector.shape_cast %4 : vector<1x1x7x8xbf16> to vector<7x8xbf16>
    %c0_7 = arith.constant 0 : index
    %c0_8 = arith.constant 0 : index
    %c0_9 = arith.constant 0 : index
    %c0_10 = arith.constant 0 : index
    %6 = vector.load %arg5[%c0_7, %c0_8, %c0_9, %c0_10] : memref<1x1x7x8xbf16, #tpu.memory_space<vmem>>, vector<1x1x7x8xbf16>
    %7 = vector.shape_cast %6 : vector<1x1x7x8xbf16> to vector<7x8xbf16>
    %cst_11 = arith.constant dense<0.000000e+00> : vector<7x7xf32>
    %8 = tpu.matmul %3, %5, %cst_11 {dimension_numbers = #tpu.dot_dimension_numbers<[1], [1], [0], [0], [0, 0, 1, 0], [], []>} : vector<7x8xbf16>, vector<7x8xbf16>, vector<7x7xf32> -> vector<7x7xf32>
    %c0_12 = arith.constant 0 : index
    %c0_13 = arith.constant 0 : index
    %c0_14 = arith.constant 0 : index
    %9 = vector.load %arg6[%c0_12, %c0_13, %c0_14] : memref<1x1x7xf32, #tpu.memory_space<vmem>>, vector<1x1x7xf32>
    %10 = vector.shape_cast %9 : vector<1x1x7xf32> to vector<1x7xf32>
    %11 = vector.broadcast %10 : vector<1x7xf32> to vector<7x7xf32>
    %12 = arith.addf %8, %11 : vector<7x7xf32>
    %cst_15 = arith.constant dense<0xFF800000> : vector<7xf32>
    %13 = vector.multi_reduction <maximumf>, %12, %cst_15 [1] : vector<7x7xf32> to vector<7xf32>
    %14 = vector.shape_cast %13 : vector<7xf32> to vector<7x1xf32>
    %15 = vector.broadcast %14 : vector<7x1xf32> to vector<7x7xf32>
    %16 = arith.subf %12, %15 : vector<7x7xf32>
    %17 = math.exp %16 : vector<7x7xf32>
    %cst_16 = arith.constant dense<0.000000e+00> : vector<7xf32>
    %18 = vector.multi_reduction <add>, %17, %cst_16 [1] : vector<7x7xf32> to vector<7xf32>
    %19 = vector.shape_cast %18 : vector<7xf32> to vector<7x1xf32>
    %20 = tpu.reciprocal %19 {approx = true} : vector<7x1xf32> -> vector<7x1xf32>
    %21 = vector.broadcast %20 : vector<7x1xf32> to vector<7x7xf32>
    %22 = arith.mulf %17, %21 : vector<7x7xf32>
    %23 = arith.truncf %22 : vector<7x7xf32> to vector<7x7xbf16>
    %cst_17 = arith.constant dense<0.000000e+00> : vector<7x8xf32>
    %24 = tpu.matmul %23, %7, %cst_17 {dimension_numbers = #tpu.dot_dimension_numbers<[1], [0], [0], [1], [0, 0, 1, 1], [], []>} : vector<7x7xbf16>, vector<7x8xbf16>, vector<7x8xf32> -> vector<7x8xf32>
    %25 = arith.truncf %24 : vector<7x8xf32> to vector<7x8xbf16>
    %c0_18 = arith.constant 0 : index
    %c0_19 = arith.constant 0 : index
    %c0_20 = arith.constant 0 : index
    %c0_21 = arith.constant 0 : index
    %26 = vector.load %arg7[%c0_18, %c0_19, %c0_20, %c0_21] : memref<1x1x7x8xbf16, #tpu.memory_space<vmem>>, vector<1x1x7x8xbf16>
    %27 = vector.shape_cast %26 : vector<1x1x7x8xbf16> to vector<7x8xbf16>
    %28 = vector.shape_cast %25 : vector<7x8xbf16> to vector<1x1x7x8xbf16>
    tpu.vector_store %arg7[%c0_18, %c0_19, %c0_20, %c0_21], %28 {strides = array<i32>} : memref<1x1x7x8xbf16, #tpu.memory_space<vmem>>, vector<1x1x7x8xbf16>,
    return
  }
  func.func @transform_0(%arg0: i32, %arg1: i32, %arg2: i32) -> (i32, i32, i32, i32) {
    %c0_i32 = arith.constant 0 : i32
    %c0_i32_0 = arith.constant 0 : i32
    return %arg0, %arg1, %arg2, %c0_i32 : i32, i32, i32, i32
  }
  func.func @transform_1(%arg0: i32, %arg1: i32, %arg2: i32) -> (i32, i32, i32, i32) {
    %c0_i32 = arith.constant 0 : i32
    %c0_i32_0 = arith.constant 0 : i32
    %c0_i32_1 = arith.constant 0 : i32
    return %arg0, %arg1, %c0_i32, %c0_i32_0 : i32, i32, i32, i32
  }
  func.func @transform_2(%arg0: i32, %arg1: i32, %arg2: i32) -> (i32, i32, i32, i32) {
    %c0_i32 = arith.constant 0 : i32
    %c0_i32_0 = arith.constant 0 : i32
    %c0_i32_1 = arith.constant 0 : i32
    return %arg0, %arg1, %c0_i32, %c0_i32_0 : i32, i32, i32, i32
  }
  func.func @transform_3(%arg0: i32, %arg1: i32, %arg2: i32) -> (i32, i32, i32) {
    %c0_i32 = arith.constant 0 : i32
    %c0_i32_0 = arith.constant 0 : i32
    %c0_i32_1 = arith.constant 0 : i32
    return %arg0, %c0_i32, %c0_i32_0 : i32, i32, i32
  }
  func.func @transform_4(%arg0: i32, %arg1: i32, %arg2: i32) -> (i32, i32, i32, i32) {
    %c0_i32 = arith.constant 0 : i32
    %c0_i32_0 = arith.constant 0 : i32
    return %arg0, %arg1, %arg2, %c0_i32 : i32, i32, i32, i32
  }
}

module attributes {stable_mosaic.version = 11 : i64} {
  func.func @_linear_kernel(%arg0: i32, %arg1: i32, %arg2: i32, %arg3: memref<14x32xbf16, #tpu.memory_space<vmem>>, %arg4: memref<32x64xbf16, #tpu.memory_space<vmem>>, %arg5: memref<1x64xf32, #tpu.memory_space<vmem>>, %arg6: memref<14x64xbf16, #tpu.memory_space<vmem>>, %arg7: memref<14x64xf32, #tpu.memory_space<vmem>>) attributes {dimension_semantics = [#tpu.dimension_semantics<parallel>, #tpu.dimension_semantics<parallel>, #tpu.dimension_semantics<arbitrary>], iteration_bounds = array<i64: 1, 1, 1>, scalar_prefetch = 0 : i64, scratch_operands = 1 : i64, tpu.core_type = #tpu.core_type<tc>, window_params = [{transform_indices = @transform_0, window_bounds = array<i64: 14, 32>}, {transform_indices = @transform_1, window_bounds = array<i64: 32, 64>}, {transform_indices = @transform_2, window_bounds = array<i64: 1, 64>}, {transform_indices = @transform_3, window_bounds = array<i64: 14, 64>}]} {
    %c0_i32 = arith.constant 0 : i32
    %0 = arith.cmpi eq, %arg2, %c0_i32 : i32
    %1 = arith.extui %0 : i1 to i32
    %c0_i32_0 = arith.constant 0 : i32
    %2 = arith.cmpi ne, %1, %c0_i32_0 : i32
    scf.if %2 {
      %cst_10 = arith.constant 0.000000e+00 : f32
      %12 = vector.broadcast %cst_10 : f32 to vector<14x64xf32>
      %c0_11 = arith.constant 0 : index
      %c0_12 = arith.constant 0 : index
      %13 = vector.load %arg7[%c0_11, %c0_12] : memref<14x64xf32, #tpu.memory_space<vmem>>, vector<14x64xf32>
      tpu.vector_store %arg7[%c0_11, %c0_12], %12 {strides = array<i32>} : memref<14x64xf32, #tpu.memory_space<vmem>>, vector<14x64xf32>,
    } else {
    }
    %c0 = arith.constant 0 : index
    %c0_1 = arith.constant 0 : index
    %3 = vector.load %arg7[%c0, %c0_1] : memref<14x64xf32, #tpu.memory_space<vmem>>, vector<14x64xf32>
    %c0_2 = arith.constant 0 : index
    %c0_3 = arith.constant 0 : index
    %4 = vector.load %arg3[%c0_2, %c0_3] : memref<14x32xbf16, #tpu.memory_space<vmem>>, vector<14x32xbf16>
    %c0_4 = arith.constant 0 : index
    %c0_5 = arith.constant 0 : index
    %5 = vector.load %arg4[%c0_4, %c0_5] : memref<32x64xbf16, #tpu.memory_space<vmem>>, vector<32x64xbf16>
    %cst = arith.constant dense<0.000000e+00> : vector<14x64xf32>
    %6 = tpu.matmul %4, %5, %cst {dimension_numbers = #tpu.dot_dimension_numbers<[1], [0], [0], [1], [0, 0, 1, 1], [], []>} : vector<14x32xbf16>, vector<32x64xbf16>, vector<14x64xf32> -> vector<14x64xf32>
    %7 = arith.addf %3, %6 : vector<14x64xf32>
    %c0_6 = arith.constant 0 : index
    %c0_7 = arith.constant 0 : index
    %8 = vector.load %arg7[%c0_6, %c0_7] : memref<14x64xf32, #tpu.memory_space<vmem>>, vector<14x64xf32>
    tpu.vector_store %arg7[%c0_6, %c0_7], %7 {strides = array<i32>} : memref<14x64xf32, #tpu.memory_space<vmem>>, vector<14x64xf32>,
    %c0_i32_8 = arith.constant 0 : i32
    %9 = arith.cmpi eq, %arg2, %c0_i32_8 : i32
    %10 = arith.extui %9 : i1 to i32
    %c0_i32_9 = arith.constant 0 : i32
    %11 = arith.cmpi ne, %10, %c0_i32_9 : i32
    scf.if %11 {
      %c0_10 = arith.constant 0 : index
      %c0_11 = arith.constant 0 : index
      %12 = vector.load %arg7[%c0_10, %c0_11] : memref<14x64xf32, #tpu.memory_space<vmem>>, vector<14x64xf32>
      %c0_12 = arith.constant 0 : index
      %c0_13 = arith.constant 0 : index
      %13 = vector.load %arg5[%c0_12, %c0_13] : memref<1x64xf32, #tpu.memory_space<vmem>>, vector<1x64xf32>
      %14 = vector.broadcast %13 : vector<1x64xf32> to vector<14x64xf32>
      %15 = arith.addf %12, %14 : vector<14x64xf32>
      %cst_14 = arith.constant 0.000000e+00 : f32
      %16 = vector.broadcast %cst_14 : f32 to vector<14x64xf32>
      %17 = arith.maximumf %15, %16 : vector<14x64xf32>
      %18 = arith.truncf %17 : vector<14x64xf32> to vector<14x64xbf16>
      %c0_15 = arith.constant 0 : index
      %c0_16 = arith.constant 0 : index
      %19 = vector.load %arg6[%c0_15, %c0_16] : memref<14x64xbf16, #tpu.memory_space<vmem>>, vector<14x64xbf16>
      tpu.vector_store %arg6[%c0_15, %c0_16], %18 {strides = array<i32>} : memref<14x64xbf16, #tpu.memory_space<vmem>>, vector<14x64xbf16>,
    } else {
    }
    return
  }
  func.func @transform_0(%arg0: i32, %arg1: i32, %arg2: i32) -> (i32, i32) {
    %c0_i32 = arith.constant 0 : i32
    return %arg0, %arg2 : i32, i32
  }
  func.func @transform_1(%arg0: i32, %arg1: i32, %arg2: i32) -> (i32, i32) {
    %c0_i32 = arith.constant 0 : i32
    return %arg2, %arg1 : i32, i32
  }
  func.func @transform_2(%arg0: i32, %arg1: i32, %arg2: i32) -> (i32, i32) {
    %c0_i32 = arith.constant 0 : i32
    %c0_i32_0 = arith.constant 0 : i32
    return %c0_i32, %arg1 : i32, i32
  }
  func.func @transform_3(%arg0: i32, %arg1: i32, %arg2: i32) -> (i32, i32) {
    %c0_i32 = arith.constant 0 : i32
    return %arg0, %arg1 : i32, i32
  }
}

module attributes {stable_mosaic.version = 11 : i64} {
  func.func @_linear_ln_kernel(%arg0: i32, %arg1: i32, %arg2: memref<14x32xbf16, #tpu.memory_space<vmem>>, %arg3: memref<32x32xbf16, #tpu.memory_space<vmem>>, %arg4: memref<1x32xf32, #tpu.memory_space<vmem>>, %arg5: memref<14x32xbf16, #tpu.memory_space<vmem>>, %arg6: memref<1x32xf32, #tpu.memory_space<vmem>>, %arg7: memref<1x32xf32, #tpu.memory_space<vmem>>, %arg8: memref<14x1xf32, #tpu.memory_space<vmem>>, %arg9: memref<14x32xbf16, #tpu.memory_space<vmem>>, %arg10: memref<14x32xf32, #tpu.memory_space<vmem>>) attributes {dimension_semantics = [#tpu.dimension_semantics<parallel>, #tpu.dimension_semantics<arbitrary>], iteration_bounds = array<i64: 1, 1>, scalar_prefetch = 0 : i64, scratch_operands = 1 : i64, tpu.core_type = #tpu.core_type<tc>, window_params = [{transform_indices = @transform_0, window_bounds = array<i64: 14, 32>}, {transform_indices = @transform_1, window_bounds = array<i64: 32, 32>}, {pipeline_mode = #tpu.pipeline_mode<synchronous>, transform_indices = @transform_2, window_bounds = array<i64: 1, 32>}, {transform_indices = @transform_3, window_bounds = array<i64: 14, 32>}, {pipeline_mode = #tpu.pipeline_mode<synchronous>, transform_indices = @transform_4, window_bounds = array<i64: 1, 32>}, {pipeline_mode = #tpu.pipeline_mode<synchronous>, transform_indices = @transform_5, window_bounds = array<i64: 1, 32>}, {transform_indices = @transform_6, window_bounds = array<i64: 14, 1>}, {transform_indices = @transform_7, window_bounds = array<i64: 14, 32>}]} {
    %c0_i32 = arith.constant 0 : i32
    %0 = arith.cmpi eq, %arg1, %c0_i32 : i32
    %1 = arith.extui %0 : i1 to i32
    %c0_i32_0 = arith.constant 0 : i32
    %2 = arith.cmpi ne, %1, %c0_i32_0 : i32
    scf.if %2 {
      %cst_10 = arith.constant 0.000000e+00 : f32
      %12 = vector.broadcast %cst_10 : f32 to vector<14x32xf32>
      %c0_11 = arith.constant 0 : index
      %c0_12 = arith.constant 0 : index
      %13 = vector.load %arg10[%c0_11, %c0_12] : memref<14x32xf32, #tpu.memory_space<vmem>>, vector<14x32xf32>
      tpu.vector_store %arg10[%c0_11, %c0_12], %12 {strides = array<i32>} : memref<14x32xf32, #tpu.memory_space<vmem>>, vector<14x32xf32>,
    } else {
    }
    %c0 = arith.constant 0 : index
    %c0_1 = arith.constant 0 : index
    %3 = vector.load %arg10[%c0, %c0_1] : memref<14x32xf32, #tpu.memory_space<vmem>>, vector<14x32xf32>
    %c0_2 = arith.constant 0 : index
    %c0_3 = arith.constant 0 : index
    %4 = vector.load %arg2[%c0_2, %c0_3] : memref<14x32xbf16, #tpu.memory_space<vmem>>, vector<14x32xbf16>
    %c0_4 = arith.constant 0 : index
    %c0_5 = arith.constant 0 : index
    %5 = vector.load %arg3[%c0_4, %c0_5] : memref<32x32xbf16, #tpu.memory_space<vmem>>, vector<32x32xbf16>
    %cst = arith.constant dense<0.000000e+00> : vector<14x32xf32>
    %6 = tpu.matmul %4, %5, %cst {dimension_numbers = #tpu.dot_dimension_numbers<[1], [0], [0], [1], [0, 0, 1, 1], [], []>} : vector<14x32xbf16>, vector<32x32xbf16>, vector<14x32xf32> -> vector<14x32xf32>
    %7 = arith.addf %3, %6 : vector<14x32xf32>
    %c0_6 = arith.constant 0 : index
    %c0_7 = arith.constant 0 : index
    %8 = vector.load %arg10[%c0_6, %c0_7] : memref<14x32xf32, #tpu.memory_space<vmem>>, vector<14x32xf32>
    tpu.vector_store %arg10[%c0_6, %c0_7], %7 {strides = array<i32>} : memref<14x32xf32, #tpu.memory_space<vmem>>, vector<14x32xf32>,
    %c0_i32_8 = arith.constant 0 : i32
    %9 = arith.cmpi eq, %arg1, %c0_i32_8 : i32
    %10 = arith.extui %9 : i1 to i32
    %c0_i32_9 = arith.constant 0 : i32
    %11 = arith.cmpi ne, %10, %c0_i32_9 : i32
    scf.if %11 {
      %c0_10 = arith.constant 0 : index
      %c0_11 = arith.constant 0 : index
      %12 = vector.load %arg10[%c0_10, %c0_11] : memref<14x32xf32, #tpu.memory_space<vmem>>, vector<14x32xf32>
      %c0_12 = arith.constant 0 : index
      %c0_13 = arith.constant 0 : index
      %13 = vector.load %arg4[%c0_12, %c0_13] : memref<1x32xf32, #tpu.memory_space<vmem>>, vector<1x32xf32>
      %14 = vector.broadcast %13 : vector<1x32xf32> to vector<14x32xf32>
      %15 = arith.addf %12, %14 : vector<14x32xf32>
      %c0_14 = arith.constant 0 : index
      %c0_15 = arith.constant 0 : index
      %16 = vector.load %arg5[%c0_14, %c0_15] : memref<14x32xbf16, #tpu.memory_space<vmem>>, vector<14x32xbf16>
      %17 = arith.extf %16 : vector<14x32xbf16> to vector<14x32xf32>
      %18 = arith.addf %15, %17 : vector<14x32xf32>
      %cst_16 = arith.constant dense<0.000000e+00> : vector<14xf32>
      %19 = vector.multi_reduction <add>, %18, %cst_16 [1] : vector<14x32xf32> to vector<14xf32>
      %20 = vector.shape_cast %19 : vector<14xf32> to vector<14x1xf32>
      %cst_17 = arith.constant 3.200000e+01 : f32
      %21 = vector.broadcast %cst_17 : f32 to vector<14x1xf32>
      %22 = arith.divf %20, %21 : vector<14x1xf32>
      %23 = vector.broadcast %22 : vector<14x1xf32> to vector<14x32xf32>
      %24 = arith.subf %18, %23 : vector<14x32xf32>
      %25 = arith.mulf %24, %24 : vector<14x32xf32>
      %cst_18 = arith.constant dense<0.000000e+00> : vector<14xf32>
      %26 = vector.multi_reduction <add>, %25, %cst_18 [1] : vector<14x32xf32> to vector<14xf32>
      %27 = vector.shape_cast %26 : vector<14xf32> to vector<14x1xf32>
      %cst_19 = arith.constant 3.200000e+01 : f32
      %28 = vector.broadcast %cst_19 : f32 to vector<14x1xf32>
      %29 = arith.divf %27, %28 : vector<14x1xf32>
      %30 = vector.broadcast %22 : vector<14x1xf32> to vector<14x32xf32>
      %31 = arith.subf %18, %30 : vector<14x32xf32>
      %cst_20 = arith.constant 9.99999974E-6 : f32
      %32 = vector.broadcast %cst_20 : f32 to vector<14x1xf32>
      %33 = arith.addf %29, %32 : vector<14x1xf32>
      %34 = math.rsqrt %33 : vector<14x1xf32>
      %35 = vector.broadcast %34 : vector<14x1xf32> to vector<14x32xf32>
      %36 = arith.mulf %31, %35 : vector<14x32xf32>
      %c0_21 = arith.constant 0 : index
      %c0_22 = arith.constant 0 : index
      %37 = vector.load %arg6[%c0_21, %c0_22] : memref<1x32xf32, #tpu.memory_space<vmem>>, vector<1x32xf32>
      %38 = vector.broadcast %37 : vector<1x32xf32> to vector<14x32xf32>
      %39 = arith.mulf %36, %38 : vector<14x32xf32>
      %c0_23 = arith.constant 0 : index
      %c0_24 = arith.constant 0 : index
      %40 = vector.load %arg7[%c0_23, %c0_24] : memref<1x32xf32, #tpu.memory_space<vmem>>, vector<1x32xf32>
      %41 = vector.broadcast %40 : vector<1x32xf32> to vector<14x32xf32>
      %42 = arith.addf %39, %41 : vector<14x32xf32>
      %c0_25 = arith.constant 0 : index
      %c0_26 = arith.constant 0 : index
      %43 = vector.load %arg8[%c0_25, %c0_26] : memref<14x1xf32, #tpu.memory_space<vmem>>, vector<14x1xf32>
      %44 = vector.broadcast %43 : vector<14x1xf32> to vector<14x32xf32>
      %45 = arith.mulf %42, %44 : vector<14x32xf32>
      %46 = arith.truncf %45 : vector<14x32xf32> to vector<14x32xbf16>
      %c0_27 = arith.constant 0 : index
      %c0_28 = arith.constant 0 : index
      %47 = vector.load %arg9[%c0_27, %c0_28] : memref<14x32xbf16, #tpu.memory_space<vmem>>, vector<14x32xbf16>
      tpu.vector_store %arg9[%c0_27, %c0_28], %46 {strides = array<i32>} : memref<14x32xbf16, #tpu.memory_space<vmem>>, vector<14x32xbf16>,
    } else {
    }
    return
  }
  func.func @transform_0(%arg0: i32, %arg1: i32) -> (i32, i32) {
    %c0_i32 = arith.constant 0 : i32
    return %arg0, %arg1 : i32, i32
  }
  func.func @transform_1(%arg0: i32, %arg1: i32) -> (i32, i32) {
    %c0_i32 = arith.constant 0 : i32
    %c0_i32_0 = arith.constant 0 : i32
    return %arg1, %c0_i32 : i32, i32
  }
  func.func @transform_2(%arg0: i32, %arg1: i32) -> (i32, i32) {
    %c0_i32 = arith.constant 0 : i32
    %c0_i32_0 = arith.constant 0 : i32
    %c0_i32_1 = arith.constant 0 : i32
    return %c0_i32, %c0_i32_0 : i32, i32
  }
  func.func @transform_3(%arg0: i32, %arg1: i32) -> (i32, i32) {
    %c0_i32 = arith.constant 0 : i32
    %c0_i32_0 = arith.constant 0 : i32
    return %arg0, %c0_i32 : i32, i32
  }
  func.func @transform_4(%arg0: i32, %arg1: i32) -> (i32, i32) {
    %c0_i32 = arith.constant 0 : i32
    %c0_i32_0 = arith.constant 0 : i32
    %c0_i32_1 = arith.constant 0 : i32
    return %c0_i32, %c0_i32_0 : i32, i32
  }
  func.func @transform_5(%arg0: i32, %arg1: i32) -> (i32, i32) {
    %c0_i32 = arith.constant 0 : i32
    %c0_i32_0 = arith.constant 0 : i32
    %c0_i32_1 = arith.constant 0 : i32
    return %c0_i32, %c0_i32_0 : i32, i32
  }
  func.func @transform_6(%arg0: i32, %arg1: i32) -> (i32, i32) {
    %c0_i32 = arith.constant 0 : i32
    %c0_i32_0 = arith.constant 0 : i32
    return %arg0, %c0_i32 : i32, i32
  }
  func.func @transform_7(%arg0: i32, %arg1: i32) -> (i32, i32) {
    %c0_i32 = arith.constant 0 : i32
    %c0_i32_0 = arith.constant 0 : i32
    return %arg0, %c0_i32 : i32, i32
  }
}

module attributes {stable_mosaic.version = 11 : i64} {
  func.func @_linear_ln_kernel(%arg0: i32, %arg1: i32, %arg2: memref<14x64xbf16, #tpu.memory_space<vmem>>, %arg3: memref<64x32xbf16, #tpu.memory_space<vmem>>, %arg4: memref<1x32xf32, #tpu.memory_space<vmem>>, %arg5: memref<14x32xbf16, #tpu.memory_space<vmem>>, %arg6: memref<1x32xf32, #tpu.memory_space<vmem>>, %arg7: memref<1x32xf32, #tpu.memory_space<vmem>>, %arg8: memref<14x1xf32, #tpu.memory_space<vmem>>, %arg9: memref<14x32xbf16, #tpu.memory_space<vmem>>, %arg10: memref<14x32xf32, #tpu.memory_space<vmem>>) attributes {dimension_semantics = [#tpu.dimension_semantics<parallel>, #tpu.dimension_semantics<arbitrary>], iteration_bounds = array<i64: 1, 1>, scalar_prefetch = 0 : i64, scratch_operands = 1 : i64, tpu.core_type = #tpu.core_type<tc>, window_params = [{transform_indices = @transform_0, window_bounds = array<i64: 14, 64>}, {transform_indices = @transform_1, window_bounds = array<i64: 64, 32>}, {pipeline_mode = #tpu.pipeline_mode<synchronous>, transform_indices = @transform_2, window_bounds = array<i64: 1, 32>}, {transform_indices = @transform_3, window_bounds = array<i64: 14, 32>}, {pipeline_mode = #tpu.pipeline_mode<synchronous>, transform_indices = @transform_4, window_bounds = array<i64: 1, 32>}, {pipeline_mode = #tpu.pipeline_mode<synchronous>, transform_indices = @transform_5, window_bounds = array<i64: 1, 32>}, {transform_indices = @transform_6, window_bounds = array<i64: 14, 1>}, {transform_indices = @transform_7, window_bounds = array<i64: 14, 32>}]} {
    %c0_i32 = arith.constant 0 : i32
    %0 = arith.cmpi eq, %arg1, %c0_i32 : i32
    %1 = arith.extui %0 : i1 to i32
    %c0_i32_0 = arith.constant 0 : i32
    %2 = arith.cmpi ne, %1, %c0_i32_0 : i32
    scf.if %2 {
      %cst_10 = arith.constant 0.000000e+00 : f32
      %12 = vector.broadcast %cst_10 : f32 to vector<14x32xf32>
      %c0_11 = arith.constant 0 : index
      %c0_12 = arith.constant 0 : index
      %13 = vector.load %arg10[%c0_11, %c0_12] : memref<14x32xf32, #tpu.memory_space<vmem>>, vector<14x32xf32>
      tpu.vector_store %arg10[%c0_11, %c0_12], %12 {strides = array<i32>} : memref<14x32xf32, #tpu.memory_space<vmem>>, vector<14x32xf32>,
    } else {
    }
    %c0 = arith.constant 0 : index
    %c0_1 = arith.constant 0 : index
    %3 = vector.load %arg10[%c0, %c0_1] : memref<14x32xf32, #tpu.memory_space<vmem>>, vector<14x32xf32>
    %c0_2 = arith.constant 0 : index
    %c0_3 = arith.constant 0 : index
    %4 = vector.load %arg2[%c0_2, %c0_3] : memref<14x64xbf16, #tpu.memory_space<vmem>>, vector<14x64xbf16>
    %c0_4 = arith.constant 0 : index
    %c0_5 = arith.constant 0 : index
    %5 = vector.load %arg3[%c0_4, %c0_5] : memref<64x32xbf16, #tpu.memory_space<vmem>>, vector<64x32xbf16>
    %cst = arith.constant dense<0.000000e+00> : vector<14x32xf32>
    %6 = tpu.matmul %4, %5, %cst {dimension_numbers = #tpu.dot_dimension_numbers<[1], [0], [0], [1], [0, 0, 1, 1], [], []>} : vector<14x64xbf16>, vector<64x32xbf16>, vector<14x32xf32> -> vector<14x32xf32>
    %7 = arith.addf %3, %6 : vector<14x32xf32>
    %c0_6 = arith.constant 0 : index
    %c0_7 = arith.constant 0 : index
    %8 = vector.load %arg10[%c0_6, %c0_7] : memref<14x32xf32, #tpu.memory_space<vmem>>, vector<14x32xf32>
    tpu.vector_store %arg10[%c0_6, %c0_7], %7 {strides = array<i32>} : memref<14x32xf32, #tpu.memory_space<vmem>>, vector<14x32xf32>,
    %c0_i32_8 = arith.constant 0 : i32
    %9 = arith.cmpi eq, %arg1, %c0_i32_8 : i32
    %10 = arith.extui %9 : i1 to i32
    %c0_i32_9 = arith.constant 0 : i32
    %11 = arith.cmpi ne, %10, %c0_i32_9 : i32
    scf.if %11 {
      %c0_10 = arith.constant 0 : index
      %c0_11 = arith.constant 0 : index
      %12 = vector.load %arg10[%c0_10, %c0_11] : memref<14x32xf32, #tpu.memory_space<vmem>>, vector<14x32xf32>
      %c0_12 = arith.constant 0 : index
      %c0_13 = arith.constant 0 : index
      %13 = vector.load %arg4[%c0_12, %c0_13] : memref<1x32xf32, #tpu.memory_space<vmem>>, vector<1x32xf32>
      %14 = vector.broadcast %13 : vector<1x32xf32> to vector<14x32xf32>
      %15 = arith.addf %12, %14 : vector<14x32xf32>
      %c0_14 = arith.constant 0 : index
      %c0_15 = arith.constant 0 : index
      %16 = vector.load %arg5[%c0_14, %c0_15] : memref<14x32xbf16, #tpu.memory_space<vmem>>, vector<14x32xbf16>
      %17 = arith.extf %16 : vector<14x32xbf16> to vector<14x32xf32>
      %18 = arith.addf %15, %17 : vector<14x32xf32>
      %cst_16 = arith.constant dense<0.000000e+00> : vector<14xf32>
      %19 = vector.multi_reduction <add>, %18, %cst_16 [1] : vector<14x32xf32> to vector<14xf32>
      %20 = vector.shape_cast %19 : vector<14xf32> to vector<14x1xf32>
      %cst_17 = arith.constant 3.200000e+01 : f32
      %21 = vector.broadcast %cst_17 : f32 to vector<14x1xf32>
      %22 = arith.divf %20, %21 : vector<14x1xf32>
      %23 = vector.broadcast %22 : vector<14x1xf32> to vector<14x32xf32>
      %24 = arith.subf %18, %23 : vector<14x32xf32>
      %25 = arith.mulf %24, %24 : vector<14x32xf32>
      %cst_18 = arith.constant dense<0.000000e+00> : vector<14xf32>
      %26 = vector.multi_reduction <add>, %25, %cst_18 [1] : vector<14x32xf32> to vector<14xf32>
      %27 = vector.shape_cast %26 : vector<14xf32> to vector<14x1xf32>
      %cst_19 = arith.constant 3.200000e+01 : f32
      %28 = vector.broadcast %cst_19 : f32 to vector<14x1xf32>
      %29 = arith.divf %27, %28 : vector<14x1xf32>
      %30 = vector.broadcast %22 : vector<14x1xf32> to vector<14x32xf32>
      %31 = arith.subf %18, %30 : vector<14x32xf32>
      %cst_20 = arith.constant 9.99999974E-6 : f32
      %32 = vector.broadcast %cst_20 : f32 to vector<14x1xf32>
      %33 = arith.addf %29, %32 : vector<14x1xf32>
      %34 = math.rsqrt %33 : vector<14x1xf32>
      %35 = vector.broadcast %34 : vector<14x1xf32> to vector<14x32xf32>
      %36 = arith.mulf %31, %35 : vector<14x32xf32>
      %c0_21 = arith.constant 0 : index
      %c0_22 = arith.constant 0 : index
      %37 = vector.load %arg6[%c0_21, %c0_22] : memref<1x32xf32, #tpu.memory_space<vmem>>, vector<1x32xf32>
      %38 = vector.broadcast %37 : vector<1x32xf32> to vector<14x32xf32>
      %39 = arith.mulf %36, %38 : vector<14x32xf32>
      %c0_23 = arith.constant 0 : index
      %c0_24 = arith.constant 0 : index
      %40 = vector.load %arg7[%c0_23, %c0_24] : memref<1x32xf32, #tpu.memory_space<vmem>>, vector<1x32xf32>
      %41 = vector.broadcast %40 : vector<1x32xf32> to vector<14x32xf32>
      %42 = arith.addf %39, %41 : vector<14x32xf32>
      %c0_25 = arith.constant 0 : index
      %c0_26 = arith.constant 0 : index
      %43 = vector.load %arg8[%c0_25, %c0_26] : memref<14x1xf32, #tpu.memory_space<vmem>>, vector<14x1xf32>
      %44 = vector.broadcast %43 : vector<14x1xf32> to vector<14x32xf32>
      %45 = arith.mulf %42, %44 : vector<14x32xf32>
      %46 = arith.truncf %45 : vector<14x32xf32> to vector<14x32xbf16>
      %c0_27 = arith.constant 0 : index
      %c0_28 = arith.constant 0 : index
      %47 = vector.load %arg9[%c0_27, %c0_28] : memref<14x32xbf16, #tpu.memory_space<vmem>>, vector<14x32xbf16>
      tpu.vector_store %arg9[%c0_27, %c0_28], %46 {strides = array<i32>} : memref<14x32xbf16, #tpu.memory_space<vmem>>, vector<14x32xbf16>,
    } else {
    }
    return
  }
  func.func @transform_0(%arg0: i32, %arg1: i32) -> (i32, i32) {
    %c0_i32 = arith.constant 0 : i32
    return %arg0, %arg1 : i32, i32
  }
  func.func @transform_1(%arg0: i32, %arg1: i32) -> (i32, i32) {
    %c0_i32 = arith.constant 0 : i32
    %c0_i32_0 = arith.constant 0 : i32
    return %arg1, %c0_i32 : i32, i32
  }
  func.func @transform_2(%arg0: i32, %arg1: i32) -> (i32, i32) {
    %c0_i32 = arith.constant 0 : i32
    %c0_i32_0 = arith.constant 0 : i32
    %c0_i32_1 = arith.constant 0 : i32
    return %c0_i32, %c0_i32_0 : i32, i32
  }
  func.func @transform_3(%arg0: i32, %arg1: i32) -> (i32, i32) {
    %c0_i32 = arith.constant 0 : i32
    %c0_i32_0 = arith.constant 0 : i32
    return %arg0, %c0_i32 : i32, i32
  }
  func.func @transform_4(%arg0: i32, %arg1: i32) -> (i32, i32) {
    %c0_i32 = arith.constant 0 : i32
    %c0_i32_0 = arith.constant 0 : i32
    %c0_i32_1 = arith.constant 0 : i32
    return %c0_i32, %c0_i32_0 : i32, i32
  }
  func.func @transform_5(%arg0: i32, %arg1: i32) -> (i32, i32) {
    %c0_i32 = arith.constant 0 : i32
    %c0_i32_0 = arith.constant 0 : i32
    %c0_i32_1 = arith.constant 0 : i32
    return %c0_i32, %c0_i32_0 : i32, i32
  }
  func.func @transform_6(%arg0: i32, %arg1: i32) -> (i32, i32) {
    %c0_i32 = arith.constant 0 : i32
    %c0_i32_0 = arith.constant 0 : i32
    return %arg0, %c0_i32 : i32, i32
  }
  func.func @transform_7(%arg0: i32, %arg1: i32) -> (i32, i32) {
    %c0_i32 = arith.constant 0 : i32
    %c0_i32_0 = arith.constant 0 : i32
    return %arg0, %c0_i32 : i32, i32
  }
}

module attributes {stable_mosaic.version = 11 : i64} {
  func.func @_linear_kernel(%arg0: i32, %arg1: i32, %arg2: i32, %arg3: memref<14x32xbf16, #tpu.memory_space<vmem>>, %arg4: memref<32x64xbf16, #tpu.memory_space<vmem>>, %arg5: memref<1x64xf32, #tpu.memory_space<vmem>>, %arg6: memref<14x64xbf16, #tpu.memory_space<vmem>>, %arg7: memref<14x64xf32, #tpu.memory_space<vmem>>) attributes {dimension_semantics = [#tpu.dimension_semantics<parallel>, #tpu.dimension_semantics<parallel>, #tpu.dimension_semantics<arbitrary>], iteration_bounds = array<i64: 1, 1, 1>, scalar_prefetch = 0 : i64, scratch_operands = 1 : i64, tpu.core_type = #tpu.core_type<tc>, window_params = [{transform_indices = @transform_0, window_bounds = array<i64: 14, 32>}, {transform_indices = @transform_1, window_bounds = array<i64: 32, 64>}, {transform_indices = @transform_2, window_bounds = array<i64: 1, 64>}, {transform_indices = @transform_3, window_bounds = array<i64: 14, 64>}]} {
    %c0_i32 = arith.constant 0 : i32
    %0 = arith.cmpi eq, %arg2, %c0_i32 : i32
    %1 = arith.extui %0 : i1 to i32
    %c0_i32_0 = arith.constant 0 : i32
    %2 = arith.cmpi ne, %1, %c0_i32_0 : i32
    scf.if %2 {
      %cst_10 = arith.constant 0.000000e+00 : f32
      %12 = vector.broadcast %cst_10 : f32 to vector<14x64xf32>
      %c0_11 = arith.constant 0 : index
      %c0_12 = arith.constant 0 : index
      %13 = vector.load %arg7[%c0_11, %c0_12] : memref<14x64xf32, #tpu.memory_space<vmem>>, vector<14x64xf32>
      tpu.vector_store %arg7[%c0_11, %c0_12], %12 {strides = array<i32>} : memref<14x64xf32, #tpu.memory_space<vmem>>, vector<14x64xf32>,
    } else {
    }
    %c0 = arith.constant 0 : index
    %c0_1 = arith.constant 0 : index
    %3 = vector.load %arg7[%c0, %c0_1] : memref<14x64xf32, #tpu.memory_space<vmem>>, vector<14x64xf32>
    %c0_2 = arith.constant 0 : index
    %c0_3 = arith.constant 0 : index
    %4 = vector.load %arg3[%c0_2, %c0_3] : memref<14x32xbf16, #tpu.memory_space<vmem>>, vector<14x32xbf16>
    %c0_4 = arith.constant 0 : index
    %c0_5 = arith.constant 0 : index
    %5 = vector.load %arg4[%c0_4, %c0_5] : memref<32x64xbf16, #tpu.memory_space<vmem>>, vector<32x64xbf16>
    %cst = arith.constant dense<0.000000e+00> : vector<14x64xf32>
    %6 = tpu.matmul %4, %5, %cst {dimension_numbers = #tpu.dot_dimension_numbers<[1], [0], [0], [1], [0, 0, 1, 1], [], []>} : vector<14x32xbf16>, vector<32x64xbf16>, vector<14x64xf32> -> vector<14x64xf32>
    %7 = arith.addf %3, %6 : vector<14x64xf32>
    %c0_6 = arith.constant 0 : index
    %c0_7 = arith.constant 0 : index
    %8 = vector.load %arg7[%c0_6, %c0_7] : memref<14x64xf32, #tpu.memory_space<vmem>>, vector<14x64xf32>
    tpu.vector_store %arg7[%c0_6, %c0_7], %7 {strides = array<i32>} : memref<14x64xf32, #tpu.memory_space<vmem>>, vector<14x64xf32>,
    %c0_i32_8 = arith.constant 0 : i32
    %9 = arith.cmpi eq, %arg2, %c0_i32_8 : i32
    %10 = arith.extui %9 : i1 to i32
    %c0_i32_9 = arith.constant 0 : i32
    %11 = arith.cmpi ne, %10, %c0_i32_9 : i32
    scf.if %11 {
      %c0_10 = arith.constant 0 : index
      %c0_11 = arith.constant 0 : index
      %12 = vector.load %arg7[%c0_10, %c0_11] : memref<14x64xf32, #tpu.memory_space<vmem>>, vector<14x64xf32>
      %c0_12 = arith.constant 0 : index
      %c0_13 = arith.constant 0 : index
      %13 = vector.load %arg5[%c0_12, %c0_13] : memref<1x64xf32, #tpu.memory_space<vmem>>, vector<1x64xf32>
      %14 = vector.broadcast %13 : vector<1x64xf32> to vector<14x64xf32>
      %15 = arith.addf %12, %14 : vector<14x64xf32>
      %16 = arith.truncf %15 : vector<14x64xf32> to vector<14x64xbf16>
      %c0_14 = arith.constant 0 : index
      %c0_15 = arith.constant 0 : index
      %17 = vector.load %arg6[%c0_14, %c0_15] : memref<14x64xbf16, #tpu.memory_space<vmem>>, vector<14x64xbf16>
      tpu.vector_store %arg6[%c0_14, %c0_15], %16 {strides = array<i32>} : memref<14x64xbf16, #tpu.memory_space<vmem>>, vector<14x64xbf16>,
    } else {
    }
    return
  }
  func.func @transform_0(%arg0: i32, %arg1: i32, %arg2: i32) -> (i32, i32) {
    %c0_i32 = arith.constant 0 : i32
    return %arg0, %arg2 : i32, i32
  }
  func.func @transform_1(%arg0: i32, %arg1: i32, %arg2: i32) -> (i32, i32) {
    %c0_i32 = arith.constant 0 : i32
    return %arg2, %arg1 : i32, i32
  }
  func.func @transform_2(%arg0: i32, %arg1: i32, %arg2: i32) -> (i32, i32) {
    %c0_i32 = arith.constant 0 : i32
    %c0_i32_0 = arith.constant 0 : i32
    return %c0_i32, %arg1 : i32, i32
  }
  func.func @transform_3(%arg0: i32, %arg1: i32, %arg2: i32) -> (i32, i32) {
    %c0_i32 = arith.constant 0 : i32
    return %arg0, %arg1 : i32, i32
  }
}

module attributes {stable_mosaic.version = 11 : i64} {
  func.func @_attn_kernel(%arg0: i32, %arg1: i32, %arg2: i32, %arg3: memref<1x1x7x8xbf16, #tpu.memory_space<vmem>>, %arg4: memref<1x1x7x8xbf16, #tpu.memory_space<vmem>>, %arg5: memref<1x1x7x8xbf16, #tpu.memory_space<vmem>>, %arg6: memref<1x1x7xf32, #tpu.memory_space<vmem>>, %arg7: memref<1x1x7x8xbf16, #tpu.memory_space<vmem>>) attributes {dimension_semantics = [#tpu.dimension_semantics<parallel>, #tpu.dimension_semantics<parallel>, #tpu.dimension_semantics<parallel>], iteration_bounds = array<i64: 2, 4, 1>, scalar_prefetch = 0 : i64, scratch_operands = 0 : i64, tpu.core_type = #tpu.core_type<tc>, window_params = [{transform_indices = @transform_0, window_bounds = array<i64: 1, 1, 7, 8>}, {transform_indices = @transform_1, window_bounds = array<i64: 1, 1, 7, 8>}, {transform_indices = @transform_2, window_bounds = array<i64: 1, 1, 7, 8>}, {transform_indices = @transform_3, window_bounds = array<i64: 1, 1, 7>}, {transform_indices = @transform_4, window_bounds = array<i64: 1, 1, 7, 8>}]} {
    %c0 = arith.constant 0 : index
    %c0_0 = arith.constant 0 : index
    %c0_1 = arith.constant 0 : index
    %c0_2 = arith.constant 0 : index
    %0 = vector.load %arg3[%c0, %c0_0, %c0_1, %c0_2] : memref<1x1x7x8xbf16, #tpu.memory_space<vmem>>, vector<1x1x7x8xbf16>
    %1 = vector.shape_cast %0 : vector<1x1x7x8xbf16> to vector<7x8xbf16>
    %cst = arith.constant 3.535160e-01 : bf16
    %2 = vector.broadcast %cst : bf16 to vector<7x8xbf16>
    %3 = arith.mulf %1, %2 : vector<7x8xbf16>
    %c0_3 = arith.constant 0 : index
    %c0_4 = arith.constant 0 : index
    %c0_5 = arith.constant 0 : index
    %c0_6 = arith.constant 0 : index
    %4 = vector.load %arg4[%c0_3, %c0_4, %c0_5, %c0_6] : memref<1x1x7x8xbf16, #tpu.memory_space<vmem>>, vector<1x1x7x8xbf16>
    %5 = vector.shape_cast %4 : vector<1x1x7x8xbf16> to vector<7x8xbf16>
    %c0_7 = arith.constant 0 : index
    %c0_8 = arith.constant 0 : index
    %c0_9 = arith.constant 0 : index
    %c0_10 = arith.constant 0 : index
    %6 = vector.load %arg5[%c0_7, %c0_8, %c0_9, %c0_10] : memref<1x1x7x8xbf16, #tpu.memory_space<vmem>>, vector<1x1x7x8xbf16>
    %7 = vector.shape_cast %6 : vector<1x1x7x8xbf16> to vector<7x8xbf16>
    %cst_11 = arith.constant dense<0.000000e+00> : vector<7x7xf32>
    %8 = tpu.matmul %3, %5, %cst_11 {dimension_numbers = #tpu.dot_dimension_numbers<[1], [1], [0], [0], [0, 0, 1, 0], [], []>} : vector<7x8xbf16>, vector<7x8xbf16>, vector<7x7xf32> -> vector<7x7xf32>
    %c0_12 = arith.constant 0 : index
    %c0_13 = arith.constant 0 : index
    %c0_14 = arith.constant 0 : index
    %9 = vector.load %arg6[%c0_12, %c0_13, %c0_14] : memref<1x1x7xf32, #tpu.memory_space<vmem>>, vector<1x1x7xf32>
    %10 = vector.shape_cast %9 : vector<1x1x7xf32> to vector<1x7xf32>
    %11 = vector.broadcast %10 : vector<1x7xf32> to vector<7x7xf32>
    %12 = arith.addf %8, %11 : vector<7x7xf32>
    %13 = tpu.iota {dimensions = array<i32: 0>} : vector<7x7xi32>
    %c7_i32 = arith.constant 7 : i32
    %14 = arith.muli %arg2, %c7_i32 : i32
    %15 = vector.broadcast %14 : i32 to vector<7x7xi32>
    %16 = arith.addi %13, %15 : vector<7x7xi32>
    %17 = tpu.iota {dimensions = array<i32: 1>} : vector<7x7xi32>
    %18 = arith.cmpi sgt, %17, %16 : vector<7x7xi32>
    %cst_15 = arith.constant -1.000000e+09 : f32
    %19 = vector.broadcast %cst_15 : f32 to vector<7x7xf32>
    %20 = arith.select %18, %19, %12 : vector<7x7xi1>, vector<7x7xf32>
    %cst_16 = arith.constant dense<0xFF800000> : vector<7xf32>
    %21 = vector.multi_reduction <maximumf>, %20, %cst_16 [1] : vector<7x7xf32> to vector<7xf32>
    %22 = vector.shape_cast %21 : vector<7xf32> to vector<7x1xf32>
    %23 = vector.broadcast %22 : vector<7x1xf32> to vector<7x7xf32>
    %24 = arith.subf %20, %23 : vector<7x7xf32>
    %25 = math.exp %24 : vector<7x7xf32>
    %cst_17 = arith.constant dense<0.000000e+00> : vector<7xf32>
    %26 = vector.multi_reduction <add>, %25, %cst_17 [1] : vector<7x7xf32> to vector<7xf32>
    %27 = vector.shape_cast %26 : vector<7xf32> to vector<7x1xf32>
    %28 = tpu.reciprocal %27 {approx = true} : vector<7x1xf32> -> vector<7x1xf32>
    %29 = vector.broadcast %28 : vector<7x1xf32> to vector<7x7xf32>
    %30 = arith.mulf %25, %29 : vector<7x7xf32>
    %31 = arith.truncf %30 : vector<7x7xf32> to vector<7x7xbf16>
    %cst_18 = arith.constant dense<0.000000e+00> : vector<7x8xf32>
    %32 = tpu.matmul %31, %7, %cst_18 {dimension_numbers = #tpu.dot_dimension_numbers<[1], [0], [0], [1], [0, 0, 1, 1], [], []>} : vector<7x7xbf16>, vector<7x8xbf16>, vector<7x8xf32> -> vector<7x8xf32>
    %33 = arith.truncf %32 : vector<7x8xf32> to vector<7x8xbf16>
    %c0_19 = arith.constant 0 : index
    %c0_20 = arith.constant 0 : index
    %c0_21 = arith.constant 0 : index
    %c0_22 = arith.constant 0 : index
    %34 = vector.load %arg7[%c0_19, %c0_20, %c0_21, %c0_22] : memref<1x1x7x8xbf16, #tpu.memory_space<vmem>>, vector<1x1x7x8xbf16>
    %35 = vector.shape_cast %34 : vector<1x1x7x8xbf16> to vector<7x8xbf16>
    %36 = vector.shape_cast %33 : vector<7x8xbf16> to vector<1x1x7x8xbf16>
    tpu.vector_store %arg7[%c0_19, %c0_20, %c0_21, %c0_22], %36 {strides = array<i32>} : memref<1x1x7x8xbf16, #tpu.memory_space<vmem>>, vector<1x1x7x8xbf16>,
    return
  }
  func.func @transform_0(%arg0: i32, %arg1: i32, %arg2: i32) -> (i32, i32, i32, i32) {
    %c0_i32 = arith.constant 0 : i32
    %c0_i32_0 = arith.constant 0 : i32
    return %arg0, %arg1, %arg2, %c0_i32 : i32, i32, i32, i32
  }
  func.func @transform_1(%arg0: i32, %arg1: i32, %arg2: i32) -> (i32, i32, i32, i32) {
    %c0_i32 = arith.constant 0 : i32
    %c0_i32_0 = arith.constant 0 : i32
    %c0_i32_1 = arith.constant 0 : i32
    return %arg0, %arg1, %c0_i32, %c0_i32_0 : i32, i32, i32, i32
  }
  func.func @transform_2(%arg0: i32, %arg1: i32, %arg2: i32) -> (i32, i32, i32, i32) {
    %c0_i32 = arith.constant 0 : i32
    %c0_i32_0 = arith.constant 0 : i32
    %c0_i32_1 = arith.constant 0 : i32
    return %arg0, %arg1, %c0_i32, %c0_i32_0 : i32, i32, i32, i32
  }
  func.func @transform_3(%arg0: i32, %arg1: i32, %arg2: i32) -> (i32, i32, i32) {
    %c0_i32 = arith.constant 0 : i32
    %c0_i32_0 = arith.constant 0 : i32
    %c0_i32_1 = arith.constant 0 : i32
    return %arg0, %c0_i32, %c0_i32_0 : i32, i32, i32
  }
  func.func @transform_4(%arg0: i32, %arg1: i32, %arg2: i32) -> (i32, i32, i32, i32) {
    %c0_i32 = arith.constant 0 : i32
    %c0_i32_0 = arith.constant 0 : i32
    return %arg0, %arg1, %arg2, %c0_i32 : i32, i32, i32, i32
  }
}

module attributes {stable_mosaic.version = 11 : i64} {
  func.func @_linear_kernel(%arg0: i32, %arg1: i32, %arg2: i32, %arg3: memref<14x32xbf16, #tpu.memory_space<vmem>>, %arg4: memref<32x32xbf16, #tpu.memory_space<vmem>>, %arg5: memref<1x32xf32, #tpu.memory_space<vmem>>, %arg6: memref<14x32xbf16, #tpu.memory_space<vmem>>, %arg7: memref<14x32xf32, #tpu.memory_space<vmem>>) attributes {dimension_semantics = [#tpu.dimension_semantics<parallel>, #tpu.dimension_semantics<parallel>, #tpu.dimension_semantics<arbitrary>], iteration_bounds = array<i64: 1, 1, 1>, scalar_prefetch = 0 : i64, scratch_operands = 1 : i64, tpu.core_type = #tpu.core_type<tc>, window_params = [{transform_indices = @transform_0, window_bounds = array<i64: 14, 32>}, {transform_indices = @transform_1, window_bounds = array<i64: 32, 32>}, {transform_indices = @transform_2, window_bounds = array<i64: 1, 32>}, {transform_indices = @transform_3, window_bounds = array<i64: 14, 32>}]} {
    %c0_i32 = arith.constant 0 : i32
    %0 = arith.cmpi eq, %arg2, %c0_i32 : i32
    %1 = arith.extui %0 : i1 to i32
    %c0_i32_0 = arith.constant 0 : i32
    %2 = arith.cmpi ne, %1, %c0_i32_0 : i32
    scf.if %2 {
      %cst_10 = arith.constant 0.000000e+00 : f32
      %12 = vector.broadcast %cst_10 : f32 to vector<14x32xf32>
      %c0_11 = arith.constant 0 : index
      %c0_12 = arith.constant 0 : index
      %13 = vector.load %arg7[%c0_11, %c0_12] : memref<14x32xf32, #tpu.memory_space<vmem>>, vector<14x32xf32>
      tpu.vector_store %arg7[%c0_11, %c0_12], %12 {strides = array<i32>} : memref<14x32xf32, #tpu.memory_space<vmem>>, vector<14x32xf32>,
    } else {
    }
    %c0 = arith.constant 0 : index
    %c0_1 = arith.constant 0 : index
    %3 = vector.load %arg7[%c0, %c0_1] : memref<14x32xf32, #tpu.memory_space<vmem>>, vector<14x32xf32>
    %c0_2 = arith.constant 0 : index
    %c0_3 = arith.constant 0 : index
    %4 = vector.load %arg3[%c0_2, %c0_3] : memref<14x32xbf16, #tpu.memory_space<vmem>>, vector<14x32xbf16>
    %c0_4 = arith.constant 0 : index
    %c0_5 = arith.constant 0 : index
    %5 = vector.load %arg4[%c0_4, %c0_5] : memref<32x32xbf16, #tpu.memory_space<vmem>>, vector<32x32xbf16>
    %cst = arith.constant dense<0.000000e+00> : vector<14x32xf32>
    %6 = tpu.matmul %4, %5, %cst {dimension_numbers = #tpu.dot_dimension_numbers<[1], [0], [0], [1], [0, 0, 1, 1], [], []>} : vector<14x32xbf16>, vector<32x32xbf16>, vector<14x32xf32> -> vector<14x32xf32>
    %7 = arith.addf %3, %6 : vector<14x32xf32>
    %c0_6 = arith.constant 0 : index
    %c0_7 = arith.constant 0 : index
    %8 = vector.load %arg7[%c0_6, %c0_7] : memref<14x32xf32, #tpu.memory_space<vmem>>, vector<14x32xf32>
    tpu.vector_store %arg7[%c0_6, %c0_7], %7 {strides = array<i32>} : memref<14x32xf32, #tpu.memory_space<vmem>>, vector<14x32xf32>,
    %c0_i32_8 = arith.constant 0 : i32
    %9 = arith.cmpi eq, %arg2, %c0_i32_8 : i32
    %10 = arith.extui %9 : i1 to i32
    %c0_i32_9 = arith.constant 0 : i32
    %11 = arith.cmpi ne, %10, %c0_i32_9 : i32
    scf.if %11 {
      %c0_10 = arith.constant 0 : index
      %c0_11 = arith.constant 0 : index
      %12 = vector.load %arg7[%c0_10, %c0_11] : memref<14x32xf32, #tpu.memory_space<vmem>>, vector<14x32xf32>
      %c0_12 = arith.constant 0 : index
      %c0_13 = arith.constant 0 : index
      %13 = vector.load %arg5[%c0_12, %c0_13] : memref<1x32xf32, #tpu.memory_space<vmem>>, vector<1x32xf32>
      %14 = vector.broadcast %13 : vector<1x32xf32> to vector<14x32xf32>
      %15 = arith.addf %12, %14 : vector<14x32xf32>
      %16 = arith.truncf %15 : vector<14x32xf32> to vector<14x32xbf16>
      %c0_14 = arith.constant 0 : index
      %c0_15 = arith.constant 0 : index
      %17 = vector.load %arg6[%c0_14, %c0_15] : memref<14x32xbf16, #tpu.memory_space<vmem>>, vector<14x32xbf16>
      tpu.vector_store %arg6[%c0_14, %c0_15], %16 {strides = array<i32>} : memref<14x32xbf16, #tpu.memory_space<vmem>>, vector<14x32xbf16>,
    } else {
    }
    return
  }
  func.func @transform_0(%arg0: i32, %arg1: i32, %arg2: i32) -> (i32, i32) {
    %c0_i32 = arith.constant 0 : i32
    return %arg0, %arg2 : i32, i32
  }
  func.func @transform_1(%arg0: i32, %arg1: i32, %arg2: i32) -> (i32, i32) {
    %c0_i32 = arith.constant 0 : i32
    return %arg2, %arg1 : i32, i32
  }
  func.func @transform_2(%arg0: i32, %arg1: i32, %arg2: i32) -> (i32, i32) {
    %c0_i32 = arith.constant 0 : i32
    %c0_i32_0 = arith.constant 0 : i32
    return %c0_i32, %arg1 : i32, i32
  }
  func.func @transform_3(%arg0: i32, %arg1: i32, %arg2: i32) -> (i32, i32) {
    %c0_i32 = arith.constant 0 : i32
    return %arg0, %arg1 : i32, i32
  }
}

module attributes {stable_mosaic.version = 11 : i64} {
  func.func @_linear_kernel(%arg0: i32, %arg1: i32, %arg2: i32, %arg3: memref<14x32xbf16, #tpu.memory_space<vmem>>, %arg4: memref<32x13xbf16, #tpu.memory_space<vmem>>, %arg5: memref<14x13xf32, #tpu.memory_space<vmem>>, %arg6: memref<14x13xf32, #tpu.memory_space<vmem>>) attributes {dimension_semantics = [#tpu.dimension_semantics<parallel>, #tpu.dimension_semantics<parallel>, #tpu.dimension_semantics<arbitrary>], iteration_bounds = array<i64: 1, 1, 1>, scalar_prefetch = 0 : i64, scratch_operands = 1 : i64, tpu.core_type = #tpu.core_type<tc>, window_params = [{transform_indices = @transform_0, window_bounds = array<i64: 14, 32>}, {transform_indices = @transform_1, window_bounds = array<i64: 32, 13>}, {transform_indices = @transform_2, window_bounds = array<i64: 14, 13>}]} {
    %c0_i32 = arith.constant 0 : i32
    %0 = arith.cmpi eq, %arg2, %c0_i32 : i32
    %1 = arith.extui %0 : i1 to i32
    %c0_i32_0 = arith.constant 0 : i32
    %2 = arith.cmpi ne, %1, %c0_i32_0 : i32
    scf.if %2 {
      %cst_10 = arith.constant 0.000000e+00 : f32
      %12 = vector.broadcast %cst_10 : f32 to vector<14x13xf32>
      %c0_11 = arith.constant 0 : index
      %c0_12 = arith.constant 0 : index
      %13 = vector.load %arg6[%c0_11, %c0_12] : memref<14x13xf32, #tpu.memory_space<vmem>>, vector<14x13xf32>
      tpu.vector_store %arg6[%c0_11, %c0_12], %12 {strides = array<i32>} : memref<14x13xf32, #tpu.memory_space<vmem>>, vector<14x13xf32>,
    } else {
    }
    %c0 = arith.constant 0 : index
    %c0_1 = arith.constant 0 : index
    %3 = vector.load %arg6[%c0, %c0_1] : memref<14x13xf32, #tpu.memory_space<vmem>>, vector<14x13xf32>
    %c0_2 = arith.constant 0 : index
    %c0_3 = arith.constant 0 : index
    %4 = vector.load %arg3[%c0_2, %c0_3] : memref<14x32xbf16, #tpu.memory_space<vmem>>, vector<14x32xbf16>
    %c0_4 = arith.constant 0 : index
    %c0_5 = arith.constant 0 : index
    %5 = vector.load %arg4[%c0_4, %c0_5] : memref<32x13xbf16, #tpu.memory_space<vmem>>, vector<32x13xbf16>
    %cst = arith.constant dense<0.000000e+00> : vector<14x13xf32>
    %6 = tpu.matmul %4, %5, %cst {dimension_numbers = #tpu.dot_dimension_numbers<[1], [0], [0], [1], [0, 0, 1, 1], [], []>} : vector<14x32xbf16>, vector<32x13xbf16>, vector<14x13xf32> -> vector<14x13xf32>
    %7 = arith.addf %3, %6 : vector<14x13xf32>
    %c0_6 = arith.constant 0 : index
    %c0_7 = arith.constant 0 : index
    %8 = vector.load %arg6[%c0_6, %c0_7] : memref<14x13xf32, #tpu.memory_space<vmem>>, vector<14x13xf32>
    tpu.vector_store %arg6[%c0_6, %c0_7], %7 {strides = array<i32>} : memref<14x13xf32, #tpu.memory_space<vmem>>, vector<14x13xf32>,
    %c0_i32_8 = arith.constant 0 : i32
    %9 = arith.cmpi eq, %arg2, %c0_i32_8 : i32
    %10 = arith.extui %9 : i1 to i32
    %c0_i32_9 = arith.constant 0 : i32
    %11 = arith.cmpi ne, %10, %c0_i32_9 : i32
    scf.if %11 {
      %c0_10 = arith.constant 0 : index
      %c0_11 = arith.constant 0 : index
      %12 = vector.load %arg6[%c0_10, %c0_11] : memref<14x13xf32, #tpu.memory_space<vmem>>, vector<14x13xf32>
      %c0_12 = arith.constant 0 : index
      %c0_13 = arith.constant 0 : index
      %13 = vector.load %arg5[%c0_12, %c0_13] : memref<14x13xf32, #tpu.memory_space<vmem>>, vector<14x13xf32>
      tpu.vector_store %arg5[%c0_12, %c0_13], %12 {strides = array<i32>} : memref<14x13xf32, #tpu.memory_space<vmem>>, vector<14x13xf32>,
    } else {
    }
    return
  }
  func.func @transform_0(%arg0: i32, %arg1: i32, %arg2: i32) -> (i32, i32) {
    %c0_i32 = arith.constant 0 : i32
    return %arg0, %arg2 : i32, i32
  }
  func.func @transform_1(%arg0: i32, %arg1: i32, %arg2: i32) -> (i32, i32) {
    %c0_i32 = arith.constant 0 : i32
    return %arg2, %arg1 : i32, i32
  }
  func.func @transform_2(%arg0: i32, %arg1: i32, %arg2: i32) -> (i32, i32) {
    %c0_i32 = arith.constant 0 : i32
    return %arg0, %arg1 : i32, i32
  }
}

</mosaic_0001>

<llo_original>
// kernel: transformer_forward.29
$region0: #{transformer_forward.29}
  #allocation0 [shape = 'u32[]', space=smem, size = 0x4, offset = 0x4, fixed_abs, tag = 'smem constant byte address 0x4 - core index']
  #allocation1 [shape = 'u32[144,128]{1,0:T(1,128)}', space=vmem, size = 0x12000, scoped, tag = 'internal scratch']
  #allocation2 [shape = 'f32[14,96]{1,0:T(8,128)}', space=vmem, size = 0x2000, scoped, tag = 'scratch operand']
  %s0 = inlined_call_operand.vmem [shape: bf16[14,32], index: 0, kind: input, shape index: {}]
  %s1 = inlined_call_operand.vmem [shape: bf16[32,96], index: 1, kind: input, shape index: {}]
  %s2 = inlined_call_operand.vmem [shape: f32[1,96], index: 2, kind: input, shape index: {}]
  %s3 = inlined_call_operand.vmem [shape: bf16[14,96], index: 3, kind: output, shape index: {}]
  %s4 = sld [smem:[#allocation0]]
  $region30: #{transformer_forward.29} parent=0
    _
  %s6 = ssub.s32 1, %s4
  %s7 = scalar_select 0, %s6, %s4
  // Predicated region
  $region2: #{transformer_forward.29} parent=0 // pred_check
    _
  $region3: #{transformer_forward.29} parent=0 // pred_check_branch
    %9 = sbr.rel (0) target = $region5
  $region4: #{transformer_forward.29} parent=0 // pred_region
    _
  $region5: #{transformer_forward.29} parent=0 // pred_fallthru
    _
  // Predicated region
  $region6: #{transformer_forward.29} parent=0 // pred_check
    _
  $region7: #{transformer_forward.29} parent=0 // pred_check_branch
    %11 = sbr.rel (0) target = $region9
  $region8: #{transformer_forward.29} parent=0 // pred_region
    _
  $region9: #{transformer_forward.29} parent=0 // pred_fallthru
    _
  // Predicated region
  $region10: #{transformer_forward.29} parent=0 // pred_check
    _
  $region11: #{transformer_forward.29} parent=0 // pred_check_branch
    %13 = sbr.rel (0) target = $region13
  $region12: #{transformer_forward.29} parent=0 // pred_region
    _
  $region13: #{transformer_forward.29} parent=0 // pred_fallthru
    _
  %p15 = scmp.eq.s32.totalorder 0, 0
  // Predicated region
  $region14: #{transformer_forward.29} parent=0 // pred_check
    %p16 = pneg %p15
  $region15: #{transformer_forward.29} parent=0 // pred_check_branch
    %18 = sbr.rel (%p16) target = $region17
  $region16: #{transformer_forward.29} parent=0 // pred_region
    %vm19 = vcmask 785408
    %20 = vst.msk [vmem:[#allocation2] sm:$0xff] %vm19, 0.0
    %vm21 = vcmask 783360
    %22 = vst.msk [vmem:[#allocation2 + $0x8] sm:$0x3f] %vm21, 0.0
  $region17: #{transformer_forward.29} parent=0 // pred_fallthru
    _
  %v23 = vld [vmem:[#allocation2] sm:$0xff]
  %v24 = vld [vmem:[#allocation2 + $0x8] sm:$0x3f]
  %v25 = vld [vmem:[%s0] sm:$0xf]
  %v26 = vld [vmem:[%s0 + $0x4] sm:$0x7]
  %v27 = vld [vmem:[%s1] sm:$0xf]
  %v28 = vld [vmem:[%s1 + $0x4] sm:$0xf]
  %v29 = vld [vmem:[%s1 + $0x8] sm:$0xf]
  %v30 = vld [vmem:[%s1 + $0xc] sm:$0xf]
  %v33 = vunpack.c.l.b16 %v25
  %v34 = vunpack.c.l.b16 %v26
  %v35 = vpack.c.b16 %v34, %v33
  %v40 = vunpack.c.l.b16 %v27
  %v41 = vunpack.c.l.b16 %v28
  %v42 = vunpack.c.l.b16 %v29
  %v43 = vunpack.c.l.b16 %v30
  %v44 = vpack.c.b16 %v41, %v40
  %v45 = vpack.c.b16 %v43, %v42
  %vm48 = vcmask 261120
  %v50 = vsel %vm48, %v35, 0
  %52 = vmatprep.subr.bf16.mxu0 0
  %53 = vmatpush1.bf16.msra.mxu0 0
  %54 = vmatprep.subr.bf16.mxu0 0
  %55 = vmatpush1.bf16.msra.mxu0 0
  %56 = vmatprep.subr.bf16.mxu0 0
  %57 = vmatpush1.bf16.msra.mxu0 0
  %58 = vmatprep.subr.bf16.mxu0 0
  %59 = vmatpush1.bf16.msra.mxu0 0
  %60 = vmatprep.subr.bf16.mxu0 0
  %61 = vmatpush1.bf16.msra.mxu0 0
  %62 = vmatprep.subr.bf16.mxu0 0
  %63 = vmatpush1.bf16.msra.mxu0 0
  %64 = vmatprep.subr.bf16.mxu0 0
  %65 = vmatpush1.bf16.msra.mxu0 %v45
  %66 = vmatprep.subr.bf16.mxu0 0
  %67 = vmatpush1.bf16.msra.mxu0 %v44
  %68 = vmatprep.subr.bf16.mxu0 0
  %69 = vmatpush2.bf16.msra.mxu0 0
  %70 = vmatprep.subr.bf16.mxu0 0
  %71 = vmatpush2.bf16.msra.mxu0 0
  %72 = vmatprep.subr.bf16.mxu0 0
  %73 = vmatpush2.bf16.msra.mxu0 0
  %74 = vmatprep.subr.bf16.mxu0 0
  %75 = vmatpush2.bf16.msra.mxu0 0
  %76 = vmatprep.subr.bf16.mxu0 0
  %77 = vmatpush2.bf16.msra.mxu0 0
  %78 = vmatprep.subr.bf16.mxu0 0
  %79 = vmatpush2.bf16.msra.mxu0 0
  %80 = vmatprep.subr.bf16.mxu0 0
  %81 = vmatpush2.bf16.msra.mxu0 0
  %82 = vmatprep.subr.bf16.mxu0 0
  %83 = vmatpush2.bf16.msra.mxu0 0
  %84 = vmatprep.mubr.bf16.mxu0 0
  %85 = vmatmul.mubr.bf16.gmra.mxu0 %v50
  %v86 = vpop.f32.mrf.mxu0
  %v87 = vadd.f32 0.0, %v86
  %v88 = vpop.f32.mrf.mxu0
  %v89 = vpop.f32.mrf.mxu0
  %v90 = vadd.f32 0.0, %v89
  %v91 = vpop.f32.mrf.mxu0
  %92 = vdwg.mxu0
  %v93 = vadd.f32 %v23, %v87
  %v94 = vadd.f32 %v24, %v90
  %vm95 = vcmask 785408
  %96 = vst.msk [vmem:[#allocation2] sm:$0xff] %vm95, %v93
  %vm97 = vcmask 783360
  %98 = vst.msk [vmem:[#allocation2 + $0x8] sm:$0x3f] %vm97, %v94
  // Predicated region
  $region18: #{transformer_forward.29} parent=0 // pred_check
    %p99 = pneg %p15
  $region19: #{transformer_forward.29} parent=0 // pred_check_branch
    %101 = sbr.rel (%p99) target = $region21
  $region20: #{transformer_forward.29} parent=0 // pred_region
    %v102 = vld [vmem:[#allocation2] sm:$0xff]
    %v103 = vld [vmem:[#allocation2 + $0x8] sm:$0x3f]
    %v104 = vld [vmem:[%s2] sm:$0x1]
    %v106 = vlaneseq
    %v107 = vshrl.u32 %v106, 7
    %v108 = vsub.s32 0, %v107
    %v109 = vrot.slane %v104, %v108
    %v111 = vadd.f32 %v102, %v109
    %v112 = vadd.f32 %v103, %v109
    %v113 = vpack.c.bf16 %v112, %v111
    %v115 = vunpack.c.l.b16 %v113
    %v116 = vunpack.c.h.b16 %v113
    %v117 = vpack.c.b16 %v115, %v115
    %v118 = vpack.c.b16 %v116, %v116
    %vm121 = vcmask 781312
    %122 = vst.msk [vmem:[%s3] sm:$0xf] %vm121, %v117
    %vm123 = vcmask 780288
    %124 = vst.msk [vmem:[%s3 + $0x4] sm:$0x7] %vm123, %v118
  $region21: #{transformer_forward.29} parent=0 // pred_fallthru
    _
  // Predicated region
  $region22: #{transformer_forward.29} parent=0 // pred_check
    _
  $region23: #{transformer_forward.29} parent=0 // pred_check_branch
    %126 = sbr.rel (0) target = $region25
  $region24: #{transformer_forward.29} parent=0 // pred_region
    _
  $region25: #{transformer_forward.29} parent=0 // pred_fallthru
    _
  // Predicated region
  $region26: #{transformer_forward.29} parent=0 // pred_check
    _
  $region27: #{transformer_forward.29} parent=0 // pred_check_branch
    %128 = sbr.rel (0) target = $region29
  $region28: #{transformer_forward.29} parent=0 // pred_region
    _
  $region29: #{transformer_forward.29} parent=0 // pred_fallthru
    _

// kernel: transformer_forward.30
$region0: #{transformer_forward.30}
  #allocation0 [shape = 'u32[]', space=smem, size = 0x4, offset = 0x4, fixed_abs, tag = 'smem constant byte address 0x4 - core index']
  #allocation1 [shape = 'u32[144,128]{1,0:T(1,128)}', space=vmem, size = 0x12000, scoped, tag = 'internal scratch']
  %s0 = inlined_call_operand.vmem [shape: bf16[2,4,7,8], index: 0, kind: input, shape index: {}]
  %s1 = inlined_call_operand.vmem [shape: bf16[2,4,7,8], index: 1, kind: input, shape index: {}]
  %s2 = inlined_call_operand.vmem [shape: bf16[2,4,7,8], index: 2, kind: input, shape index: {}]
  %s3 = inlined_call_operand.vmem [shape: f32[2,1,7], index: 3, kind: input, shape index: {}]
  %s4 = inlined_call_operand.vmem [shape: bf16[2,4,7,8], index: 4, kind: output, shape index: {}]
  %s5 = sld [smem:[#allocation0]]
  $region49: #{transformer_forward.30} parent=0
    _
  %s7 = ssub.s32 1, %s5
  %s8 = scalar_select 0, %s7, %s5
  loop: start=0, step=1, limit=10
  $region2: #{transformer_forward.30} parent=0 // loop_pre_header
    _
  $region3: #{transformer_forward.30} parent=0 // loop_header
    %s10 = sphi 0, %s14
    %p11 = scmp.ge.s32.totalorder %s10, 10
    %s17 = sphi 0, %s36
    %s18 = sphi 0, %s32
    %s19 = sphi 0, %s28
    %s20 = sphi 0, %s17
    %s21 = sphi 0, %s18
    %s22 = sphi 0, %s19
    %s23 = sphi 0, %s20
    %s24 = sphi 0, %s21
    %s25 = sphi 0, %s22
    %s43 = sphi 0, %s45
    %s46 = sphi 0, %s43
    %s47 = sphi 0, %s46
    %s63 = sphi 0, %s47
    %s71 = sphi 0, %s73
    %s74 = sphi 0, %s71
    %s75 = sphi 0, %s74
    %s91 = sphi 0, %s75
    %s99 = sphi 0, %s101
    %s102 = sphi 0, %s99
    %s103 = sphi 0, %s102
    %s119 = sphi 0, %s103
    %s125 = sphi 0, %s127
    %s128 = sphi 0, %s125
    %s129 = sphi 0, %s128
    %s145 = sphi 0, %s129
    %s155 = sphi 0, %s157
    %s158 = sphi 0, %s155
    %s159 = sphi 0, %s158
    %s175 = sphi 0, %s159
  $region4: #{transformer_forward.30} parent=0 // loop_header_branch
    %13 = sbr.rel (%p11) target = $region8
  $region5: #{transformer_forward.30} parent=0 // loop_body
    %s15 = ssub.s32 %s10, 1
    %s16 = ssub.s32 %s10, 2
    %s26 = sadd.s32 1, %s19
    %p27 = scmp.ge.s32.totalorder %s26, 1
    %s28 = scalar_select %p27, 0, %s26
    %s29 = sadd.s32 1, %s18
    %s30 = scalar_select %p27, %s29, %s18
    %p31 = scmp.ge.s32.totalorder %s30, 4
    %s32 = scalar_select %p31, 0, %s30
    %s33 = sadd.s32 1, %s17
    %s34 = scalar_select %p31, %s33, %s17
    %p35 = scmp.ge.s32.totalorder %s34, 2
    %s36 = scalar_select %p35, 0, %s34
    %s37 = ssub.s32 %s17, %s36
    %s38 = ssub.s32 %s18, %s32
    %s39 = sor.u32 %s37, %s38
    %s40 = ssub.s32 %s19, %s28
    %s41 = sor.u32 %s39, %s40
    %p42 = scmp.eq.s32.totalorder %s41, 0
    %s44 = sadd.s32 %s43, 1
    %s45 = scalar_select %p42, %s43, %s44
    %p48 = pneg %p42
    %p49 = scmp.eq.s32.totalorder %s10, 7
    %p50 = por %p48, %p49
    %p51 = scmp.ne.s32.totalorder %s43, %s46
    %p52 = scmp.eq.s32.totalorder %s10, 0
    %p53 = por %p51, %p52
    %p54 = scmp.ne.s32.totalorder %s43, %s46
    %p55 = scmp.eq.s32.totalorder %s15, 7
    %p56 = por %p54, %p55
    %p57 = scmp.ne.s32.totalorder %s46, %s47
    %p58 = scmp.eq.s32.totalorder %s15, 0
    %p59 = por %p57, %p58
    %p60 = scmp.ne.s32.totalorder %s46, %s47
    %p61 = scmp.eq.s32.totalorder %s16, 7
    %p62 = por %p60, %p61
    %p64 = scmp.ne.s32.totalorder %s47, %s63
    %p65 = scmp.eq.s32.totalorder %s16, 0
    %p66 = por %p64, %p65
    %s67 = ssub.s32 %s17, %s36
    %s68 = ssub.s32 %s18, %s32
    %s69 = sor.u32 %s67, %s68
    %p70 = scmp.eq.s32.totalorder %s69, 0
    %s72 = sadd.s32 %s71, 1
    %s73 = scalar_select %p70, %s71, %s72
    %p76 = pneg %p70
    %p77 = scmp.eq.s32.totalorder %s10, 7
    %p78 = por %p76, %p77
    %p79 = scmp.ne.s32.totalorder %s71, %s74
    %p80 = scmp.eq.s32.totalorder %s10, 0
    %p81 = por %p79, %p80
    %p82 = scmp.ne.s32.totalorder %s71, %s74
    %p83 = scmp.eq.s32.totalorder %s15, 7
    %p84 = por %p82, %p83
    %p85 = scmp.ne.s32.totalorder %s74, %s75
    %p86 = scmp.eq.s32.totalorder %s15, 0
    %p87 = por %p85, %p86
    %p88 = scmp.ne.s32.totalorder %s74, %s75
    %p89 = scmp.eq.s32.totalorder %s16, 7
    %p90 = por %p88, %p89
    %p92 = scmp.ne.s32.totalorder %s75, %s91
    %p93 = scmp.eq.s32.totalorder %s16, 0
    %p94 = por %p92, %p93
    %s95 = ssub.s32 %s17, %s36
    %s96 = ssub.s32 %s18, %s32
    %s97 = sor.u32 %s95, %s96
    %p98 = scmp.eq.s32.totalorder %s97, 0
    %s100 = sadd.s32 %s99, 1
    %s101 = scalar_select %p98, %s99, %s100
    %p104 = pneg %p98
    %p105 = scmp.eq.s32.totalorder %s10, 7
    %p106 = por %p104, %p105
    %p107 = scmp.ne.s32.totalorder %s99, %s102
    %p108 = scmp.eq.s32.totalorder %s10, 0
    %p109 = por %p107, %p108
    %p110 = scmp.ne.s32.totalorder %s99, %s102
    %p111 = scmp.eq.s32.totalorder %s15, 7
    %p112 = por %p110, %p111
    %p113 = scmp.ne.s32.totalorder %s102, %s103
    %p114 = scmp.eq.s32.totalorder %s15, 0
    %p115 = por %p113, %p114
    %p116 = scmp.ne.s32.totalorder %s102, %s103
    %p117 = scmp.eq.s32.totalorder %s16, 7
    %p118 = por %p116, %p117
    %p120 = scmp.ne.s32.totalorder %s103, %s119
    %p121 = scmp.eq.s32.totalorder %s16, 0
    %p122 = por %p120, %p121
    %s123 = ssub.s32 %s17, %s36
    %p124 = scmp.eq.s32.totalorder %s123, 0
    %s126 = sadd.s32 %s125, 1
    %s127 = scalar_select %p124, %s125, %s126
    %p130 = pneg %p124
    %p131 = scmp.eq.s32.totalorder %s10, 7
    %p132 = por %p130, %p131
    %p133 = scmp.ne.s32.totalorder %s125, %s128
    %p134 = scmp.eq.s32.totalorder %s10, 0
    %p135 = por %p133, %p134
    %p136 = scmp.ne.s32.totalorder %s125, %s128
    %p137 = scmp.eq.s32.totalorder %s15, 7
    %p138 = por %p136, %p137
    %p139 = scmp.ne.s32.totalorder %s128, %s129
    %p140 = scmp.eq.s32.totalorder %s15, 0
    %p141 = por %p139, %p140
    %p142 = scmp.ne.s32.totalorder %s128, %s129
    %p143 = scmp.eq.s32.totalorder %s16, 7
    %p144 = por %p142, %p143
    %p146 = scmp.ne.s32.totalorder %s129, %s145
    %p147 = scmp.eq.s32.totalorder %s16, 0
    %p148 = por %p146, %p147
    %s149 = ssub.s32 %s17, %s36
    %s150 = ssub.s32 %s18, %s32
    %s151 = sor.u32 %s149, %s150
    %s152 = ssub.s32 %s19, %s28
    %s153 = sor.u32 %s151, %s152
    %p154 = scmp.eq.s32.totalorder %s153, 0
    %s156 = sadd.s32 %s155, 1
    %s157 = scalar_select %p154, %s155, %s156
    %p160 = pneg %p154
    %p161 = scmp.eq.s32.totalorder %s10, 7
    %p162 = por %p160, %p161
    %p163 = scmp.ne.s32.totalorder %s155, %s158
    %p164 = scmp.eq.s32.totalorder %s10, 0
    %p165 = por %p163, %p164
    %p166 = scmp.ne.s32.totalorder %s155, %s158
    %p167 = scmp.eq.s32.totalorder %s15, 7
    %p168 = por %p166, %p167
    %p169 = scmp.ne.s32.totalorder %s158, %s159
    %p170 = scmp.eq.s32.totalorder %s15, 0
    %p171 = por %p169, %p170
    %p172 = scmp.ne.s32.totalorder %s158, %s159
    %p173 = scmp.eq.s32.totalorder %s16, 7
    %p174 = por %p172, %p173
    %p176 = scmp.ne.s32.totalorder %s159, %s175
    %p177 = scmp.eq.s32.totalorder %s16, 0
    %p178 = por %p176, %p177
    %p179 = scmp.le.s32.totalorder 1, %s10
    %p180 = scmp.lt.s32.totalorder %s10, 9
    %p181 = pnand %p179, %p180
    %p182 = pneg %p181
    // Predicated region
    $region9: #{transformer_forward.30} parent=5 // pred_check
      _
    $region10: #{transformer_forward.30} parent=5 // pred_check_branch
      %184 = sbr.rel (%p181) target = $region12
    $region11: #{transformer_forward.30} parent=5 // pred_region
      %s185 = ssub.s32 %s10, 1
    $region12: #{transformer_forward.30} parent=5 // pred_fallthru
      _
    %p186 = scmp.lt.s32.totalorder %s10, 8
    // Predicated region
    $region13: #{transformer_forward.30} parent=5 // pred_check
      %p187 = pneg %p186
    $region14: #{transformer_forward.30} parent=5 // pred_check_branch
      %189 = sbr.rel (%p187) target = $region16
    $region15: #{transformer_forward.30} parent=5 // pred_region
      // Predicated region
      $region17: #{transformer_forward.30} parent=15 // pred_check
        %p190 = pneg %p53
      $region18: #{transformer_forward.30} parent=15 // pred_check_branch
        %192 = sbr.rel (%p190) target = $region20
      $region19: #{transformer_forward.30} parent=15 // pred_region
        %p193 = scmp.lt.s32.totalorder %s17, 1
        %s194 = scalar_select %p193, %s17, 1
        %p195 = scmp.lt.s32.totalorder %s18, 3
        %s196 = scalar_select %p195, %s18, 3
        %p197 = scmp.lt.s32.totalorder %s19, 0
        %s198 = scalar_select %p197, %s19, 0
        %s199 = sadd.s32 %s198, %s196
        %s200 = smul.addr %s194, 4
        %s201 = sadd.s32 %s199, %s200
        %s202 = smul.addr %s201, 4
        %s203 = scalar_lea.vmem %s0, %s202
      $region20: #{transformer_forward.30} parent=15 // pred_fallthru
        _
      // Predicated region
      $region21: #{transformer_forward.30} parent=15 // pred_check
        %p204 = pneg %p81
      $region22: #{transformer_forward.30} parent=15 // pred_check_branch
        %206 = sbr.rel (%p204) target = $region24
      $region23: #{transformer_forward.30} parent=15 // pred_region
        %p207 = scmp.lt.s32.totalorder %s17, 1
        %s208 = scalar_select %p207, %s17, 1
        %p209 = scmp.lt.s32.totalorder %s18, 3
        %s210 = scalar_select %p209, %s18, 3
        %s211 = smul.addr %s208, 4
        %s212 = sadd.s32 %s210, %s211
        %s213 = smul.addr %s212, 4
        %s214 = scalar_lea.vmem %s1, %s213
      $region24: #{transformer_forward.30} parent=15 // pred_fallthru
        _
      // Predicated region
      $region25: #{transformer_forward.30} parent=15 // pred_check
        %p215 = pneg %p109
      $region26: #{transformer_forward.30} parent=15 // pred_check_branch
        %217 = sbr.rel (%p215) target = $region28
      $region27: #{transformer_forward.30} parent=15 // pred_region
        %p218 = scmp.lt.s32.totalorder %s17, 1
        %s219 = scalar_select %p218, %s17, 1
        %p220 = scmp.lt.s32.totalorder %s18, 3
        %s221 = scalar_select %p220, %s18, 3
        %s222 = smul.addr %s219, 4
        %s223 = sadd.s32 %s221, %s222
        %s224 = smul.addr %s223, 4
        %s225 = scalar_lea.vmem %s2, %s224
      $region28: #{transformer_forward.30} parent=15 // pred_fallthru
        _
      // Predicated region
      $region29: #{transformer_forward.30} parent=15 // pred_check
        %p226 = pneg %p135
      $region30: #{transformer_forward.30} parent=15 // pred_check_branch
        %228 = sbr.rel (%p226) target = $region32
      $region31: #{transformer_forward.30} parent=15 // pred_region
        %p229 = scmp.lt.s32.totalorder %s17, 1
        %s230 = scalar_select %p229, %s17, 1
        %s231 = scalar_lea.vmem %s3, %s230
      $region32: #{transformer_forward.30} parent=15 // pred_fallthru
        _
    $region16: #{transformer_forward.30} parent=5 // pred_fallthru
      _
    %p232 = scmp.le.s32.totalorder 1, %s10
    %p233 = scmp.lt.s32.totalorder %s10, 9
    %p234 = pnand %p232, %p233
    %p235 = pneg %p234
    // Predicated region
    $region33: #{transformer_forward.30} parent=5 // pred_check
      _
    $region34: #{transformer_forward.30} parent=5 // pred_check_branch
      %237 = sbr.rel (%p234) target = $region36
    $region35: #{transformer_forward.30} parent=5 // pred_region
      %s238 = ssub.s32 %s10, 1
      %p239 = scmp.lt.s32.totalorder %s20, 1
      %s240 = scalar_select %p239, %s20, 1
      %p241 = scmp.lt.s32.totalorder %s21, 3
      %s242 = scalar_select %p241, %s21, 3
      %p243 = scmp.lt.s32.totalorder %s22, 0
      %s244 = scalar_select %p243, %s22, 0
      %s245 = sadd.s32 %s244, %s242
      %s246 = smul.addr %s240, 4
      %s247 = sadd.s32 %s245, %s246
      %s248 = smul.addr %s247, 4
      %s249 = scalar_lea.vmem %s0, %s248
      %p250 = pneg %p59
      %p251 = pneg %p56
      %p252 = scmp.lt.s32.totalorder %s20, 1
      %s253 = scalar_select %p252, %s20, 1
      %p254 = scmp.lt.s32.totalorder %s21, 3
      %s255 = scalar_select %p254, %s21, 3
      %s256 = smul.addr %s253, 4
      %s257 = sadd.s32 %s255, %s256
      %s258 = smul.addr %s257, 4
      %s259 = scalar_lea.vmem %s1, %s258
      %p260 = pneg %p87
      %p261 = pneg %p84
      %p262 = scmp.lt.s32.totalorder %s20, 1
      %s263 = scalar_select %p262, %s20, 1
      %p264 = scmp.lt.s32.totalorder %s21, 3
      %s265 = scalar_select %p264, %s21, 3
      %s266 = smul.addr %s263, 4
      %s267 = sadd.s32 %s265, %s266
      %s268 = smul.addr %s267, 4
      %s269 = scalar_lea.vmem %s2, %s268
      %p270 = pneg %p115
      %p271 = pneg %p112
      %p272 = scmp.lt.s32.totalorder %s20, 1
      %s273 = scalar_select %p272, %s20, 1
      %s274 = scalar_lea.vmem %s3, %s273
      %p275 = pneg %p141
      %p276 = pneg %p138
      %p277 = pneg %p171
      %p278 = pneg %p168
      %p279 = scmp.lt.s32.totalorder %s20, 1
      %s280 = scalar_select %p279, %s20, 1
      %p281 = scmp.lt.s32.totalorder %s21, 3
      %s282 = scalar_select %p281, %s21, 3
      %p283 = scmp.lt.s32.totalorder %s22, 0
      %s284 = scalar_select %p283, %s22, 0
      %s285 = sadd.s32 %s284, %s282
      %s286 = smul.addr %s280, 4
      %s287 = sadd.s32 %s285, %s286
      %s288 = smul.addr %s287, 4
      %s289 = scalar_lea.vmem %s4, %s288
      %p290 = scmp.lt.s32.totalorder %s20, 1
      %s291 = scalar_select %p290, %s20, 1
      %p292 = scmp.lt.s32.totalorder %s21, 3
      %s293 = scalar_select %p292, %s21, 3
      %p294 = scmp.lt.s32.totalorder %s22, 0
      %s295 = scalar_select %p294, %s22, 0
      %s296 = sadd.s32 %s295, %s293
      %s297 = smul.addr %s291, 4
      %s298 = sadd.s32 %s296, %s297
      %s299 = smul.addr %s298, 4
      %s300 = scalar_lea.vmem %s0, %s299
      %p301 = scmp.lt.s32.totalorder %s20, 1
      %s302 = scalar_select %p301, %s20, 1
      %p303 = scmp.lt.s32.totalorder %s21, 3
      %s304 = scalar_select %p303, %s21, 3
      %s305 = smul.addr %s302, 4
      %s306 = sadd.s32 %s304, %s305
      %s307 = smul.addr %s306, 4
      %s308 = scalar_lea.vmem %s1, %s307
      %p309 = scmp.lt.s32.totalorder %s20, 1
      %s310 = scalar_select %p309, %s20, 1
      %p311 = scmp.lt.s32.totalorder %s21, 3
      %s312 = scalar_select %p311, %s21, 3
      %s313 = smul.addr %s310, 4
      %s314 = sadd.s32 %s312, %s313
      %s315 = smul.addr %s314, 4
      %s316 = scalar_lea.vmem %s2, %s315
      %p317 = scmp.lt.s32.totalorder %s20, 1
      %s318 = scalar_select %p317, %s20, 1
      %s319 = scalar_lea.vmem %s3, %s318
      %p320 = scmp.lt.s32.totalorder %s20, 1
      %s321 = scalar_select %p320, %s20, 1
      %p322 = scmp.lt.s32.totalorder %s21, 3
      %s323 = scalar_select %p322, %s21, 3
      %p324 = scmp.lt.s32.totalorder %s22, 0
      %s325 = scalar_select %p324, %s22, 0
      %s326 = sadd.s32 %s325, %s323
      %s327 = smul.addr %s321, 4
      %s328 = sadd.s32 %s326, %s327
      %s329 = smul.addr %s328, 4
      %s330 = scalar_lea.vmem %s4, %s329
      %v333 = vld [vmem:[%s300] sm:$0xf]
      %v334 = vmul.bf16 %v333, 1052065461
      %v335 = vld [vmem:[%s308] sm:$0xf]
      %v336 = vld [vmem:[%s316] sm:$0xf]
      %v337 = vld [vmem:[%s319] sm:$0x1]
      %v339 = vlaneseq
      %v340 = vshrl.u32 %v339, 7
      %v341 = vsub.s32 0, %v340
      %v342 = vrot.slane %v337, %v341
      %vm344 = vcmask 64512
      %v346 = vsel %vm344, %v334, 0
      %v349 = vsel %vm344, %v335, 0
      %351 = vmatprep.subr.bf16.mxu0 0
      %352 = vmatpush1.bf16.xpose.msra.mxu0 0
      %353 = vmatprep.subr.bf16.mxu0 0
      %354 = vmatpush1.bf16.xpose.msra.mxu0 0
      %355 = vmatprep.subr.bf16.mxu0 0
      %356 = vmatpush1.bf16.xpose.msra.mxu0 0
      %357 = vmatprep.subr.bf16.mxu0 0
      %358 = vmatpush1.bf16.xpose.msra.mxu0 0
      %359 = vmatprep.subr.bf16.mxu0 0
      %360 = vmatpush1.bf16.xpose.msra.mxu0 0
      %361 = vmatprep.subr.bf16.mxu0 0
      %362 = vmatpush1.bf16.xpose.msra.mxu0 0
      %363 = vmatprep.subr.bf16.mxu0 0
      %364 = vmatpush1.bf16.xpose.msra.mxu0 0
      %365 = vmatprep.subr.bf16.mxu0 0
      %366 = vmatpush1.bf16.xpose.msra.mxu0 %v349
      %367 = vmatprep.subr.bf16.mxu0 0
      %368 = vmatpush2.bf16.xpose.msra.mxu0 0
      %369 = vmatprep.subr.bf16.mxu0 0
      %370 = vmatpush2.bf16.xpose.msra.mxu0 0
      %371 = vmatprep.subr.bf16.mxu0 0
      %372 = vmatpush2.bf16.xpose.msra.mxu0 0
      %373 = vmatprep.subr.bf16.mxu0 0
      %374 = vmatpush2.bf16.xpose.msra.mxu0 0
      %375 = vmatprep.subr.bf16.mxu0 0
      %376 = vmatpush2.bf16.xpose.msra.mxu0 0
      %377 = vmatprep.subr.bf16.mxu0 0
      %378 = vmatpush2.bf16.xpose.msra.mxu0 0
      %379 = vmatprep.subr.bf16.mxu0 0
      %380 = vmatpush2.bf16.xpose.msra.mxu0 0
      %381 = vmatprep.subr.bf16.mxu0 0
      %382 = vmatpush2.bf16.xpose.msra.mxu0 0
      %383 = vmatprep.mubr.bf16.mxu0 0
      %384 = vmatmul.mubr.bf16.gmra.mxu0 %v346
      %v385 = vpop.f32.mrf.mxu0
      %v386 = vadd.f32 %v342, %v385
      %v387 = vpop.f32.mrf.mxu0
      %v388 = vpop.f32.mrf.mxu0
      %v389 = vpop.f32.mrf.mxu0
      %390 = vdwg.mxu0
      %vm391 = vcmask 55296
      %v392 = vsel %vm391, %v386, -inf
      %393 = vmax.xlane.f32.xlu0 %v392
      %v394 = vpop.xlane.xlu0 %393
      %v395 = vsub.f32 %v386, %v394
      %v396 = vmul.f32 %v395, 1.442695
      %v397 = vpow.pop %v396
      %v398 = vsel %vm391, %v397, 0.0
      %399 = vadd.xlane.f32.xlu0 %v398
      %v400 = vpop.xlane.xlu0 %399
      %v401 = vrcp.pop %v400
      %v402 = vmul.f32 %v397, %v401
      %v403 = vpack.c.bf16 %v402, %v402
      %vm404 = vcmask 56320
      %v406 = vsel %vm404, %v403, 0
      %vm408 = vcmask 1042432
      %vm409 = vcmask 1043456
      %v410 = vsel %vm408, 4294967295, 65535
      %v411 = vsel %vm409, %v410, 0
      %v413 = vand.u32 %v336, %v411
      %415 = vmatprep.subr.bf16.mxu0 0
      %416 = vmatpush1.bf16.msra.mxu0 0
      %417 = vmatprep.subr.bf16.mxu0 0
      %418 = vmatpush1.bf16.msra.mxu0 0
      %419 = vmatprep.subr.bf16.mxu0 0
      %420 = vmatpush1.bf16.msra.mxu0 0
      %421 = vmatprep.subr.bf16.mxu0 0
      %422 = vmatpush1.bf16.msra.mxu0 0
      %423 = vmatprep.subr.bf16.mxu0 0
      %424 = vmatpush1.bf16.msra.mxu0 0
      %425 = vmatprep.subr.bf16.mxu0 0
      %426 = vmatpush1.bf16.msra.mxu0 0
      %427 = vmatprep.subr.bf16.mxu0 0
      %428 = vmatpush1.bf16.msra.mxu0 0
      %429 = vmatprep.subr.bf16.mxu0 0
      %430 = vmatpush1.bf16.msra.mxu0 %v413
      %431 = vmatprep.subr.bf16.mxu0 0
      %432 = vmatpush2.bf16.msra.mxu0 0
      %433 = vmatprep.subr.bf16.mxu0 0
      %434 = vmatpush2.bf16.msra.mxu0 0
      %435 = vmatprep.subr.bf16.mxu0 0
      %436 = vmatpush2.bf16.msra.mxu0 0
      %437 = vmatprep.subr.bf16.mxu0 0
      %438 = vmatpush2.bf16.msra.mxu0 0
      %439 = vmatprep.subr.bf16.mxu0 0
      %440 = vmatpush2.bf16.msra.mxu0 0
      %441 = vmatprep.subr.bf16.mxu0 0
      %442 = vmatpush2.bf16.msra.mxu0 0
      %443 = vmatprep.subr.bf16.mxu0 0
      %444 = vmatpush2.bf16.msra.mxu0 0
      %445 = vmatprep.subr.bf16.mxu0 0
      %446 = vmatpush2.bf16.msra.mxu0 0
      %447 = vmatprep.mubr.bf16.mxu0 0
      %448 = vmatmul.mubr.bf16.gmra.mxu0 %v406
      %v449 = vpop.f32.mrf.mxu0
      %v450 = vadd.f32 0.0, %v449
      %v451 = vpop.f32.mrf.mxu0
      %v452 = vpop.f32.mrf.mxu0
      %v453 = vpop.f32.mrf.mxu0
      %454 = vdwg.mxu0
      %v455 = vpack.c.bf16 %v450, %v450
      %vm456 = vcmask 60416
      %vm457 = vsmask.f32 3328
      %vm458 = vmand %vm456, %vm457
      %v459 = vld [vmem:[%s330] sm:$0xf]
      %v460 = vsel %vm458, %v455, %v459
      %461 = vst [vmem:[%s330] sm:$0xf] %v460
      %p462 = scmp.lt.s32.totalorder %s20, 1
      %s463 = scalar_select %p462, %s20, 1
      %p464 = scmp.lt.s32.totalorder %s21, 3
      %s465 = scalar_select %p464, %s21, 3
      %p466 = scmp.lt.s32.totalorder %s22, 0
      %s467 = scalar_select %p466, %s22, 0
      %s468 = sadd.s32 %s467, %s465
      %s469 = smul.addr %s463, 4
      %s470 = sadd.s32 %s468, %s469
      %s471 = smul.addr %s470, 4
      %s472 = scalar_lea.vmem %s4, %s471
      // Predicated region
      $region37: #{transformer_forward.30} parent=35 // pred_check
        %p473 = pneg %p168
      $region38: #{transformer_forward.30} parent=35 // pred_check_branch
        %475 = sbr.rel (%p473) target = $region40
      $region39: #{transformer_forward.30} parent=35 // pred_region
        _
      $region40: #{transformer_forward.30} parent=35 // pred_fallthru
        _
    $region36: #{transformer_forward.30} parent=5 // pred_fallthru
      _
    %p476 = scmp.le.s32.totalorder 2, %s10
    // Predicated region
    $region41: #{transformer_forward.30} parent=5 // pred_check
      %p477 = pneg %p476
    $region42: #{transformer_forward.30} parent=5 // pred_check_branch
      %479 = sbr.rel (%p477) target = $region44
    $region43: #{transformer_forward.30} parent=5 // pred_region
      %s480 = ssub.s32 %s10, 2
      // Predicated region
      $region45: #{transformer_forward.30} parent=43 // pred_check
        %p481 = pneg %p174
      $region46: #{transformer_forward.30} parent=43 // pred_check_branch
        %483 = sbr.rel (%p481) target = $region48
      $region47: #{transformer_forward.30} parent=43 // pred_region
        %p484 = scmp.lt.s32.totalorder %s23, 1
        %s485 = scalar_select %p484, %s23, 1
        %p486 = scmp.lt.s32.totalorder %s24, 3
        %s487 = scalar_select %p486, %s24, 3
        %p488 = scmp.lt.s32.totalorder %s25, 0
        %s489 = scalar_select %p488, %s25, 0
        %s490 = sadd.s32 %s489, %s487
        %s491 = smul.addr %s485, 4
        %s492 = sadd.s32 %s490, %s491
        %s493 = smul.addr %s492, 4
        %s494 = scalar_lea.vmem %s4, %s493
      $region48: #{transformer_forward.30} parent=43 // pred_fallthru
        _
    $region44: #{transformer_forward.30} parent=5 // pred_fallthru
      _
  $region6: #{transformer_forward.30} parent=0 // loop_footer
    %s14 = sadd.s32 1, %s10
  $region7: #{transformer_forward.30} parent=0 // loop_footer_branch
    %9 = sbr.rel target = $region3
  $region8: #{transformer_forward.30} parent=0 // loop_exit
    _

// kernel: transformer_forward.32
$region0: #{transformer_forward.32}
  #allocation0 [shape = 'u32[]', space=smem, size = 0x4, offset = 0x4, fixed_abs, tag = 'smem constant byte address 0x4 - core index']
  #allocation1 [shape = 'u32[144,128]{1,0:T(1,128)}', space=vmem, size = 0x12000, scoped, tag = 'internal scratch']
  #allocation2 [shape = 'f32[14,64]{1,0:T(8,128)}', space=vmem, size = 0x2000, scoped, tag = 'scratch operand']
  %s0 = inlined_call_operand.vmem [shape: bf16[14,32], index: 0, kind: input, shape index: {}]
  %s1 = inlined_call_operand.vmem [shape: bf16[32,64], index: 1, kind: input, shape index: {}]
  %s2 = inlined_call_operand.vmem [shape: f32[1,64], index: 2, kind: input, shape index: {}]
  %s3 = inlined_call_operand.vmem [shape: bf16[14,64], index: 3, kind: output, shape index: {}]
  %s4 = sld [smem:[#allocation0]]
  $region30: #{transformer_forward.32} parent=0
    _
  %s6 = ssub.s32 1, %s4
  %s7 = scalar_select 0, %s6, %s4
  // Predicated region
  $region2: #{transformer_forward.32} parent=0 // pred_check
    _
  $region3: #{transformer_forward.32} parent=0 // pred_check_branch
    %9 = sbr.rel (0) target = $region5
  $region4: #{transformer_forward.32} parent=0 // pred_region
    _
  $region5: #{transformer_forward.32} parent=0 // pred_fallthru
    _
  // Predicated region
  $region6: #{transformer_forward.32} parent=0 // pred_check
    _
  $region7: #{transformer_forward.32} parent=0 // pred_check_branch
    %11 = sbr.rel (0) target = $region9
  $region8: #{transformer_forward.32} parent=0 // pred_region
    _
  $region9: #{transformer_forward.32} parent=0 // pred_fallthru
    _
  // Predicated region
  $region10: #{transformer_forward.32} parent=0 // pred_check
    _
  $region11: #{transformer_forward.32} parent=0 // pred_check_branch
    %13 = sbr.rel (0) target = $region13
  $region12: #{transformer_forward.32} parent=0 // pred_region
    _
  $region13: #{transformer_forward.32} parent=0 // pred_fallthru
    _
  %p15 = scmp.eq.s32.totalorder 0, 0
  // Predicated region
  $region14: #{transformer_forward.32} parent=0 // pred_check
    %p16 = pneg %p15
  $region15: #{transformer_forward.32} parent=0 // pred_check_branch
    %18 = sbr.rel (%p16) target = $region17
  $region16: #{transformer_forward.32} parent=0 // pred_region
    %vm19 = vcmask 523264
    %20 = vst.msk [vmem:[#allocation2] sm:$0xff] %vm19, 0.0
    %vm21 = vcmask 521216
    %22 = vst.msk [vmem:[#allocation2 + $0x8] sm:$0x3f] %vm21, 0.0
  $region17: #{transformer_forward.32} parent=0 // pred_fallthru
    _
  %v23 = vld [vmem:[#allocation2] sm:$0xff]
  %v24 = vld [vmem:[#allocation2 + $0x8] sm:$0x3f]
  %v25 = vld [vmem:[%s0] sm:$0xf]
  %v26 = vld [vmem:[%s0 + $0x4] sm:$0x7]
  %v27 = vld [vmem:[%s1] sm:$0xf]
  %v28 = vld [vmem:[%s1 + $0x4] sm:$0xf]
  %v29 = vld [vmem:[%s1 + $0x8] sm:$0xf]
  %v30 = vld [vmem:[%s1 + $0xc] sm:$0xf]
  %v33 = vunpack.c.l.b16 %v25
  %v34 = vunpack.c.l.b16 %v26
  %v35 = vpack.c.b16 %v34, %v33
  %v40 = vunpack.c.l.b16 %v27
  %v41 = vunpack.c.l.b16 %v28
  %v42 = vunpack.c.l.b16 %v29
  %v43 = vunpack.c.l.b16 %v30
  %v44 = vpack.c.b16 %v41, %v40
  %v45 = vpack.c.b16 %v43, %v42
  %vm48 = vcmask 261120
  %v50 = vsel %vm48, %v35, 0
  %52 = vmatprep.subr.bf16.mxu0 0
  %53 = vmatpush1.bf16.msra.mxu0 0
  %54 = vmatprep.subr.bf16.mxu0 0
  %55 = vmatpush1.bf16.msra.mxu0 0
  %56 = vmatprep.subr.bf16.mxu0 0
  %57 = vmatpush1.bf16.msra.mxu0 0
  %58 = vmatprep.subr.bf16.mxu0 0
  %59 = vmatpush1.bf16.msra.mxu0 0
  %60 = vmatprep.subr.bf16.mxu0 0
  %61 = vmatpush1.bf16.msra.mxu0 0
  %62 = vmatprep.subr.bf16.mxu0 0
  %63 = vmatpush1.bf16.msra.mxu0 0
  %64 = vmatprep.subr.bf16.mxu0 0
  %65 = vmatpush1.bf16.msra.mxu0 %v45
  %66 = vmatprep.subr.bf16.mxu0 0
  %67 = vmatpush1.bf16.msra.mxu0 %v44
  %68 = vmatprep.subr.bf16.mxu0 0
  %69 = vmatpush2.bf16.msra.mxu0 0
  %70 = vmatprep.subr.bf16.mxu0 0
  %71 = vmatpush2.bf16.msra.mxu0 0
  %72 = vmatprep.subr.bf16.mxu0 0
  %73 = vmatpush2.bf16.msra.mxu0 0
  %74 = vmatprep.subr.bf16.mxu0 0
  %75 = vmatpush2.bf16.msra.mxu0 0
  %76 = vmatprep.subr.bf16.mxu0 0
  %77 = vmatpush2.bf16.msra.mxu0 0
  %78 = vmatprep.subr.bf16.mxu0 0
  %79 = vmatpush2.bf16.msra.mxu0 0
  %80 = vmatprep.subr.bf16.mxu0 0
  %81 = vmatpush2.bf16.msra.mxu0 0
  %82 = vmatprep.subr.bf16.mxu0 0
  %83 = vmatpush2.bf16.msra.mxu0 0
  %84 = vmatprep.mubr.bf16.mxu0 0
  %85 = vmatmul.mubr.bf16.gmra.mxu0 %v50
  %v86 = vpop.f32.mrf.mxu0
  %v87 = vadd.f32 0.0, %v86
  %v88 = vpop.f32.mrf.mxu0
  %v89 = vpop.f32.mrf.mxu0
  %v90 = vadd.f32 0.0, %v89
  %v91 = vpop.f32.mrf.mxu0
  %92 = vdwg.mxu0
  %v93 = vadd.f32 %v23, %v87
  %v94 = vadd.f32 %v24, %v90
  %vm95 = vcmask 523264
  %96 = vst.msk [vmem:[#allocation2] sm:$0xff] %vm95, %v93
  %vm97 = vcmask 521216
  %98 = vst.msk [vmem:[#allocation2 + $0x8] sm:$0x3f] %vm97, %v94
  // Predicated region
  $region18: #{transformer_forward.32} parent=0 // pred_check
    %p99 = pneg %p15
  $region19: #{transformer_forward.32} parent=0 // pred_check_branch
    %101 = sbr.rel (%p99) target = $region21
  $region20: #{transformer_forward.32} parent=0 // pred_region
    %v102 = vld [vmem:[#allocation2] sm:$0xff]
    %v103 = vld [vmem:[#allocation2 + $0x8] sm:$0x3f]
    %v104 = vld [vmem:[%s2] sm:$0x1]
    %v106 = vlaneseq
    %v107 = vshrl.u32 %v106, 7
    %v108 = vsub.s32 0, %v107
    %v109 = vrot.slane %v104, %v108
    %v111 = vadd.f32 %v102, %v109
    %v112 = vadd.f32 %v103, %v109
    %v113 = vmax.f32 %v111, 0.0
    %v114 = vmax.f32 %v112, 0.0
    %v115 = vpack.c.bf16 %v114, %v113
    %v117 = vunpack.c.l.b16 %v115
    %v118 = vunpack.c.h.b16 %v115
    %v119 = vpack.c.b16 %v117, %v117
    %v120 = vpack.c.b16 %v118, %v118
    %vm123 = vcmask 519168
    %124 = vst.msk [vmem:[%s3] sm:$0xf] %vm123, %v119
    %vm125 = vcmask 518144
    %126 = vst.msk [vmem:[%s3 + $0x4] sm:$0x7] %vm125, %v120
  $region21: #{transformer_forward.32} parent=0 // pred_fallthru
    _
  // Predicated region
  $region22: #{transformer_forward.32} parent=0 // pred_check
    _
  $region23: #{transformer_forward.32} parent=0 // pred_check_branch
    %128 = sbr.rel (0) target = $region25
  $region24: #{transformer_forward.32} parent=0 // pred_region
    _
  $region25: #{transformer_forward.32} parent=0 // pred_fallthru
    _
  // Predicated region
  $region26: #{transformer_forward.32} parent=0 // pred_check
    _
  $region27: #{transformer_forward.32} parent=0 // pred_check_branch
    %130 = sbr.rel (0) target = $region29
  $region28: #{transformer_forward.32} parent=0 // pred_region
    _
  $region29: #{transformer_forward.32} parent=0 // pred_fallthru
    _

// kernel: transformer_forward.31
$region0: #{transformer_forward.31}
  #allocation0 [shape = 'u32[]', space=smem, size = 0x4, offset = 0x4, fixed_abs, tag = 'smem constant byte address 0x4 - core index']
  #allocation1 [shape = 'u32[144,128]{1,0:T(1,128)}', space=vmem, size = 0x12000, scoped, tag = 'internal scratch']
  #allocation2 [shape = 'f32[14,32]{1,0:T(8,128)}', space=vmem, size = 0x2000, scoped, tag = 'scratch operand']
  %s0 = inlined_call_operand.vmem [shape: bf16[14,32], index: 0, kind: input, shape index: {}]
  %s1 = inlined_call_operand.vmem [shape: bf16[32,32], index: 1, kind: input, shape index: {}]
  %s2 = inlined_call_operand.vmem [shape: f32[1,32], index: 2, kind: input, shape index: {}]
  %s3 = inlined_call_operand.vmem [shape: bf16[14,32], index: 3, kind: input, shape index: {}]
  %s4 = inlined_call_operand.vmem [shape: f32[1,32], index: 4, kind: input, shape index: {}]
  %s5 = inlined_call_operand.vmem [shape: f32[1,32], index: 5, kind: input, shape index: {}]
  %s6 = inlined_call_operand.vmem [shape: f32[14,1], index: 6, kind: input, shape index: {}]
  %s7 = inlined_call_operand.vmem [shape: bf16[14,32], index: 7, kind: output, shape index: {}]
  %s8 = sld [smem:[#allocation0]]
  $region46: #{transformer_forward.31} parent=0
    _
  %s10 = ssub.s32 1, %s8
  %s11 = scalar_select 0, %s10, %s8
  // Predicated region
  $region2: #{transformer_forward.31} parent=0 // pred_check
    _
  $region3: #{transformer_forward.31} parent=0 // pred_check_branch
    %13 = sbr.rel (0) target = $region5
  $region4: #{transformer_forward.31} parent=0 // pred_region
    _
  $region5: #{transformer_forward.31} parent=0 // pred_fallthru
    _
  // Predicated region
  $region6: #{transformer_forward.31} parent=0 // pred_check
    _
  $region7: #{transformer_forward.31} parent=0 // pred_check_branch
    %15 = sbr.rel (0) target = $region9
  $region8: #{transformer_forward.31} parent=0 // pred_region
    _
  $region9: #{transformer_forward.31} parent=0 // pred_fallthru
    _
  // Predicated region
  $region10: #{transformer_forward.31} parent=0 // pred_check
    _
  $region11: #{transformer_forward.31} parent=0 // pred_check_branch
    %17 = sbr.rel (0) target = $region13
  $region12: #{transformer_forward.31} parent=0 // pred_region
    _
  $region13: #{transformer_forward.31} parent=0 // pred_fallthru
    _
  // Predicated region
  $region14: #{transformer_forward.31} parent=0 // pred_check
    _
  $region15: #{transformer_forward.31} parent=0 // pred_check_branch
    %19 = sbr.rel (0) target = $region17
  $region16: #{transformer_forward.31} parent=0 // pred_region
    _
  $region17: #{transformer_forward.31} parent=0 // pred_fallthru
    _
  // Predicated region
  $region18: #{transformer_forward.31} parent=0 // pred_check
    _
  $region19: #{transformer_forward.31} parent=0 // pred_check_branch
    %21 = sbr.rel (0) target = $region21
  $region20: #{transformer_forward.31} parent=0 // pred_region
    _
  $region21: #{transformer_forward.31} parent=0 // pred_fallthru
    _
  // Predicated region
  $region22: #{transformer_forward.31} parent=0 // pred_check
    _
  $region23: #{transformer_forward.31} parent=0 // pred_check_branch
    %23 = sbr.rel (0) target = $region25
  $region24: #{transformer_forward.31} parent=0 // pred_region
    _
  $region25: #{transformer_forward.31} parent=0 // pred_fallthru
    _
  // Predicated region
  $region26: #{transformer_forward.31} parent=0 // pred_check
    _
  $region27: #{transformer_forward.31} parent=0 // pred_check_branch
    %25 = sbr.rel (0) target = $region29
  $region28: #{transformer_forward.31} parent=0 // pred_region
    _
  $region29: #{transformer_forward.31} parent=0 // pred_fallthru
    _
  %p27 = scmp.eq.s32.totalorder 0, 0
  // Predicated region
  $region30: #{transformer_forward.31} parent=0 // pred_check
    %p28 = pneg %p27
  $region31: #{transformer_forward.31} parent=0 // pred_check_branch
    %30 = sbr.rel (%p28) target = $region33
  $region32: #{transformer_forward.31} parent=0 // pred_region
    %vm31 = vcmask 261120
    %32 = vst.msk [vmem:[#allocation2] sm:$0xff] %vm31, 0.0
    %vm33 = vcmask 259072
    %34 = vst.msk [vmem:[#allocation2 + $0x8] sm:$0x3f] %vm33, 0.0
  $region33: #{transformer_forward.31} parent=0 // pred_fallthru
    _
  %v35 = vld [vmem:[#allocation2] sm:$0xff]
  %v36 = vld [vmem:[#allocation2 + $0x8] sm:$0x3f]
  %v37 = vld [vmem:[%s0] sm:$0xf]
  %v38 = vld [vmem:[%s0 + $0x4] sm:$0x7]
  %v39 = vld [vmem:[%s1] sm:$0xf]
  %v40 = vld [vmem:[%s1 + $0x4] sm:$0xf]
  %v41 = vld [vmem:[%s1 + $0x8] sm:$0xf]
  %v42 = vld [vmem:[%s1 + $0xc] sm:$0xf]
  %v45 = vunpack.c.l.b16 %v37
  %v46 = vunpack.c.l.b16 %v38
  %v47 = vpack.c.b16 %v46, %v45
  %v52 = vunpack.c.l.b16 %v39
  %v53 = vunpack.c.l.b16 %v40
  %v54 = vunpack.c.l.b16 %v41
  %v55 = vunpack.c.l.b16 %v42
  %v56 = vpack.c.b16 %v53, %v52
  %v57 = vpack.c.b16 %v55, %v54
  %vm60 = vcmask 261120
  %v62 = vsel %vm60, %v47, 0
  %64 = vmatprep.subr.bf16.mxu0 0
  %65 = vmatpush1.bf16.msra.mxu0 0
  %66 = vmatprep.subr.bf16.mxu0 0
  %67 = vmatpush1.bf16.msra.mxu0 0
  %68 = vmatprep.subr.bf16.mxu0 0
  %69 = vmatpush1.bf16.msra.mxu0 0
  %70 = vmatprep.subr.bf16.mxu0 0
  %71 = vmatpush1.bf16.msra.mxu0 0
  %72 = vmatprep.subr.bf16.mxu0 0
  %73 = vmatpush1.bf16.msra.mxu0 0
  %74 = vmatprep.subr.bf16.mxu0 0
  %75 = vmatpush1.bf16.msra.mxu0 0
  %76 = vmatprep.subr.bf16.mxu0 0
  %77 = vmatpush1.bf16.msra.mxu0 %v57
  %78 = vmatprep.subr.bf16.mxu0 0
  %79 = vmatpush1.bf16.msra.mxu0 %v56
  %80 = vmatprep.subr.bf16.mxu0 0
  %81 = vmatpush2.bf16.msra.mxu0 0
  %82 = vmatprep.subr.bf16.mxu0 0
  %83 = vmatpush2.bf16.msra.mxu0 0
  %84 = vmatprep.subr.bf16.mxu0 0
  %85 = vmatpush2.bf16.msra.mxu0 0
  %86 = vmatprep.subr.bf16.mxu0 0
  %87 = vmatpush2.bf16.msra.mxu0 0
  %88 = vmatprep.subr.bf16.mxu0 0
  %89 = vmatpush2.bf16.msra.mxu0 0
  %90 = vmatprep.subr.bf16.mxu0 0
  %91 = vmatpush2.bf16.msra.mxu0 0
  %92 = vmatprep.subr.bf16.mxu0 0
  %93 = vmatpush2.bf16.msra.mxu0 0
  %94 = vmatprep.subr.bf16.mxu0 0
  %95 = vmatpush2.bf16.msra.mxu0 0
  %96 = vmatprep.mubr.bf16.mxu0 0
  %97 = vmatmul.mubr.bf16.gmra.mxu0 %v62
  %v98 = vpop.f32.mrf.mxu0
  %v99 = vadd.f32 0.0, %v98
  %v100 = vpop.f32.mrf.mxu0
  %v101 = vpop.f32.mrf.mxu0
  %v102 = vadd.f32 0.0, %v101
  %v103 = vpop.f32.mrf.mxu0
  %104 = vdwg.mxu0
  %v105 = vadd.f32 %v35, %v99
  %v106 = vadd.f32 %v36, %v102
  %107 = vst.msk [vmem:[#allocation2] sm:$0xff] %vm60, %v105
  %vm108 = vcmask 259072
  %109 = vst.msk [vmem:[#allocation2 + $0x8] sm:$0x3f] %vm108, %v106
  // Predicated region
  $region34: #{transformer_forward.31} parent=0 // pred_check
    %p110 = pneg %p27
  $region35: #{transformer_forward.31} parent=0 // pred_check_branch
    %112 = sbr.rel (%p110) target = $region37
  $region36: #{transformer_forward.31} parent=0 // pred_region
    %v113 = vld [vmem:[#allocation2] sm:$0xff]
    %v114 = vld [vmem:[#allocation2 + $0x8] sm:$0x3f]
    %v115 = vld [vmem:[%s2] sm:$0x1]
    %v117 = vlaneseq
    %v118 = vshrl.u32 %v117, 7
    %v119 = vsub.s32 0, %v118
    %v120 = vrot.slane %v115, %v119
    %v122 = vadd.f32 %v113, %v120
    %v123 = vadd.f32 %v114, %v120
    %v124 = vld [vmem:[%s3] sm:$0xf]
    %v125 = vld [vmem:[%s3 + $0x4] sm:$0x7]
    %v126 = vunpack.c.l.bf16 %v124
    %v127 = vunpack.c.l.bf16 %v125
    %v128 = vadd.f32 %v122, %v126
    %v129 = vadd.f32 %v123, %v127
    %v130 = vsel %vm60, %v128, 0.0
    %131 = vadd.xlane.f32.xlu0 %v130
    %v132 = vpop.xlane.xlu0 %131
    %v133 = vsel %vm108, %v129, 0.0
    %134 = vadd.xlane.f32.xlu0 %v133
    %v135 = vpop.xlane.xlu0 %134
    %v136 = vrcp.pop 32.0
    %v137 = vmul.f32 %v132, %v136
    %v138 = vmul.f32 %v135, %v136
    %v139 = vsub.f32 %v128, %v137
    %v140 = vsub.f32 %v129, %v138
    %v141 = vmul.f32 %v139, %v139
    %v142 = vmul.f32 %v140, %v140
    %v143 = vsel %vm60, %v141, 0.0
    %144 = vadd.xlane.f32.xlu0 %v143
    %v145 = vpop.xlane.xlu0 %144
    %v146 = vsel %vm108, %v142, 0.0
    %147 = vadd.xlane.f32.xlu0 %v146
    %v148 = vpop.xlane.xlu0 %147
    %v149 = vmul.f32 %v145, %v136
    %v150 = vmul.f32 %v148, %v136
    %v151 = vadd.f32 %v149, 1e-05
    %v152 = vadd.f32 %v150, 1e-05
    %v153 = vrsqrt.pop %v151
    %v154 = vrsqrt.pop %v152
    %v155 = vmul.f32 %v139, %v153
    %v156 = vmul.f32 %v140, %v154
    %v157 = vld [vmem:[%s4] sm:$0x1]
    %v159 = vlaneseq
    %v160 = vshrl.u32 %v159, 7
    %v161 = vsub.s32 0, %v160
    %v162 = vrot.slane %v157, %v161
    %v164 = vmul.f32 %v155, %v162
    %v165 = vmul.f32 %v156, %v162
    %v166 = vld [vmem:[%s5] sm:$0x1]
    %v168 = vlaneseq
    %v169 = vshrl.u32 %v168, 7
    %v170 = vsub.s32 0, %v169
    %v171 = vrot.slane %v166, %v170
    %v173 = vadd.f32 %v164, %v171
    %v174 = vadd.f32 %v165, %v171
    %v175 = vld [vmem:[%s6] sm:$0xff]
    %v176 = vld [vmem:[%s6 + $0x8] sm:$0x3f]
    %178 = vset.pattern.permute.xlu0 0
    %179 = vperm.xlu0 %178, %v175
    %v180 = vpop.permute.xlu0 %179
    %183 = vset.pattern.permute.xlu0 0
    %184 = vperm.xlu0 %183, %v176
    %v185 = vpop.permute.xlu0 %184
    %v187 = vmul.f32 %v173, %v180
    %v188 = vmul.f32 %v174, %v185
    %v189 = vpack.c.bf16 %v188, %v187
    %v191 = vunpack.c.l.b16 %v189
    %v192 = vunpack.c.h.b16 %v189
    %v193 = vpack.c.b16 %v191, %v191
    %v194 = vpack.c.b16 %v192, %v192
    %vm197 = vcmask 257024
    %198 = vst.msk [vmem:[%s7] sm:$0xf] %vm197, %v193
    %vm199 = vcmask 256000
    %200 = vst.msk [vmem:[%s7 + $0x4] sm:$0x7] %vm199, %v194
  $region37: #{transformer_forward.31} parent=0 // pred_fallthru
    _
  // Predicated region
  $region38: #{transformer_forward.31} parent=0 // pred_check
    _
  $region39: #{transformer_forward.31} parent=0 // pred_check_branch
    %202 = sbr.rel (0) target = $region41
  $region40: #{transformer_forward.31} parent=0 // pred_region
    _
  $region41: #{transformer_forward.31} parent=0 // pred_fallthru
    _
  // Predicated region
  $region42: #{transformer_forward.31} parent=0 // pred_check
    _
  $region43: #{transformer_forward.31} parent=0 // pred_check_branch
    %204 = sbr.rel (0) target = $region45
  $region44: #{transformer_forward.31} parent=0 // pred_region
    _
  $region45: #{transformer_forward.31} parent=0 // pred_fallthru
    _

// kernel: transformer_forward.43
$region0: #{transformer_forward.43}
  #allocation0 [shape = 'u32[]', space=smem, size = 0x4, offset = 0x4, fixed_abs, tag = 'smem constant byte address 0x4 - core index']
  #allocation1 [shape = 'u32[144,128]{1,0:T(1,128)}', space=vmem, size = 0x12000, scoped, tag = 'internal scratch']
  #allocation2 [shape = 'f32[14,64]{1,0:T(8,128)}', space=vmem, size = 0x2000, scoped, tag = 'scratch operand']
  %s0 = inlined_call_operand.vmem [shape: bf16[14,32], index: 0, kind: input, shape index: {}]
  %s1 = inlined_call_operand.vmem [shape: bf16[32,64], index: 1, kind: input, shape index: {}]
  %s2 = inlined_call_operand.vmem [shape: f32[1,64], index: 2, kind: input, shape index: {}]
  %s3 = inlined_call_operand.vmem [shape: bf16[14,64], index: 3, kind: output, shape index: {}]
  %s4 = sld [smem:[#allocation0]]
  $region30: #{transformer_forward.43} parent=0
    _
  %s6 = ssub.s32 1, %s4
  %s7 = scalar_select 0, %s6, %s4
  // Predicated region
  $region2: #{transformer_forward.43} parent=0 // pred_check
    _
  $region3: #{transformer_forward.43} parent=0 // pred_check_branch
    %9 = sbr.rel (0) target = $region5
  $region4: #{transformer_forward.43} parent=0 // pred_region
    _
  $region5: #{transformer_forward.43} parent=0 // pred_fallthru
    _
  // Predicated region
  $region6: #{transformer_forward.43} parent=0 // pred_check
    _
  $region7: #{transformer_forward.43} parent=0 // pred_check_branch
    %11 = sbr.rel (0) target = $region9
  $region8: #{transformer_forward.43} parent=0 // pred_region
    _
  $region9: #{transformer_forward.43} parent=0 // pred_fallthru
    _
  // Predicated region
  $region10: #{transformer_forward.43} parent=0 // pred_check
    _
  $region11: #{transformer_forward.43} parent=0 // pred_check_branch
    %13 = sbr.rel (0) target = $region13
  $region12: #{transformer_forward.43} parent=0 // pred_region
    _
  $region13: #{transformer_forward.43} parent=0 // pred_fallthru
    _
  %p15 = scmp.eq.s32.totalorder 0, 0
  // Predicated region
  $region14: #{transformer_forward.43} parent=0 // pred_check
    %p16 = pneg %p15
  $region15: #{transformer_forward.43} parent=0 // pred_check_branch
    %18 = sbr.rel (%p16) target = $region17
  $region16: #{transformer_forward.43} parent=0 // pred_region
    %vm19 = vcmask 523264
    %20 = vst.msk [vmem:[#allocation2] sm:$0xff] %vm19, 0.0
    %vm21 = vcmask 521216
    %22 = vst.msk [vmem:[#allocation2 + $0x8] sm:$0x3f] %vm21, 0.0
  $region17: #{transformer_forward.43} parent=0 // pred_fallthru
    _
  %v23 = vld [vmem:[#allocation2] sm:$0xff]
  %v24 = vld [vmem:[#allocation2 + $0x8] sm:$0x3f]
  %v25 = vld [vmem:[%s0] sm:$0xf]
  %v26 = vld [vmem:[%s0 + $0x4] sm:$0x7]
  %v27 = vld [vmem:[%s1] sm:$0xf]
  %v28 = vld [vmem:[%s1 + $0x4] sm:$0xf]
  %v29 = vld [vmem:[%s1 + $0x8] sm:$0xf]
  %v30 = vld [vmem:[%s1 + $0xc] sm:$0xf]
  %v33 = vunpack.c.l.b16 %v25
  %v34 = vunpack.c.l.b16 %v26
  %v35 = vpack.c.b16 %v34, %v33
  %v40 = vunpack.c.l.b16 %v27
  %v41 = vunpack.c.l.b16 %v28
  %v42 = vunpack.c.l.b16 %v29
  %v43 = vunpack.c.l.b16 %v30
  %v44 = vpack.c.b16 %v41, %v40
  %v45 = vpack.c.b16 %v43, %v42
  %vm48 = vcmask 261120
  %v50 = vsel %vm48, %v35, 0
  %52 = vmatprep.subr.bf16.mxu0 0
  %53 = vmatpush1.bf16.msra.mxu0 0
  %54 = vmatprep.subr.bf16.mxu0 0
  %55 = vmatpush1.bf16.msra.mxu0 0
  %56 = vmatprep.subr.bf16.mxu0 0
  %57 = vmatpush1.bf16.msra.mxu0 0
  %58 = vmatprep.subr.bf16.mxu0 0
  %59 = vmatpush1.bf16.msra.mxu0 0
  %60 = vmatprep.subr.bf16.mxu0 0
  %61 = vmatpush1.bf16.msra.mxu0 0
  %62 = vmatprep.subr.bf16.mxu0 0
  %63 = vmatpush1.bf16.msra.mxu0 0
  %64 = vmatprep.subr.bf16.mxu0 0
  %65 = vmatpush1.bf16.msra.mxu0 %v45
  %66 = vmatprep.subr.bf16.mxu0 0
  %67 = vmatpush1.bf16.msra.mxu0 %v44
  %68 = vmatprep.subr.bf16.mxu0 0
  %69 = vmatpush2.bf16.msra.mxu0 0
  %70 = vmatprep.subr.bf16.mxu0 0
  %71 = vmatpush2.bf16.msra.mxu0 0
  %72 = vmatprep.subr.bf16.mxu0 0
  %73 = vmatpush2.bf16.msra.mxu0 0
  %74 = vmatprep.subr.bf16.mxu0 0
  %75 = vmatpush2.bf16.msra.mxu0 0
  %76 = vmatprep.subr.bf16.mxu0 0
  %77 = vmatpush2.bf16.msra.mxu0 0
  %78 = vmatprep.subr.bf16.mxu0 0
  %79 = vmatpush2.bf16.msra.mxu0 0
  %80 = vmatprep.subr.bf16.mxu0 0
  %81 = vmatpush2.bf16.msra.mxu0 0
  %82 = vmatprep.subr.bf16.mxu0 0
  %83 = vmatpush2.bf16.msra.mxu0 0
  %84 = vmatprep.mubr.bf16.mxu0 0
  %85 = vmatmul.mubr.bf16.gmra.mxu0 %v50
  %v86 = vpop.f32.mrf.mxu0
  %v87 = vadd.f32 0.0, %v86
  %v88 = vpop.f32.mrf.mxu0
  %v89 = vpop.f32.mrf.mxu0
  %v90 = vadd.f32 0.0, %v89
  %v91 = vpop.f32.mrf.mxu0
  %92 = vdwg.mxu0
  %v93 = vadd.f32 %v23, %v87
  %v94 = vadd.f32 %v24, %v90
  %vm95 = vcmask 523264
  %96 = vst.msk [vmem:[#allocation2] sm:$0xff] %vm95, %v93
  %vm97 = vcmask 521216
  %98 = vst.msk [vmem:[#allocation2 + $0x8] sm:$0x3f] %vm97, %v94
  // Predicated region
  $region18: #{transformer_forward.43} parent=0 // pred_check
    %p99 = pneg %p15
  $region19: #{transformer_forward.43} parent=0 // pred_check_branch
    %101 = sbr.rel (%p99) target = $region21
  $region20: #{transformer_forward.43} parent=0 // pred_region
    %v102 = vld [vmem:[#allocation2] sm:$0xff]
    %v103 = vld [vmem:[#allocation2 + $0x8] sm:$0x3f]
    %v104 = vld [vmem:[%s2] sm:$0x1]
    %v106 = vlaneseq
    %v107 = vshrl.u32 %v106, 7
    %v108 = vsub.s32 0, %v107
    %v109 = vrot.slane %v104, %v108
    %v111 = vadd.f32 %v102, %v109
    %v112 = vadd.f32 %v103, %v109
    %v113 = vpack.c.bf16 %v112, %v111
    %v115 = vunpack.c.l.b16 %v113
    %v116 = vunpack.c.h.b16 %v113
    %v117 = vpack.c.b16 %v115, %v115
    %v118 = vpack.c.b16 %v116, %v116
    %vm121 = vcmask 519168
    %122 = vst.msk [vmem:[%s3] sm:$0xf] %vm121, %v117
    %vm123 = vcmask 518144
    %124 = vst.msk [vmem:[%s3 + $0x4] sm:$0x7] %vm123, %v118
  $region21: #{transformer_forward.43} parent=0 // pred_fallthru
    _
  // Predicated region
  $region22: #{transformer_forward.43} parent=0 // pred_check
    _
  $region23: #{transformer_forward.43} parent=0 // pred_check_branch
    %126 = sbr.rel (0) target = $region25
  $region24: #{transformer_forward.43} parent=0 // pred_region
    _
  $region25: #{transformer_forward.43} parent=0 // pred_fallthru
    _
  // Predicated region
  $region26: #{transformer_forward.43} parent=0 // pred_check
    _
  $region27: #{transformer_forward.43} parent=0 // pred_check_branch
    %128 = sbr.rel (0) target = $region29
  $region28: #{transformer_forward.43} parent=0 // pred_region
    _
  $region29: #{transformer_forward.43} parent=0 // pred_fallthru
    _

// kernel: transformer_forward.33
$region0: #{transformer_forward.33}
  #allocation0 [shape = 'u32[]', space=smem, size = 0x4, offset = 0x4, fixed_abs, tag = 'smem constant byte address 0x4 - core index']
  #allocation1 [shape = 'u32[144,128]{1,0:T(1,128)}', space=vmem, size = 0x12000, scoped, tag = 'internal scratch']
  #allocation2 [shape = 'f32[14,32]{1,0:T(8,128)}', space=vmem, size = 0x2000, scoped, tag = 'scratch operand']
  %s0 = inlined_call_operand.vmem [shape: bf16[14,64], index: 0, kind: input, shape index: {}]
  %s1 = inlined_call_operand.vmem [shape: bf16[64,32], index: 1, kind: input, shape index: {}]
  %s2 = inlined_call_operand.vmem [shape: f32[1,32], index: 2, kind: input, shape index: {}]
  %s3 = inlined_call_operand.vmem [shape: bf16[14,32], index: 3, kind: input, shape index: {}]
  %s4 = inlined_call_operand.vmem [shape: f32[1,32], index: 4, kind: input, shape index: {}]
  %s5 = inlined_call_operand.vmem [shape: f32[1,32], index: 5, kind: input, shape index: {}]
  %s6 = inlined_call_operand.vmem [shape: f32[14,1], index: 6, kind: input, shape index: {}]
  %s7 = inlined_call_operand.vmem [shape: bf16[14,32], index: 7, kind: output, shape index: {}]
  %s8 = sld [smem:[#allocation0]]
  $region46: #{transformer_forward.33} parent=0
    _
  %s10 = ssub.s32 1, %s8
  %s11 = scalar_select 0, %s10, %s8
  // Predicated region
  $region2: #{transformer_forward.33} parent=0 // pred_check
    _
  $region3: #{transformer_forward.33} parent=0 // pred_check_branch
    %13 = sbr.rel (0) target = $region5
  $region4: #{transformer_forward.33} parent=0 // pred_region
    _
  $region5: #{transformer_forward.33} parent=0 // pred_fallthru
    _
  // Predicated region
  $region6: #{transformer_forward.33} parent=0 // pred_check
    _
  $region7: #{transformer_forward.33} parent=0 // pred_check_branch
    %15 = sbr.rel (0) target = $region9
  $region8: #{transformer_forward.33} parent=0 // pred_region
    _
  $region9: #{transformer_forward.33} parent=0 // pred_fallthru
    _
  // Predicated region
  $region10: #{transformer_forward.33} parent=0 // pred_check
    _
  $region11: #{transformer_forward.33} parent=0 // pred_check_branch
    %17 = sbr.rel (0) target = $region13
  $region12: #{transformer_forward.33} parent=0 // pred_region
    _
  $region13: #{transformer_forward.33} parent=0 // pred_fallthru
    _
  // Predicated region
  $region14: #{transformer_forward.33} parent=0 // pred_check
    _
  $region15: #{transformer_forward.33} parent=0 // pred_check_branch
    %19 = sbr.rel (0) target = $region17
  $region16: #{transformer_forward.33} parent=0 // pred_region
    _
  $region17: #{transformer_forward.33} parent=0 // pred_fallthru
    _
  // Predicated region
  $region18: #{transformer_forward.33} parent=0 // pred_check
    _
  $region19: #{transformer_forward.33} parent=0 // pred_check_branch
    %21 = sbr.rel (0) target = $region21
  $region20: #{transformer_forward.33} parent=0 // pred_region
    _
  $region21: #{transformer_forward.33} parent=0 // pred_fallthru
    _
  // Predicated region
  $region22: #{transformer_forward.33} parent=0 // pred_check
    _
  $region23: #{transformer_forward.33} parent=0 // pred_check_branch
    %23 = sbr.rel (0) target = $region25
  $region24: #{transformer_forward.33} parent=0 // pred_region
    _
  $region25: #{transformer_forward.33} parent=0 // pred_fallthru
    _
  // Predicated region
  $region26: #{transformer_forward.33} parent=0 // pred_check
    _
  $region27: #{transformer_forward.33} parent=0 // pred_check_branch
    %25 = sbr.rel (0) target = $region29
  $region28: #{transformer_forward.33} parent=0 // pred_region
    _
  $region29: #{transformer_forward.33} parent=0 // pred_fallthru
    _
  %p27 = scmp.eq.s32.totalorder 0, 0
  // Predicated region
  $region30: #{transformer_forward.33} parent=0 // pred_check
    %p28 = pneg %p27
  $region31: #{transformer_forward.33} parent=0 // pred_check_branch
    %30 = sbr.rel (%p28) target = $region33
  $region32: #{transformer_forward.33} parent=0 // pred_region
    %vm31 = vcmask 261120
    %32 = vst.msk [vmem:[#allocation2] sm:$0xff] %vm31, 0.0
    %vm33 = vcmask 259072
    %34 = vst.msk [vmem:[#allocation2 + $0x8] sm:$0x3f] %vm33, 0.0
  $region33: #{transformer_forward.33} parent=0 // pred_fallthru
    _
  %v35 = vld [vmem:[#allocation2] sm:$0xff]
  %v36 = vld [vmem:[#allocation2 + $0x8] sm:$0x3f]
  %v37 = vld [vmem:[%s0] sm:$0xf]
  %v38 = vld [vmem:[%s0 + $0x4] sm:$0x7]
  %v39 = vld [vmem:[%s1] sm:$0xf]
  %v40 = vld [vmem:[%s1 + $0x4] sm:$0xf]
  %v41 = vld [vmem:[%s1 + $0x8] sm:$0xf]
  %v42 = vld [vmem:[%s1 + $0xc] sm:$0xf]
  %v43 = vld [vmem:[%s1 + $0x10] sm:$0xf]
  %v44 = vld [vmem:[%s1 + $0x14] sm:$0xf]
  %v45 = vld [vmem:[%s1 + $0x18] sm:$0xf]
  %v46 = vld [vmem:[%s1 + $0x1c] sm:$0xf]
  %v49 = vunpack.c.l.b16 %v37
  %v50 = vunpack.c.l.b16 %v38
  %v51 = vpack.c.b16 %v50, %v49
  %v60 = vunpack.c.l.b16 %v39
  %v61 = vunpack.c.l.b16 %v40
  %v62 = vunpack.c.l.b16 %v41
  %v63 = vunpack.c.l.b16 %v42
  %v64 = vunpack.c.l.b16 %v43
  %v65 = vunpack.c.l.b16 %v44
  %v66 = vunpack.c.l.b16 %v45
  %v67 = vunpack.c.l.b16 %v46
  %v68 = vpack.c.b16 %v61, %v60
  %v69 = vpack.c.b16 %v63, %v62
  %v70 = vpack.c.b16 %v65, %v64
  %v71 = vpack.c.b16 %v67, %v66
  %vm76 = vcmask 523264
  %v78 = vsel %vm76, %v51, 0
  %80 = vmatprep.subr.bf16.mxu0 0
  %81 = vmatpush1.bf16.msra.mxu0 0
  %82 = vmatprep.subr.bf16.mxu0 0
  %83 = vmatpush1.bf16.msra.mxu0 0
  %84 = vmatprep.subr.bf16.mxu0 0
  %85 = vmatpush1.bf16.msra.mxu0 0
  %86 = vmatprep.subr.bf16.mxu0 0
  %87 = vmatpush1.bf16.msra.mxu0 0
  %88 = vmatprep.subr.bf16.mxu0 0
  %89 = vmatpush1.bf16.msra.mxu0 %v71
  %90 = vmatprep.subr.bf16.mxu0 0
  %91 = vmatpush1.bf16.msra.mxu0 %v70
  %92 = vmatprep.subr.bf16.mxu0 0
  %93 = vmatpush1.bf16.msra.mxu0 %v69
  %94 = vmatprep.subr.bf16.mxu0 0
  %95 = vmatpush1.bf16.msra.mxu0 %v68
  %96 = vmatprep.subr.bf16.mxu0 0
  %97 = vmatpush2.bf16.msra.mxu0 0
  %98 = vmatprep.subr.bf16.mxu0 0
  %99 = vmatpush2.bf16.msra.mxu0 0
  %100 = vmatprep.subr.bf16.mxu0 0
  %101 = vmatpush2.bf16.msra.mxu0 0
  %102 = vmatprep.subr.bf16.mxu0 0
  %103 = vmatpush2.bf16.msra.mxu0 0
  %104 = vmatprep.subr.bf16.mxu0 0
  %105 = vmatpush2.bf16.msra.mxu0 0
  %106 = vmatprep.subr.bf16.mxu0 0
  %107 = vmatpush2.bf16.msra.mxu0 0
  %108 = vmatprep.subr.bf16.mxu0 0
  %109 = vmatpush2.bf16.msra.mxu0 0
  %110 = vmatprep.subr.bf16.mxu0 0
  %111 = vmatpush2.bf16.msra.mxu0 0
  %112 = vmatprep.mubr.bf16.mxu0 0
  %113 = vmatmul.mubr.bf16.gmra.mxu0 %v78
  %v114 = vpop.f32.mrf.mxu0
  %v115 = vadd.f32 0.0, %v114
  %v116 = vpop.f32.mrf.mxu0
  %v117 = vpop.f32.mrf.mxu0
  %v118 = vadd.f32 0.0, %v117
  %v119 = vpop.f32.mrf.mxu0
  %120 = vdwg.mxu0
  %v121 = vadd.f32 %v35, %v115
  %v122 = vadd.f32 %v36, %v118
  %vm123 = vcmask 261120
  %124 = vst.msk [vmem:[#allocation2] sm:$0xff] %vm123, %v121
  %vm125 = vcmask 259072
  %126 = vst.msk [vmem:[#allocation2 + $0x8] sm:$0x3f] %vm125, %v122
  // Predicated region
  $region34: #{transformer_forward.33} parent=0 // pred_check
    %p127 = pneg %p27
  $region35: #{transformer_forward.33} parent=0 // pred_check_branch
    %129 = sbr.rel (%p127) target = $region37
  $region36: #{transformer_forward.33} parent=0 // pred_region
    %v130 = vld [vmem:[#allocation2] sm:$0xff]
    %v131 = vld [vmem:[#allocation2 + $0x8] sm:$0x3f]
    %v132 = vld [vmem:[%s2] sm:$0x1]
    %v134 = vlaneseq
    %v135 = vshrl.u32 %v134, 7
    %v136 = vsub.s32 0, %v135
    %v137 = vrot.slane %v132, %v136
    %v139 = vadd.f32 %v130, %v137
    %v140 = vadd.f32 %v131, %v137
    %v141 = vld [vmem:[%s3] sm:$0xf]
    %v142 = vld [vmem:[%s3 + $0x4] sm:$0x7]
    %v143 = vunpack.c.l.bf16 %v141
    %v144 = vunpack.c.l.bf16 %v142
    %v145 = vadd.f32 %v139, %v143
    %v146 = vadd.f32 %v140, %v144
    %v147 = vsel %vm123, %v145, 0.0
    %148 = vadd.xlane.f32.xlu0 %v147
    %v149 = vpop.xlane.xlu0 %148
    %v150 = vsel %vm125, %v146, 0.0
    %151 = vadd.xlane.f32.xlu0 %v150
    %v152 = vpop.xlane.xlu0 %151
    %v153 = vrcp.pop 32.0
    %v154 = vmul.f32 %v149, %v153
    %v155 = vmul.f32 %v152, %v153
    %v156 = vsub.f32 %v145, %v154
    %v157 = vsub.f32 %v146, %v155
    %v158 = vmul.f32 %v156, %v156
    %v159 = vmul.f32 %v157, %v157
    %v160 = vsel %vm123, %v158, 0.0
    %161 = vadd.xlane.f32.xlu0 %v160
    %v162 = vpop.xlane.xlu0 %161
    %v163 = vsel %vm125, %v159, 0.0
    %164 = vadd.xlane.f32.xlu0 %v163
    %v165 = vpop.xlane.xlu0 %164
    %v166 = vmul.f32 %v162, %v153
    %v167 = vmul.f32 %v165, %v153
    %v168 = vadd.f32 %v166, 1e-05
    %v169 = vadd.f32 %v167, 1e-05
    %v170 = vrsqrt.pop %v168
    %v171 = vrsqrt.pop %v169
    %v172 = vmul.f32 %v156, %v170
    %v173 = vmul.f32 %v157, %v171
    %v174 = vld [vmem:[%s4] sm:$0x1]
    %v176 = vlaneseq
    %v177 = vshrl.u32 %v176, 7
    %v178 = vsub.s32 0, %v177
    %v179 = vrot.slane %v174, %v178
    %v181 = vmul.f32 %v172, %v179
    %v182 = vmul.f32 %v173, %v179
    %v183 = vld [vmem:[%s5] sm:$0x1]
    %v185 = vlaneseq
    %v186 = vshrl.u32 %v185, 7
    %v187 = vsub.s32 0, %v186
    %v188 = vrot.slane %v183, %v187
    %v190 = vadd.f32 %v181, %v188
    %v191 = vadd.f32 %v182, %v188
    %v192 = vld [vmem:[%s6] sm:$0xff]
    %v193 = vld [vmem:[%s6 + $0x8] sm:$0x3f]
    %195 = vset.pattern.permute.xlu0 0
    %196 = vperm.xlu0 %195, %v192
    %v197 = vpop.permute.xlu0 %196
    %200 = vset.pattern.permute.xlu0 0
    %201 = vperm.xlu0 %200, %v193
    %v202 = vpop.permute.xlu0 %201
    %v204 = vmul.f32 %v190, %v197
    %v205 = vmul.f32 %v191, %v202
    %v206 = vpack.c.bf16 %v205, %v204
    %v208 = vunpack.c.l.b16 %v206
    %v209 = vunpack.c.h.b16 %v206
    %v210 = vpack.c.b16 %v208, %v208
    %v211 = vpack.c.b16 %v209, %v209
    %vm214 = vcmask 257024
    %215 = vst.msk [vmem:[%s7] sm:$0xf] %vm214, %v210
    %vm216 = vcmask 256000
    %217 = vst.msk [vmem:[%s7 + $0x4] sm:$0x7] %vm216, %v211
  $region37: #{transformer_forward.33} parent=0 // pred_fallthru
    _
  // Predicated region
  $region38: #{transformer_forward.33} parent=0 // pred_check
    _
  $region39: #{transformer_forward.33} parent=0 // pred_check_branch
    %219 = sbr.rel (0) target = $region41
  $region40: #{transformer_forward.33} parent=0 // pred_region
    _
  $region41: #{transformer_forward.33} parent=0 // pred_fallthru
    _
  // Predicated region
  $region42: #{transformer_forward.33} parent=0 // pred_check
    _
  $region43: #{transformer_forward.33} parent=0 // pred_check_branch
    %221 = sbr.rel (0) target = $region45
  $region44: #{transformer_forward.33} parent=0 // pred_region
    _
  $region45: #{transformer_forward.33} parent=0 // pred_fallthru
    _

// kernel: transformer_forward.40
$region0: #{transformer_forward.40}
  #allocation0 [shape = 'u32[]', space=smem, size = 0x4, offset = 0x4, fixed_abs, tag = 'smem constant byte address 0x4 - core index']
  #allocation1 [shape = 'u32[144,128]{1,0:T(1,128)}', space=vmem, size = 0x12000, scoped, tag = 'internal scratch']
  %s0 = inlined_call_operand.vmem [shape: bf16[2,4,7,8], index: 0, kind: input, shape index: {}]
  %s1 = inlined_call_operand.vmem [shape: bf16[2,4,7,8], index: 1, kind: input, shape index: {}]
  %s2 = inlined_call_operand.vmem [shape: bf16[2,4,7,8], index: 2, kind: input, shape index: {}]
  %s3 = inlined_call_operand.vmem [shape: f32[2,1,7], index: 3, kind: input, shape index: {}]
  %s4 = inlined_call_operand.vmem [shape: bf16[2,4,7,8], index: 4, kind: output, shape index: {}]
  %s5 = sld [smem:[#allocation0]]
  $region49: #{transformer_forward.40} parent=0
    _
  %s7 = ssub.s32 1, %s5
  %s8 = scalar_select 0, %s7, %s5
  loop: start=0, step=1, limit=10
  $region2: #{transformer_forward.40} parent=0 // loop_pre_header
    _
  $region3: #{transformer_forward.40} parent=0 // loop_header
    %s10 = sphi 0, %s14
    %p11 = scmp.ge.s32.totalorder %s10, 10
    %s17 = sphi 0, %s36
    %s18 = sphi 0, %s32
    %s19 = sphi 0, %s28
    %s20 = sphi 0, %s17
    %s21 = sphi 0, %s18
    %s22 = sphi 0, %s19
    %s23 = sphi 0, %s20
    %s24 = sphi 0, %s21
    %s25 = sphi 0, %s22
    %s43 = sphi 0, %s45
    %s46 = sphi 0, %s43
    %s47 = sphi 0, %s46
    %s63 = sphi 0, %s47
    %s71 = sphi 0, %s73
    %s74 = sphi 0, %s71
    %s75 = sphi 0, %s74
    %s91 = sphi 0, %s75
    %s99 = sphi 0, %s101
    %s102 = sphi 0, %s99
    %s103 = sphi 0, %s102
    %s119 = sphi 0, %s103
    %s125 = sphi 0, %s127
    %s128 = sphi 0, %s125
    %s129 = sphi 0, %s128
    %s145 = sphi 0, %s129
    %s155 = sphi 0, %s157
    %s158 = sphi 0, %s155
    %s159 = sphi 0, %s158
    %s175 = sphi 0, %s159
  $region4: #{transformer_forward.40} parent=0 // loop_header_branch
    %13 = sbr.rel (%p11) target = $region8
  $region5: #{transformer_forward.40} parent=0 // loop_body
    %s15 = ssub.s32 %s10, 1
    %s16 = ssub.s32 %s10, 2
    %s26 = sadd.s32 1, %s19
    %p27 = scmp.ge.s32.totalorder %s26, 1
    %s28 = scalar_select %p27, 0, %s26
    %s29 = sadd.s32 1, %s18
    %s30 = scalar_select %p27, %s29, %s18
    %p31 = scmp.ge.s32.totalorder %s30, 4
    %s32 = scalar_select %p31, 0, %s30
    %s33 = sadd.s32 1, %s17
    %s34 = scalar_select %p31, %s33, %s17
    %p35 = scmp.ge.s32.totalorder %s34, 2
    %s36 = scalar_select %p35, 0, %s34
    %s37 = ssub.s32 %s17, %s36
    %s38 = ssub.s32 %s18, %s32
    %s39 = sor.u32 %s37, %s38
    %s40 = ssub.s32 %s19, %s28
    %s41 = sor.u32 %s39, %s40
    %p42 = scmp.eq.s32.totalorder %s41, 0
    %s44 = sadd.s32 %s43, 1
    %s45 = scalar_select %p42, %s43, %s44
    %p48 = pneg %p42
    %p49 = scmp.eq.s32.totalorder %s10, 7
    %p50 = por %p48, %p49
    %p51 = scmp.ne.s32.totalorder %s43, %s46
    %p52 = scmp.eq.s32.totalorder %s10, 0
    %p53 = por %p51, %p52
    %p54 = scmp.ne.s32.totalorder %s43, %s46
    %p55 = scmp.eq.s32.totalorder %s15, 7
    %p56 = por %p54, %p55
    %p57 = scmp.ne.s32.totalorder %s46, %s47
    %p58 = scmp.eq.s32.totalorder %s15, 0
    %p59 = por %p57, %p58
    %p60 = scmp.ne.s32.totalorder %s46, %s47
    %p61 = scmp.eq.s32.totalorder %s16, 7
    %p62 = por %p60, %p61
    %p64 = scmp.ne.s32.totalorder %s47, %s63
    %p65 = scmp.eq.s32.totalorder %s16, 0
    %p66 = por %p64, %p65
    %s67 = ssub.s32 %s17, %s36
    %s68 = ssub.s32 %s18, %s32
    %s69 = sor.u32 %s67, %s68
    %p70 = scmp.eq.s32.totalorder %s69, 0
    %s72 = sadd.s32 %s71, 1
    %s73 = scalar_select %p70, %s71, %s72
    %p76 = pneg %p70
    %p77 = scmp.eq.s32.totalorder %s10, 7
    %p78 = por %p76, %p77
    %p79 = scmp.ne.s32.totalorder %s71, %s74
    %p80 = scmp.eq.s32.totalorder %s10, 0
    %p81 = por %p79, %p80
    %p82 = scmp.ne.s32.totalorder %s71, %s74
    %p83 = scmp.eq.s32.totalorder %s15, 7
    %p84 = por %p82, %p83
    %p85 = scmp.ne.s32.totalorder %s74, %s75
    %p86 = scmp.eq.s32.totalorder %s15, 0
    %p87 = por %p85, %p86
    %p88 = scmp.ne.s32.totalorder %s74, %s75
    %p89 = scmp.eq.s32.totalorder %s16, 7
    %p90 = por %p88, %p89
    %p92 = scmp.ne.s32.totalorder %s75, %s91
    %p93 = scmp.eq.s32.totalorder %s16, 0
    %p94 = por %p92, %p93
    %s95 = ssub.s32 %s17, %s36
    %s96 = ssub.s32 %s18, %s32
    %s97 = sor.u32 %s95, %s96
    %p98 = scmp.eq.s32.totalorder %s97, 0
    %s100 = sadd.s32 %s99, 1
    %s101 = scalar_select %p98, %s99, %s100
    %p104 = pneg %p98
    %p105 = scmp.eq.s32.totalorder %s10, 7
    %p106 = por %p104, %p105
    %p107 = scmp.ne.s32.totalorder %s99, %s102
    %p108 = scmp.eq.s32.totalorder %s10, 0
    %p109 = por %p107, %p108
    %p110 = scmp.ne.s32.totalorder %s99, %s102
    %p111 = scmp.eq.s32.totalorder %s15, 7
    %p112 = por %p110, %p111
    %p113 = scmp.ne.s32.totalorder %s102, %s103
    %p114 = scmp.eq.s32.totalorder %s15, 0
    %p115 = por %p113, %p114
    %p116 = scmp.ne.s32.totalorder %s102, %s103
    %p117 = scmp.eq.s32.totalorder %s16, 7
    %p118 = por %p116, %p117
    %p120 = scmp.ne.s32.totalorder %s103, %s119
    %p121 = scmp.eq.s32.totalorder %s16, 0
    %p122 = por %p120, %p121
    %s123 = ssub.s32 %s17, %s36
    %p124 = scmp.eq.s32.totalorder %s123, 0
    %s126 = sadd.s32 %s125, 1
    %s127 = scalar_select %p124, %s125, %s126
    %p130 = pneg %p124
    %p131 = scmp.eq.s32.totalorder %s10, 7
    %p132 = por %p130, %p131
    %p133 = scmp.ne.s32.totalorder %s125, %s128
    %p134 = scmp.eq.s32.totalorder %s10, 0
    %p135 = por %p133, %p134
    %p136 = scmp.ne.s32.totalorder %s125, %s128
    %p137 = scmp.eq.s32.totalorder %s15, 7
    %p138 = por %p136, %p137
    %p139 = scmp.ne.s32.totalorder %s128, %s129
    %p140 = scmp.eq.s32.totalorder %s15, 0
    %p141 = por %p139, %p140
    %p142 = scmp.ne.s32.totalorder %s128, %s129
    %p143 = scmp.eq.s32.totalorder %s16, 7
    %p144 = por %p142, %p143
    %p146 = scmp.ne.s32.totalorder %s129, %s145
    %p147 = scmp.eq.s32.totalorder %s16, 0
    %p148 = por %p146, %p147
    %s149 = ssub.s32 %s17, %s36
    %s150 = ssub.s32 %s18, %s32
    %s151 = sor.u32 %s149, %s150
    %s152 = ssub.s32 %s19, %s28
    %s153 = sor.u32 %s151, %s152
    %p154 = scmp.eq.s32.totalorder %s153, 0
    %s156 = sadd.s32 %s155, 1
    %s157 = scalar_select %p154, %s155, %s156
    %p160 = pneg %p154
    %p161 = scmp.eq.s32.totalorder %s10, 7
    %p162 = por %p160, %p161
    %p163 = scmp.ne.s32.totalorder %s155, %s158
    %p164 = scmp.eq.s32.totalorder %s10, 0
    %p165 = por %p163, %p164
    %p166 = scmp.ne.s32.totalorder %s155, %s158
    %p167 = scmp.eq.s32.totalorder %s15, 7
    %p168 = por %p166, %p167
    %p169 = scmp.ne.s32.totalorder %s158, %s159
    %p170 = scmp.eq.s32.totalorder %s15, 0
    %p171 = por %p169, %p170
    %p172 = scmp.ne.s32.totalorder %s158, %s159
    %p173 = scmp.eq.s32.totalorder %s16, 7
    %p174 = por %p172, %p173
    %p176 = scmp.ne.s32.totalorder %s159, %s175
    %p177 = scmp.eq.s32.totalorder %s16, 0
    %p178 = por %p176, %p177
    %p179 = scmp.le.s32.totalorder 1, %s10
    %p180 = scmp.lt.s32.totalorder %s10, 9
    %p181 = pnand %p179, %p180
    %p182 = pneg %p181
    // Predicated region
    $region9: #{transformer_forward.40} parent=5 // pred_check
      _
    $region10: #{transformer_forward.40} parent=5 // pred_check_branch
      %184 = sbr.rel (%p181) target = $region12
    $region11: #{transformer_forward.40} parent=5 // pred_region
      %s185 = ssub.s32 %s10, 1
    $region12: #{transformer_forward.40} parent=5 // pred_fallthru
      _
    %p186 = scmp.lt.s32.totalorder %s10, 8
    // Predicated region
    $region13: #{transformer_forward.40} parent=5 // pred_check
      %p187 = pneg %p186
    $region14: #{transformer_forward.40} parent=5 // pred_check_branch
      %189 = sbr.rel (%p187) target = $region16
    $region15: #{transformer_forward.40} parent=5 // pred_region
      // Predicated region
      $region17: #{transformer_forward.40} parent=15 // pred_check
        %p190 = pneg %p53
      $region18: #{transformer_forward.40} parent=15 // pred_check_branch
        %192 = sbr.rel (%p190) target = $region20
      $region19: #{transformer_forward.40} parent=15 // pred_region
        %p193 = scmp.lt.s32.totalorder %s17, 1
        %s194 = scalar_select %p193, %s17, 1
        %p195 = scmp.lt.s32.totalorder %s18, 3
        %s196 = scalar_select %p195, %s18, 3
        %p197 = scmp.lt.s32.totalorder %s19, 0
        %s198 = scalar_select %p197, %s19, 0
        %s199 = sadd.s32 %s198, %s196
        %s200 = smul.addr %s194, 4
        %s201 = sadd.s32 %s199, %s200
        %s202 = smul.addr %s201, 4
        %s203 = scalar_lea.vmem %s0, %s202
      $region20: #{transformer_forward.40} parent=15 // pred_fallthru
        _
      // Predicated region
      $region21: #{transformer_forward.40} parent=15 // pred_check
        %p204 = pneg %p81
      $region22: #{transformer_forward.40} parent=15 // pred_check_branch
        %206 = sbr.rel (%p204) target = $region24
      $region23: #{transformer_forward.40} parent=15 // pred_region
        %p207 = scmp.lt.s32.totalorder %s17, 1
        %s208 = scalar_select %p207, %s17, 1
        %p209 = scmp.lt.s32.totalorder %s18, 3
        %s210 = scalar_select %p209, %s18, 3
        %s211 = smul.addr %s208, 4
        %s212 = sadd.s32 %s210, %s211
        %s213 = smul.addr %s212, 4
        %s214 = scalar_lea.vmem %s1, %s213
      $region24: #{transformer_forward.40} parent=15 // pred_fallthru
        _
      // Predicated region
      $region25: #{transformer_forward.40} parent=15 // pred_check
        %p215 = pneg %p109
      $region26: #{transformer_forward.40} parent=15 // pred_check_branch
        %217 = sbr.rel (%p215) target = $region28
      $region27: #{transformer_forward.40} parent=15 // pred_region
        %p218 = scmp.lt.s32.totalorder %s17, 1
        %s219 = scalar_select %p218, %s17, 1
        %p220 = scmp.lt.s32.totalorder %s18, 3
        %s221 = scalar_select %p220, %s18, 3
        %s222 = smul.addr %s219, 4
        %s223 = sadd.s32 %s221, %s222
        %s224 = smul.addr %s223, 4
        %s225 = scalar_lea.vmem %s2, %s224
      $region28: #{transformer_forward.40} parent=15 // pred_fallthru
        _
      // Predicated region
      $region29: #{transformer_forward.40} parent=15 // pred_check
        %p226 = pneg %p135
      $region30: #{transformer_forward.40} parent=15 // pred_check_branch
        %228 = sbr.rel (%p226) target = $region32
      $region31: #{transformer_forward.40} parent=15 // pred_region
        %p229 = scmp.lt.s32.totalorder %s17, 1
        %s230 = scalar_select %p229, %s17, 1
        %s231 = scalar_lea.vmem %s3, %s230
      $region32: #{transformer_forward.40} parent=15 // pred_fallthru
        _
    $region16: #{transformer_forward.40} parent=5 // pred_fallthru
      _
    %p232 = scmp.le.s32.totalorder 1, %s10
    %p233 = scmp.lt.s32.totalorder %s10, 9
    %p234 = pnand %p232, %p233
    %p235 = pneg %p234
    // Predicated region
    $region33: #{transformer_forward.40} parent=5 // pred_check
      _
    $region34: #{transformer_forward.40} parent=5 // pred_check_branch
      %237 = sbr.rel (%p234) target = $region36
    $region35: #{transformer_forward.40} parent=5 // pred_region
      %s238 = ssub.s32 %s10, 1
      %p239 = scmp.lt.s32.totalorder %s20, 1
      %s240 = scalar_select %p239, %s20, 1
      %p241 = scmp.lt.s32.totalorder %s21, 3
      %s242 = scalar_select %p241, %s21, 3
      %p243 = scmp.lt.s32.totalorder %s22, 0
      %s244 = scalar_select %p243, %s22, 0
      %s245 = sadd.s32 %s244, %s242
      %s246 = smul.addr %s240, 4
      %s247 = sadd.s32 %s245, %s246
      %s248 = smul.addr %s247, 4
      %s249 = scalar_lea.vmem %s0, %s248
      %p250 = pneg %p59
      %p251 = pneg %p56
      %p252 = scmp.lt.s32.totalorder %s20, 1
      %s253 = scalar_select %p252, %s20, 1
      %p254 = scmp.lt.s32.totalorder %s21, 3
      %s255 = scalar_select %p254, %s21, 3
      %s256 = smul.addr %s253, 4
      %s257 = sadd.s32 %s255, %s256
      %s258 = smul.addr %s257, 4
      %s259 = scalar_lea.vmem %s1, %s258
      %p260 = pneg %p87
      %p261 = pneg %p84
      %p262 = scmp.lt.s32.totalorder %s20, 1
      %s263 = scalar_select %p262, %s20, 1
      %p264 = scmp.lt.s32.totalorder %s21, 3
      %s265 = scalar_select %p264, %s21, 3
      %s266 = smul.addr %s263, 4
      %s267 = sadd.s32 %s265, %s266
      %s268 = smul.addr %s267, 4
      %s269 = scalar_lea.vmem %s2, %s268
      %p270 = pneg %p115
      %p271 = pneg %p112
      %p272 = scmp.lt.s32.totalorder %s20, 1
      %s273 = scalar_select %p272, %s20, 1
      %s274 = scalar_lea.vmem %s3, %s273
      %p275 = pneg %p141
      %p276 = pneg %p138
      %p277 = pneg %p171
      %p278 = pneg %p168
      %p279 = scmp.lt.s32.totalorder %s20, 1
      %s280 = scalar_select %p279, %s20, 1
      %p281 = scmp.lt.s32.totalorder %s21, 3
      %s282 = scalar_select %p281, %s21, 3
      %p283 = scmp.lt.s32.totalorder %s22, 0
      %s284 = scalar_select %p283, %s22, 0
      %s285 = sadd.s32 %s284, %s282
      %s286 = smul.addr %s280, 4
      %s287 = sadd.s32 %s285, %s286
      %s288 = smul.addr %s287, 4
      %s289 = scalar_lea.vmem %s4, %s288
      %p290 = scmp.lt.s32.totalorder %s20, 1
      %s291 = scalar_select %p290, %s20, 1
      %p292 = scmp.lt.s32.totalorder %s21, 3
      %s293 = scalar_select %p292, %s21, 3
      %p294 = scmp.lt.s32.totalorder %s22, 0
      %s295 = scalar_select %p294, %s22, 0
      %s296 = sadd.s32 %s295, %s293
      %s297 = smul.addr %s291, 4
      %s298 = sadd.s32 %s296, %s297
      %s299 = smul.addr %s298, 4
      %s300 = scalar_lea.vmem %s0, %s299
      %p301 = scmp.lt.s32.totalorder %s20, 1
      %s302 = scalar_select %p301, %s20, 1
      %p303 = scmp.lt.s32.totalorder %s21, 3
      %s304 = scalar_select %p303, %s21, 3
      %s305 = smul.addr %s302, 4
      %s306 = sadd.s32 %s304, %s305
      %s307 = smul.addr %s306, 4
      %s308 = scalar_lea.vmem %s1, %s307
      %p309 = scmp.lt.s32.totalorder %s20, 1
      %s310 = scalar_select %p309, %s20, 1
      %p311 = scmp.lt.s32.totalorder %s21, 3
      %s312 = scalar_select %p311, %s21, 3
      %s313 = smul.addr %s310, 4
      %s314 = sadd.s32 %s312, %s313
      %s315 = smul.addr %s314, 4
      %s316 = scalar_lea.vmem %s2, %s315
      %p317 = scmp.lt.s32.totalorder %s20, 1
      %s318 = scalar_select %p317, %s20, 1
      %s319 = scalar_lea.vmem %s3, %s318
      %p320 = scmp.lt.s32.totalorder %s20, 1
      %s321 = scalar_select %p320, %s20, 1
      %p322 = scmp.lt.s32.totalorder %s21, 3
      %s323 = scalar_select %p322, %s21, 3
      %p324 = scmp.lt.s32.totalorder %s22, 0
      %s325 = scalar_select %p324, %s22, 0
      %s326 = sadd.s32 %s325, %s323
      %s327 = smul.addr %s321, 4
      %s328 = sadd.s32 %s326, %s327
      %s329 = smul.addr %s328, 4
      %s330 = scalar_lea.vmem %s4, %s329
      %v333 = vld [vmem:[%s300] sm:$0xf]
      %v334 = vmul.bf16 %v333, 1052065461
      %v335 = vld [vmem:[%s308] sm:$0xf]
      %v336 = vld [vmem:[%s316] sm:$0xf]
      %v337 = vld [vmem:[%s319] sm:$0x1]
      %v339 = vlaneseq
      %v340 = vshrl.u32 %v339, 7
      %v341 = vsub.s32 0, %v340
      %v342 = vrot.slane %v337, %v341
      %vm344 = vcmask 64512
      %v346 = vsel %vm344, %v334, 0
      %v349 = vsel %vm344, %v335, 0
      %351 = vmatprep.subr.bf16.mxu0 0
      %352 = vmatpush1.bf16.xpose.msra.mxu0 0
      %353 = vmatprep.subr.bf16.mxu0 0
      %354 = vmatpush1.bf16.xpose.msra.mxu0 0
      %355 = vmatprep.subr.bf16.mxu0 0
      %356 = vmatpush1.bf16.xpose.msra.mxu0 0
      %357 = vmatprep.subr.bf16.mxu0 0
      %358 = vmatpush1.bf16.xpose.msra.mxu0 0
      %359 = vmatprep.subr.bf16.mxu0 0
      %360 = vmatpush1.bf16.xpose.msra.mxu0 0
      %361 = vmatprep.subr.bf16.mxu0 0
      %362 = vmatpush1.bf16.xpose.msra.mxu0 0
      %363 = vmatprep.subr.bf16.mxu0 0
      %364 = vmatpush1.bf16.xpose.msra.mxu0 0
      %365 = vmatprep.subr.bf16.mxu0 0
      %366 = vmatpush1.bf16.xpose.msra.mxu0 %v349
      %367 = vmatprep.subr.bf16.mxu0 0
      %368 = vmatpush2.bf16.xpose.msra.mxu0 0
      %369 = vmatprep.subr.bf16.mxu0 0
      %370 = vmatpush2.bf16.xpose.msra.mxu0 0
      %371 = vmatprep.subr.bf16.mxu0 0
      %372 = vmatpush2.bf16.xpose.msra.mxu0 0
      %373 = vmatprep.subr.bf16.mxu0 0
      %374 = vmatpush2.bf16.xpose.msra.mxu0 0
      %375 = vmatprep.subr.bf16.mxu0 0
      %376 = vmatpush2.bf16.xpose.msra.mxu0 0
      %377 = vmatprep.subr.bf16.mxu0 0
      %378 = vmatpush2.bf16.xpose.msra.mxu0 0
      %379 = vmatprep.subr.bf16.mxu0 0
      %380 = vmatpush2.bf16.xpose.msra.mxu0 0
      %381 = vmatprep.subr.bf16.mxu0 0
      %382 = vmatpush2.bf16.xpose.msra.mxu0 0
      %383 = vmatprep.mubr.bf16.mxu0 0
      %384 = vmatmul.mubr.bf16.gmra.mxu0 %v346
      %v385 = vpop.f32.mrf.mxu0
      %v386 = vadd.f32 %v342, %v385
      %v387 = vpop.f32.mrf.mxu0
      %v388 = vpop.f32.mrf.mxu0
      %v389 = vpop.f32.mrf.mxu0
      %390 = vdwg.mxu0
      %v391 = vlaneseq
      %v392 = vshrl.u32 %v391, 7
      %s393 = smul.u32 %s22, 7
      %v394 = vstv %s393
      %v395 = vadd.s32 %v392, %v394
      %v396 = vlaneseq
      %v397 = vand.u32 %v396, 127
      %vm398 = vcmp.gt.s32.totalorder %v397, %v395
      %v399 = vsel %vm398, -1e+09, %v386
      %vm400 = vcmask 55296
      %v401 = vsel %vm400, %v399, -inf
      %402 = vmax.xlane.f32.xlu0 %v401
      %v403 = vpop.xlane.xlu0 %402
      %v404 = vsub.f32 %v399, %v403
      %v405 = vmul.f32 %v404, 1.442695
      %v406 = vpow.pop %v405
      %v407 = vsel %vm400, %v406, 0.0
      %408 = vadd.xlane.f32.xlu0 %v407
      %v409 = vpop.xlane.xlu0 %408
      %v410 = vrcp.pop %v409
      %v411 = vmul.f32 %v406, %v410
      %v412 = vpack.c.bf16 %v411, %v411
      %vm413 = vcmask 56320
      %v415 = vsel %vm413, %v412, 0
      %vm417 = vcmask 1042432
      %vm418 = vcmask 1043456
      %v419 = vsel %vm417, 4294967295, 65535
      %v420 = vsel %vm418, %v419, 0
      %v422 = vand.u32 %v336, %v420
      %424 = vmatprep.subr.bf16.mxu0 0
      %425 = vmatpush1.bf16.msra.mxu0 0
      %426 = vmatprep.subr.bf16.mxu0 0
      %427 = vmatpush1.bf16.msra.mxu0 0
      %428 = vmatprep.subr.bf16.mxu0 0
      %429 = vmatpush1.bf16.msra.mxu0 0
      %430 = vmatprep.subr.bf16.mxu0 0
      %431 = vmatpush1.bf16.msra.mxu0 0
      %432 = vmatprep.subr.bf16.mxu0 0
      %433 = vmatpush1.bf16.msra.mxu0 0
      %434 = vmatprep.subr.bf16.mxu0 0
      %435 = vmatpush1.bf16.msra.mxu0 0
      %436 = vmatprep.subr.bf16.mxu0 0
      %437 = vmatpush1.bf16.msra.mxu0 0
      %438 = vmatprep.subr.bf16.mxu0 0
      %439 = vmatpush1.bf16.msra.mxu0 %v422
      %440 = vmatprep.subr.bf16.mxu0 0
      %441 = vmatpush2.bf16.msra.mxu0 0
      %442 = vmatprep.subr.bf16.mxu0 0
      %443 = vmatpush2.bf16.msra.mxu0 0
      %444 = vmatprep.subr.bf16.mxu0 0
      %445 = vmatpush2.bf16.msra.mxu0 0
      %446 = vmatprep.subr.bf16.mxu0 0
      %447 = vmatpush2.bf16.msra.mxu0 0
      %448 = vmatprep.subr.bf16.mxu0 0
      %449 = vmatpush2.bf16.msra.mxu0 0
      %450 = vmatprep.subr.bf16.mxu0 0
      %451 = vmatpush2.bf16.msra.mxu0 0
      %452 = vmatprep.subr.bf16.mxu0 0
      %453 = vmatpush2.bf16.msra.mxu0 0
      %454 = vmatprep.subr.bf16.mxu0 0
      %455 = vmatpush2.bf16.msra.mxu0 0
      %456 = vmatprep.mubr.bf16.mxu0 0
      %457 = vmatmul.mubr.bf16.gmra.mxu0 %v415
      %v458 = vpop.f32.mrf.mxu0
      %v459 = vadd.f32 0.0, %v458
      %v460 = vpop.f32.mrf.mxu0
      %v461 = vpop.f32.mrf.mxu0
      %v462 = vpop.f32.mrf.mxu0
      %463 = vdwg.mxu0
      %v464 = vpack.c.bf16 %v459, %v459
      %vm465 = vcmask 60416
      %vm466 = vsmask.f32 3328
      %vm467 = vmand %vm465, %vm466
      %v468 = vld [vmem:[%s330] sm:$0xf]
      %v469 = vsel %vm467, %v464, %v468
      %470 = vst [vmem:[%s330] sm:$0xf] %v469
      %p471 = scmp.lt.s32.totalorder %s20, 1
      %s472 = scalar_select %p471, %s20, 1
      %p473 = scmp.lt.s32.totalorder %s21, 3
      %s474 = scalar_select %p473, %s21, 3
      %p475 = scmp.lt.s32.totalorder %s22, 0
      %s476 = scalar_select %p475, %s22, 0
      %s477 = sadd.s32 %s476, %s474
      %s478 = smul.addr %s472, 4
      %s479 = sadd.s32 %s477, %s478
      %s480 = smul.addr %s479, 4
      %s481 = scalar_lea.vmem %s4, %s480
      // Predicated region
      $region37: #{transformer_forward.40} parent=35 // pred_check
        %p482 = pneg %p168
      $region38: #{transformer_forward.40} parent=35 // pred_check_branch
        %484 = sbr.rel (%p482) target = $region40
      $region39: #{transformer_forward.40} parent=35 // pred_region
        _
      $region40: #{transformer_forward.40} parent=35 // pred_fallthru
        _
    $region36: #{transformer_forward.40} parent=5 // pred_fallthru
      _
    %p485 = scmp.le.s32.totalorder 2, %s10
    // Predicated region
    $region41: #{transformer_forward.40} parent=5 // pred_check
      %p486 = pneg %p485
    $region42: #{transformer_forward.40} parent=5 // pred_check_branch
      %488 = sbr.rel (%p486) target = $region44
    $region43: #{transformer_forward.40} parent=5 // pred_region
      %s489 = ssub.s32 %s10, 2
      // Predicated region
      $region45: #{transformer_forward.40} parent=43 // pred_check
        %p490 = pneg %p174
      $region46: #{transformer_forward.40} parent=43 // pred_check_branch
        %492 = sbr.rel (%p490) target = $region48
      $region47: #{transformer_forward.40} parent=43 // pred_region
        %p493 = scmp.lt.s32.totalorder %s23, 1
        %s494 = scalar_select %p493, %s23, 1
        %p495 = scmp.lt.s32.totalorder %s24, 3
        %s496 = scalar_select %p495, %s24, 3
        %p497 = scmp.lt.s32.totalorder %s25, 0
        %s498 = scalar_select %p497, %s25, 0
        %s499 = sadd.s32 %s498, %s496
        %s500 = smul.addr %s494, 4
        %s501 = sadd.s32 %s499, %s500
        %s502 = smul.addr %s501, 4
        %s503 = scalar_lea.vmem %s4, %s502
      $region48: #{transformer_forward.40} parent=43 // pred_fallthru
        _
    $region44: #{transformer_forward.40} parent=5 // pred_fallthru
      _
  $region6: #{transformer_forward.40} parent=0 // loop_footer
    %s14 = sadd.s32 1, %s10
  $region7: #{transformer_forward.40} parent=0 // loop_footer_branch
    %9 = sbr.rel target = $region3
  $region8: #{transformer_forward.40} parent=0 // loop_exit
    _

// kernel: transformer_forward.42
$region0: #{transformer_forward.42}
  #allocation0 [shape = 'u32[]', space=smem, size = 0x4, offset = 0x4, fixed_abs, tag = 'smem constant byte address 0x4 - core index']
  #allocation1 [shape = 'u32[144,128]{1,0:T(1,128)}', space=vmem, size = 0x12000, scoped, tag = 'internal scratch']
  #allocation2 [shape = 'f32[14,32]{1,0:T(8,128)}', space=vmem, size = 0x2000, scoped, tag = 'scratch operand']
  %s0 = inlined_call_operand.vmem [shape: bf16[14,32], index: 0, kind: input, shape index: {}]
  %s1 = inlined_call_operand.vmem [shape: bf16[32,32], index: 1, kind: input, shape index: {}]
  %s2 = inlined_call_operand.vmem [shape: f32[1,32], index: 2, kind: input, shape index: {}]
  %s3 = inlined_call_operand.vmem [shape: bf16[14,32], index: 3, kind: output, shape index: {}]
  %s4 = sld [smem:[#allocation0]]
  $region30: #{transformer_forward.42} parent=0
    _
  %s6 = ssub.s32 1, %s4
  %s7 = scalar_select 0, %s6, %s4
  // Predicated region
  $region2: #{transformer_forward.42} parent=0 // pred_check
    _
  $region3: #{transformer_forward.42} parent=0 // pred_check_branch
    %9 = sbr.rel (0) target = $region5
  $region4: #{transformer_forward.42} parent=0 // pred_region
    _
  $region5: #{transformer_forward.42} parent=0 // pred_fallthru
    _
  // Predicated region
  $region6: #{transformer_forward.42} parent=0 // pred_check
    _
  $region7: #{transformer_forward.42} parent=0 // pred_check_branch
    %11 = sbr.rel (0) target = $region9
  $region8: #{transformer_forward.42} parent=0 // pred_region
    _
  $region9: #{transformer_forward.42} parent=0 // pred_fallthru
    _
  // Predicated region
  $region10: #{transformer_forward.42} parent=0 // pred_check
    _
  $region11: #{transformer_forward.42} parent=0 // pred_check_branch
    %13 = sbr.rel (0) target = $region13
  $region12: #{transformer_forward.42} parent=0 // pred_region
    _
  $region13: #{transformer_forward.42} parent=0 // pred_fallthru
    _
  %p15 = scmp.eq.s32.totalorder 0, 0
  // Predicated region
  $region14: #{transformer_forward.42} parent=0 // pred_check
    %p16 = pneg %p15
  $region15: #{transformer_forward.42} parent=0 // pred_check_branch
    %18 = sbr.rel (%p16) target = $region17
  $region16: #{transformer_forward.42} parent=0 // pred_region
    %vm19 = vcmask 261120
    %20 = vst.msk [vmem:[#allocation2] sm:$0xff] %vm19, 0.0
    %vm21 = vcmask 259072
    %22 = vst.msk [vmem:[#allocation2 + $0x8] sm:$0x3f] %vm21, 0.0
  $region17: #{transformer_forward.42} parent=0 // pred_fallthru
    _
  %v23 = vld [vmem:[#allocation2] sm:$0xff]
  %v24 = vld [vmem:[#allocation2 + $0x8] sm:$0x3f]
  %v25 = vld [vmem:[%s0] sm:$0xf]
  %v26 = vld [vmem:[%s0 + $0x4] sm:$0x7]
  %v27 = vld [vmem:[%s1] sm:$0xf]
  %v28 = vld [vmem:[%s1 + $0x4] sm:$0xf]
  %v29 = vld [vmem:[%s1 + $0x8] sm:$0xf]
  %v30 = vld [vmem:[%s1 + $0xc] sm:$0xf]
  %v33 = vunpack.c.l.b16 %v25
  %v34 = vunpack.c.l.b16 %v26
  %v35 = vpack.c.b16 %v34, %v33
  %v40 = vunpack.c.l.b16 %v27
  %v41 = vunpack.c.l.b16 %v28
  %v42 = vunpack.c.l.b16 %v29
  %v43 = vunpack.c.l.b16 %v30
  %v44 = vpack.c.b16 %v41, %v40
  %v45 = vpack.c.b16 %v43, %v42
  %vm48 = vcmask 261120
  %v50 = vsel %vm48, %v35, 0
  %52 = vmatprep.subr.bf16.mxu0 0
  %53 = vmatpush1.bf16.msra.mxu0 0
  %54 = vmatprep.subr.bf16.mxu0 0
  %55 = vmatpush1.bf16.msra.mxu0 0
  %56 = vmatprep.subr.bf16.mxu0 0
  %57 = vmatpush1.bf16.msra.mxu0 0
  %58 = vmatprep.subr.bf16.mxu0 0
  %59 = vmatpush1.bf16.msra.mxu0 0
  %60 = vmatprep.subr.bf16.mxu0 0
  %61 = vmatpush1.bf16.msra.mxu0 0
  %62 = vmatprep.subr.bf16.mxu0 0
  %63 = vmatpush1.bf16.msra.mxu0 0
  %64 = vmatprep.subr.bf16.mxu0 0
  %65 = vmatpush1.bf16.msra.mxu0 %v45
  %66 = vmatprep.subr.bf16.mxu0 0
  %67 = vmatpush1.bf16.msra.mxu0 %v44
  %68 = vmatprep.subr.bf16.mxu0 0
  %69 = vmatpush2.bf16.msra.mxu0 0
  %70 = vmatprep.subr.bf16.mxu0 0
  %71 = vmatpush2.bf16.msra.mxu0 0
  %72 = vmatprep.subr.bf16.mxu0 0
  %73 = vmatpush2.bf16.msra.mxu0 0
  %74 = vmatprep.subr.bf16.mxu0 0
  %75 = vmatpush2.bf16.msra.mxu0 0
  %76 = vmatprep.subr.bf16.mxu0 0
  %77 = vmatpush2.bf16.msra.mxu0 0
  %78 = vmatprep.subr.bf16.mxu0 0
  %79 = vmatpush2.bf16.msra.mxu0 0
  %80 = vmatprep.subr.bf16.mxu0 0
  %81 = vmatpush2.bf16.msra.mxu0 0
  %82 = vmatprep.subr.bf16.mxu0 0
  %83 = vmatpush2.bf16.msra.mxu0 0
  %84 = vmatprep.mubr.bf16.mxu0 0
  %85 = vmatmul.mubr.bf16.gmra.mxu0 %v50
  %v86 = vpop.f32.mrf.mxu0
  %v87 = vadd.f32 0.0, %v86
  %v88 = vpop.f32.mrf.mxu0
  %v89 = vpop.f32.mrf.mxu0
  %v90 = vadd.f32 0.0, %v89
  %v91 = vpop.f32.mrf.mxu0
  %92 = vdwg.mxu0
  %v93 = vadd.f32 %v23, %v87
  %v94 = vadd.f32 %v24, %v90
  %95 = vst.msk [vmem:[#allocation2] sm:$0xff] %vm48, %v93
  %vm96 = vcmask 259072
  %97 = vst.msk [vmem:[#allocation2 + $0x8] sm:$0x3f] %vm96, %v94
  // Predicated region
  $region18: #{transformer_forward.42} parent=0 // pred_check
    %p98 = pneg %p15
  $region19: #{transformer_forward.42} parent=0 // pred_check_branch
    %100 = sbr.rel (%p98) target = $region21
  $region20: #{transformer_forward.42} parent=0 // pred_region
    %v101 = vld [vmem:[#allocation2] sm:$0xff]
    %v102 = vld [vmem:[#allocation2 + $0x8] sm:$0x3f]
    %v103 = vld [vmem:[%s2] sm:$0x1]
    %v105 = vlaneseq
    %v106 = vshrl.u32 %v105, 7
    %v107 = vsub.s32 0, %v106
    %v108 = vrot.slane %v103, %v107
    %v110 = vadd.f32 %v101, %v108
    %v111 = vadd.f32 %v102, %v108
    %v112 = vpack.c.bf16 %v111, %v110
    %v114 = vunpack.c.l.b16 %v112
    %v115 = vunpack.c.h.b16 %v112
    %v116 = vpack.c.b16 %v114, %v114
    %v117 = vpack.c.b16 %v115, %v115
    %vm120 = vcmask 257024
    %121 = vst.msk [vmem:[%s3] sm:$0xf] %vm120, %v116
    %vm122 = vcmask 256000
    %123 = vst.msk [vmem:[%s3 + $0x4] sm:$0x7] %vm122, %v117
  $region21: #{transformer_forward.42} parent=0 // pred_fallthru
    _
  // Predicated region
  $region22: #{transformer_forward.42} parent=0 // pred_check
    _
  $region23: #{transformer_forward.42} parent=0 // pred_check_branch
    %125 = sbr.rel (0) target = $region25
  $region24: #{transformer_forward.42} parent=0 // pred_region
    _
  $region25: #{transformer_forward.42} parent=0 // pred_fallthru
    _
  // Predicated region
  $region26: #{transformer_forward.42} parent=0 // pred_check
    _
  $region27: #{transformer_forward.42} parent=0 // pred_check_branch
    %127 = sbr.rel (0) target = $region29
  $region28: #{transformer_forward.42} parent=0 // pred_region
    _
  $region29: #{transformer_forward.42} parent=0 // pred_fallthru
    _

// kernel: transformer_forward.57
$region0: #{transformer_forward.57}
  #allocation0 [shape = 'u32[]', space=smem, size = 0x4, offset = 0x4, fixed_abs, tag = 'smem constant byte address 0x4 - core index']
  #allocation1 [shape = 'u32[144,128]{1,0:T(1,128)}', space=vmem, size = 0x12000, scoped, tag = 'internal scratch']
  #allocation2 [shape = 'f32[14,13]{1,0:T(8,128)}', space=vmem, size = 0x2000, scoped, tag = 'scratch operand']
  %s0 = inlined_call_operand.vmem [shape: bf16[14,32], index: 0, kind: input, shape index: {}]
  %s1 = inlined_call_operand.vmem [shape: bf16[32,13], index: 1, kind: input, shape index: {}]
  %s2 = inlined_call_operand.vmem [shape: f32[14,13], index: 2, kind: output, shape index: {}]
  %s3 = sld [smem:[#allocation0]]
  $region26: #{transformer_forward.57} parent=0
    _
  %s5 = ssub.s32 1, %s3
  %s6 = scalar_select 0, %s5, %s3
  // Predicated region
  $region2: #{transformer_forward.57} parent=0 // pred_check
    _
  $region3: #{transformer_forward.57} parent=0 // pred_check_branch
    %8 = sbr.rel (0) target = $region5
  $region4: #{transformer_forward.57} parent=0 // pred_region
    _
  $region5: #{transformer_forward.57} parent=0 // pred_fallthru
    _
  // Predicated region
  $region6: #{transformer_forward.57} parent=0 // pred_check
    _
  $region7: #{transformer_forward.57} parent=0 // pred_check_branch
    %10 = sbr.rel (0) target = $region9
  $region8: #{transformer_forward.57} parent=0 // pred_region
    _
  $region9: #{transformer_forward.57} parent=0 // pred_fallthru
    _
  %p12 = scmp.eq.s32.totalorder 0, 0
  // Predicated region
  $region10: #{transformer_forward.57} parent=0 // pred_check
    %p13 = pneg %p12
  $region11: #{transformer_forward.57} parent=0 // pred_check_branch
    %15 = sbr.rel (%p13) target = $region13
  $region12: #{transformer_forward.57} parent=0 // pred_region
    %vm16 = vcmask 105472
    %17 = vst.msk [vmem:[#allocation2] sm:$0xff] %vm16, 0.0
    %vm18 = vcmask 103424
    %19 = vst.msk [vmem:[#allocation2 + $0x8] sm:$0x3f] %vm18, 0.0
  $region13: #{transformer_forward.57} parent=0 // pred_fallthru
    _
  %v20 = vld [vmem:[#allocation2] sm:$0xff]
  %v21 = vld [vmem:[#allocation2 + $0x8] sm:$0x3f]
  %v22 = vld [vmem:[%s0] sm:$0xf]
  %v23 = vld [vmem:[%s0 + $0x4] sm:$0x7]
  %v24 = vld [vmem:[%s1] sm:$0xf]
  %v25 = vld [vmem:[%s1 + $0x4] sm:$0xf]
  %v26 = vld [vmem:[%s1 + $0x8] sm:$0xf]
  %v27 = vld [vmem:[%s1 + $0xc] sm:$0xf]
  %v30 = vunpack.c.l.b16 %v22
  %v31 = vunpack.c.l.b16 %v23
  %v32 = vpack.c.b16 %v31, %v30
  %v37 = vunpack.c.l.b16 %v24
  %v38 = vunpack.c.l.b16 %v25
  %v39 = vunpack.c.l.b16 %v26
  %v40 = vunpack.c.l.b16 %v27
  %v41 = vpack.c.b16 %v38, %v37
  %v42 = vpack.c.b16 %v40, %v39
  %vm45 = vcmask 261120
  %v47 = vsel %vm45, %v32, 0
  %49 = vmatprep.subr.bf16.mxu0 0
  %50 = vmatpush1.bf16.msra.mxu0 0
  %51 = vmatprep.subr.bf16.mxu0 0
  %52 = vmatpush1.bf16.msra.mxu0 0
  %53 = vmatprep.subr.bf16.mxu0 0
  %54 = vmatpush1.bf16.msra.mxu0 0
  %55 = vmatprep.subr.bf16.mxu0 0
  %56 = vmatpush1.bf16.msra.mxu0 0
  %57 = vmatprep.subr.bf16.mxu0 0
  %58 = vmatpush1.bf16.msra.mxu0 0
  %59 = vmatprep.subr.bf16.mxu0 0
  %60 = vmatpush1.bf16.msra.mxu0 0
  %61 = vmatprep.subr.bf16.mxu0 0
  %62 = vmatpush1.bf16.msra.mxu0 %v42
  %63 = vmatprep.subr.bf16.mxu0 0
  %64 = vmatpush1.bf16.msra.mxu0 %v41
  %65 = vmatprep.subr.bf16.mxu0 0
  %66 = vmatpush2.bf16.msra.mxu0 0
  %67 = vmatprep.subr.bf16.mxu0 0
  %68 = vmatpush2.bf16.msra.mxu0 0
  %69 = vmatprep.subr.bf16.mxu0 0
  %70 = vmatpush2.bf16.msra.mxu0 0
  %71 = vmatprep.subr.bf16.mxu0 0
  %72 = vmatpush2.bf16.msra.mxu0 0
  %73 = vmatprep.subr.bf16.mxu0 0
  %74 = vmatpush2.bf16.msra.mxu0 0
  %75 = vmatprep.subr.bf16.mxu0 0
  %76 = vmatpush2.bf16.msra.mxu0 0
  %77 = vmatprep.subr.bf16.mxu0 0
  %78 = vmatpush2.bf16.msra.mxu0 0
  %79 = vmatprep.subr.bf16.mxu0 0
  %80 = vmatpush2.bf16.msra.mxu0 0
  %81 = vmatprep.mubr.bf16.mxu0 0
  %82 = vmatmul.mubr.bf16.gmra.mxu0 %v47
  %v83 = vpop.f32.mrf.mxu0
  %v84 = vadd.f32 0.0, %v83
  %v85 = vpop.f32.mrf.mxu0
  %v86 = vpop.f32.mrf.mxu0
  %v87 = vadd.f32 0.0, %v86
  %v88 = vpop.f32.mrf.mxu0
  %89 = vdwg.mxu0
  %v90 = vadd.f32 %v20, %v84
  %v91 = vadd.f32 %v21, %v87
  %vm92 = vcmask 105472
  %93 = vst.msk [vmem:[#allocation2] sm:$0xff] %vm92, %v90
  %vm94 = vcmask 103424
  %95 = vst.msk [vmem:[#allocation2 + $0x8] sm:$0x3f] %vm94, %v91
  // Predicated region
  $region14: #{transformer_forward.57} parent=0 // pred_check
    %p96 = pneg %p12
  $region15: #{transformer_forward.57} parent=0 // pred_check_branch
    %98 = sbr.rel (%p96) target = $region17
  $region16: #{transformer_forward.57} parent=0 // pred_region
    %v99 = vld [vmem:[#allocation2] sm:$0xff]
    %v100 = vld [vmem:[#allocation2 + $0x8] sm:$0x3f]
    %101 = vst.msk [vmem:[%s2] sm:$0xff] %vm92, %v99
    %102 = vst.msk [vmem:[%s2 + $0x8] sm:$0x3f] %vm94, %v100
  $region17: #{transformer_forward.57} parent=0 // pred_fallthru
    _
  // Predicated region
  $region18: #{transformer_forward.57} parent=0 // pred_check
    _
  $region19: #{transformer_forward.57} parent=0 // pred_check_branch
    %104 = sbr.rel (0) target = $region21
  $region20: #{transformer_forward.57} parent=0 // pred_region
    _
  $region21: #{transformer_forward.57} parent=0 // pred_fallthru
    _
  // Predicated region
  $region22: #{transformer_forward.57} parent=0 // pred_check
    _
  $region23: #{transformer_forward.57} parent=0 // pred_check_branch
    %106 = sbr.rel (0) target = $region25
  $region24: #{transformer_forward.57} parent=0 // pred_region
    _
  $region25: #{transformer_forward.57} parent=0 // pred_fallthru
    _

</llo_original>
